<compile_context>
chip_gen: v7x
topology: tpu7x:2x2x1
jax: 0.10.0
libtpu: 0.0.40
codegen_flags: <defaults>
</compile_context>

<pallas_src>
import math
import functools

import jax
import jax.numpy as jnp
from jax import lax
from jax.experimental import pallas as pl
from jax.experimental.pallas import tpu as pltpu

# MXU-operand dtype (weights + activation casts at dot sites).  Gate/elementwise
# math stays f32.  bf16 halves weight DMA/VMEM and doubles MXU rate on v6e/v7x.
MATMUL_DTYPE = jnp.bfloat16

_VMEM_LIMIT_BYTES = 32 * 1024 * 1024   # safe on v5e/v6e (128 MiB) and v7x (64 MiB)


# ----------------------------------------------------------------------------
# Small helpers
# ----------------------------------------------------------------------------
def _round_up(v, m):
    return ((v + m - 1) // m) * m


def _largest_divisor_block(n, candidates):
    for c in candidates:
        if n % c == 0:
            return c
    return n


def _pad_axis_to(a, size, axis):
    pad = [(0, 0)] * a.ndim
    pad[axis] = (0, size - a.shape[axis])
    return jnp.pad(a, pad)


def _pad_gate_cols(a, H, Hp):
    """(..., 3H) -> (..., 3Hp): each of the r/z/n gate chunks zero-padded to Hp."""
    parts = [_pad_axis_to(a[..., g * H:(g + 1) * H], Hp, -1) for g in range(3)]
    return jnp.concatenate(parts, axis=-1)


def _pad_dir_rows(a, H, Hp):
    """(2H, K) -> (2Hp, K): fwd/bwd input-feature halves each zero-padded to Hp rows."""
    parts = [_pad_axis_to(a[d * H:(d + 1) * H], Hp, 0) for d in range(2)]
    return jnp.concatenate(parts, axis=0)


def _pad_dir_cols(a, H, Hp):
    """(..., 2H) -> (..., 2Hp): fwd/bwd output halves each zero-padded to Hp lanes."""
    parts = [_pad_axis_to(a[..., d * H:(d + 1) * H], Hp, -1) for d in range(2)]
    return jnp.concatenate(parts, axis=-1)


# ----------------------------------------------------------------------------
# Fused Pallas kernel
# ----------------------------------------------------------------------------
def _gru_cell(gx, h, whh, bhh, Hp):
    """One GRU step.  gx already contains x@W_ih + b_ih.  All slices lane-aligned.

    Zero-padding invariant: padded hidden lanes (>= H inside each Hp gate block)
    stay exactly 0 because h starts at 0 and padded gx/gh/bias columns are 0
    (z = 0.5 then multiplies h = 0).  Do NOT introduce nonzero initial hidden
    state / non-zero-padded biases without revisiting this.
    """
    gh = jnp.dot(h.astype(whh.dtype), whh,
                 preferred_element_type=jnp.float32) + bhh
    r = jax.nn.sigmoid(gx[:, 0:Hp] + gh[:, 0:Hp])
    z = jax.nn.sigmoid(gx[:, Hp:2 * Hp] + gh[:, Hp:2 * Hp])
    n = jnp.tanh(gx[:, 2 * Hp:3 * Hp] + r * gh[:, 2 * Hp:3 * Hp])
    return (1.0 - z) * n + z * h


def _bigru_attn_fused_kernel(x_ref, w_in_ref, b_in_ref,
                             whh_f_ref, bhh_f_ref, whh_b_ref, bhh_b_ref,
                             aw_ref, ab_ref, fw_ref, fb_ref,
                             y_ref,
                             h_scr, gx_scr, hf_scr, hb_scr):
    """Whole forward for one batch block.

    x_ref:   (T, Bb, 2Hp)   padded layer-0 input (time-major)
    w_in:    (L, 2Hp, 6Hp)  per-layer input weights  [fwd r,z,n | bwd r,z,n]
    b_in:    (L, 1, 6Hp)
    whh_*:   (L, Hp, 3Hp)   recurrent weights per direction
    bhh_*:   (L, 1, 3Hp)
    aw/ab:   (2Hp, 2Hp) / (1, 2Hp)   attention linear
    fw/fb:   (2Hp, CP) / (1, CP)     classifier (CP = round_up(C, 128), lane-dense)
    y_ref:   (T, Bb, CP)
    h_scr:   (T, Bb, 2Hp)   current-layer activations, lanes [0:Hp]=fwd, [Hp:2Hp]=bwd
    gx_scr:  (T, Bb, 6Hp)   hoisted input-projection results
    hf/hb:   (Bb, Hp)       recurrent state
    """
    T, Bb, D = x_ref.shape            # D == 2 * Hp
    Hp = whh_f_ref.shape[1]
    L = w_in_ref.shape[0]
    CP = y_ref.shape[2]

    # Layer-0 input (already lane-padded to 2*Hp in the wrapper).
    h_scr[...] = x_ref[...]

    def layer_body(l, carry):
        # ---- hoisted input projection: all T timesteps & both directions ----
        w_in = w_in_ref[l]                          # (2Hp, 6Hp), MXU operand dtype
        b_in = b_in_ref[l]                          # (1, 6Hp), f32
        h2d = h_scr[...].reshape(T * Bb, D)
        gx = jnp.dot(h2d.astype(w_in.dtype), w_in,
                     preferred_element_type=jnp.float32) + b_in
        gx_scr[...] = gx.reshape(T, Bb, 6 * Hp)

        # ---- fused forward + backward recurrence (independent chains) ----
        whh_f = whh_f_ref[l]
        bhh_f = bhh_f_ref[l]
        whh_b = whh_b_ref[l]
        bhh_b = bhh_b_ref[l]
        hf_scr[...] = jnp.zeros_like(hf_scr)
        hb_scr[...] = jnp.zeros_like(hb_scr)

        def step(t, c):
            tb = T - 1 - t
            gx_f = gx_scr[t, :, 0:3 * Hp]           # forward consumes time t
            gx_b = gx_scr[tb, :, 3 * Hp:6 * Hp]     # backward consumes time T-1-t
            h_f = _gru_cell(gx_f, hf_scr[...], whh_f, bhh_f, Hp)
            h_b = _gru_cell(gx_b, hb_scr[...], whh_b, bhh_b, Hp)
            hf_scr[...] = h_f
            hb_scr[...] = h_b
            h_scr[t, :, 0:Hp] = h_f                 # lane-aligned half writes
            h_scr[tb, :, Hp:2 * Hp] = h_b
            return c

        # Full unroll over T (T=8 static) so the scheduler interleaves the
        # independent fwd/bwd chains and amortizes per-iteration overhead.
        lax.fori_loop(0, T, step, 0, unroll=min(T, 8))
        return carry

    lax.fori_loop(0, L, layer_body, 0)

    # ---- attention + classifier head (dropout p = 0.0 -> identity) ----
    o = h_scr[...].reshape(T * Bb, D)
    attn = jnp.tanh(jnp.dot(o.astype(aw_ref.dtype), aw_ref[...],
                            preferred_element_type=jnp.float32) + ab_ref[...])
    gated = attn * o
    y = jnp.dot(gated.astype(fw_ref.dtype), fw_ref[...],
                preferred_element_type=jnp.float32) + fb_ref[...]
    y_ref[...] = y.reshape(T, Bb, CP).astype(y_ref.dtype)


def _fused_forward(xt, packed):
    """xt: (T, Bp, 2Hp) time-major, batch padded to multiple of 8.  -> (T, Bp, CP)."""
    T, Bp, Dp = xt.shape
    Hp = packed["whh_f"].shape[1]
    CP = packed["fc_w"].shape[1]
    bb = _largest_divisor_block(Bp, (32, 16, 8))   # Bp % 8 == 0, so bb >= 8

    return pl.pallas_call(
        _bigru_attn_fused_kernel,
        out_shape=jax.ShapeDtypeStruct((T, Bp, CP), jnp.float32),
        grid=(Bp // bb,),
        in_specs=[
            pl.BlockSpec((T, bb, Dp), lambda i: (0, i, 0)),
            pl.BlockSpec(packed["w_in"].shape, lambda i: (0, 0, 0)),
            pl.BlockSpec(packed["b_in"].shape, lambda i: (0, 0, 0)),
            pl.BlockSpec(packed["whh_f"].shape, lambda i: (0, 0, 0)),
            pl.BlockSpec(packed["bhh_f"].shape, lambda i: (0, 0, 0)),
            pl.BlockSpec(packed["whh_b"].shape, lambda i: (0, 0, 0)),
            pl.BlockSpec(packed["bhh_b"].shape, lambda i: (0, 0, 0)),
            pl.BlockSpec(packed["attn_w"].shape, lambda i: (0, 0)),
            pl.BlockSpec(packed["attn_b"].shape, lambda i: (0, 0)),
            pl.BlockSpec(packed["fc_w"].shape, lambda i: (0, 0)),
            pl.BlockSpec(packed["fc_b"].shape, lambda i: (0, 0)),
        ],
        out_specs=pl.BlockSpec((T, bb, CP), lambda i: (0, i, 0)),
        scratch_shapes=[
            pltpu.VMEM((T, bb, 2 * Hp), jnp.float32),   # layer activations
            pltpu.VMEM((T, bb, 6 * Hp), jnp.float32),   # hoisted gx
            pltpu.VMEM((bb, Hp), jnp.float32),          # h forward
            pltpu.VMEM((bb, Hp), jnp.float32),          # h backward
        ],
        compiler_params=pltpu.CompilerParams(
            dimension_semantics=("parallel",),          # batch blocks shard across TCs
            vmem_limit_bytes=_VMEM_LIMIT_BYTES),
    )(xt, packed["w_in"], packed["b_in"],
      packed["whh_f"], packed["bhh_f"], packed["whh_b"], packed["bhh_b"],
      packed["attn_w"], packed["attn_b"], packed["fc_w"], packed["fc_b"])


# ----------------------------------------------------------------------------
# Forward pass
# ----------------------------------------------------------------------------
@functools.partial(jax.jit, static_argnames=("Hp", "C"))
def bigru_attention_forward(x, packed, *, Hp, C):
    """x: (B, T, F) -> logits (B, T, C)."""
    B, T, F = x.shape
    Dp = 2 * Hp
    assert F <= Dp, "layer-0 features must fit the 2*Hp input lane width"
    Bp = _round_up(B, 8)                                     # full-sublane batch blocks
    xt = jnp.transpose(x, (1, 0, 2))                         # (T, B, F) time-major
    xt = jnp.pad(xt, ((0, 0), (0, Bp - B), (0, Dp - F)))     # (T, Bp, 2Hp)
    y = _fused_forward(xt, packed)                           # (T, Bp, CP)
    y = y[:, :B, :C]
    return jnp.transpose(y, (1, 0, 2))                       # (B, T, C)


# ----------------------------------------------------------------------------
# Parameter packing: PyTorch layout -> padded / lane-aligned stacked layout
# ----------------------------------------------------------------------------
def pack_params(raw, hidden_size, output_size):
    H = hidden_size
    Hp = _round_up(H, 128)
    Dp = 2 * Hp
    C = output_size
    CP = _round_up(C, 128)

    w_in_l, b_in_l, whh_f_l, bhh_f_l, whh_b_l, bhh_b_l = [], [], [], [], [], []
    for li, layer in enumerate(raw["gru"]):
        first = (li == 0)
        w_parts, b_parts, hh = [], [], {}
        for dname in ("fwd", "bwd"):
            w_ih, w_hh, b_ih, b_hh = layer[dname]
            wT = w_ih.T                               # (d_in, 3H)
            if first:
                wT = _pad_axis_to(wT, Dp, 0)          # raw features in rows [0:F]
            else:
                wT = _pad_dir_rows(wT, H, Hp)         # rows match padded 2Hp input
            wT = _pad_gate_cols(wT, H, Hp)            # (Dp, 3Hp)
            w_parts.append(wT)
            b_parts.append(_pad_gate_cols(b_ih, H, Hp))
            whhT = _pad_gate_cols(_pad_axis_to(w_hh.T, Hp, 0), H, Hp)   # (Hp, 3Hp)
            hh[dname] = (whhT, _pad_gate_cols(b_hh, H, Hp).reshape(1, -1))
        w_in_l.append(jnp.concatenate(w_parts, axis=1))                 # (Dp, 6Hp)
        b_in_l.append(jnp.concatenate(b_parts).reshape(1, -1))          # (1, 6Hp)
        whh_f_l.append(hh["fwd"][0]); bhh_f_l.append(hh["fwd"][1])
        whh_b_l.append(hh["bwd"][0]); bhh_b_l.append(hh["bwd"][1])

    awT = _pad_dir_cols(_pad_dir_rows(raw["attn_w"].T, H, Hp), H, Hp)   # (2Hp, 2Hp)
    ab = _pad_dir_cols(raw["attn_b"], H, Hp).reshape(1, -1)             # (1, 2Hp)
    fwT = _pad_axis_to(_pad_dir_rows(raw["fc_w"].T, H, Hp), CP, -1)     # (2Hp, CP)
    fb = _pad_axis_to(raw["fc_b"], CP, -1).reshape(1, -1)               # (1, CP)

    packed = {
        "w_in": jnp.stack(w_in_l).astype(MATMUL_DTYPE),      # (L, 2Hp, 6Hp)
        "b_in": jnp.stack(b_in_l),                           # (L, 1, 6Hp) f32
        "whh_f": jnp.stack(whh_f_l).astype(MATMUL_DTYPE),    # (L, Hp, 3Hp)
        "bhh_f": jnp.stack(bhh_f_l),                         # (L, 1, 3Hp) f32
        "whh_b": jnp.stack(whh_b_l).astype(MATMUL_DTYPE),
        "bhh_b": jnp.stack(bhh_b_l),
        "attn_w": awT.astype(MATMUL_DTYPE), "attn_b": ab,
        "fc_w": fwT.astype(MATMUL_DTYPE), "fc_b": fb,
    }
    return packed, Hp, C


# ----------------------------------------------------------------------------
# Deterministic parameter init (Xavier uniform weights, zero biases)
# ----------------------------------------------------------------------------
def _xavier(key, shape):
    fan_out, fan_in = shape
    bound = math.sqrt(6.0 / (fan_in + fan_out))
    return jax.random.uniform(key, shape, jnp.float32, -bound, bound)


def init_params(key, input_size, hidden_size, output_size, num_layers):
    params = {"gru": []}
    for layer in range(num_layers):
        d_in = input_size if layer == 0 else 2 * hidden_size
        layer_p = {}
        for direction in ("fwd", "bwd"):
            key, k1, k2 = jax.random.split(key, 3)
            w_ih = _xavier(k1, (3 * hidden_size, d_in))
            w_hh = _xavier(k2, (3 * hidden_size, hidden_size))
            b_ih = jnp.zeros((3 * hidden_size,), jnp.float32)
            b_hh = jnp.zeros((3 * hidden_size,), jnp.float32)
            layer_p[direction] = (w_ih, w_hh, b_ih, b_hh)
        params["gru"].append(layer_p)
    key, k1, k2 = jax.random.split(key, 3)
    params["attn_w"] = _xavier(k1, (2 * hidden_size, 2 * hidden_size))
    params["attn_b"] = jnp.zeros((2 * hidden_size,), jnp.float32)
    params["fc_w"] = _xavier(k2, (output_size, 2 * hidden_size))
    params["fc_b"] = jnp.zeros((output_size,), jnp.float32)
    return params


# ----------------------------------------------------------------------------
# Pure-JAX f32 reference (for correctness check)
# ----------------------------------------------------------------------------
def _ref_gru_dir(x, w_ih, w_hh, b_ih, b_hh):
    B, T, _ = x.shape
    H = w_hh.shape[1]
    h = jnp.zeros((B, H), jnp.float32)
    outs = []
    for t in range(T):
        gx = x[:, t] @ w_ih.T + b_ih
        gh = h @ w_hh.T + b_hh
        r = jax.nn.sigmoid(gx[:, :H] + gh[:, :H])
        z = jax.nn.sigmoid(gx[:, H:2 * H] + gh[:, H:2 * H])
        n = jnp.tanh(gx[:, 2 * H:] + r * gh[:, 2 * H:])
        h = (1.0 - z) * n + z * h
        outs.append(h)
    return jnp.stack(outs, axis=1)


def ref_forward(x, params):
    cur = x
    for layer in params["gru"]:
        h_f = _ref_gru_dir(cur, *layer["fwd"])
        h_b = _ref_gru_dir(cur[:, ::-1], *layer["bwd"])[:, ::-1]
        cur = jnp.concatenate([h_f, h_b], axis=-1)
    attn = jnp.tanh(cur @ params["attn_w"].T + params["attn_b"])
    gated = attn * cur
    return gated @ params["fc_w"].T + params["fc_b"]


# ----------------------------------------------------------------------------
if __name__ == "__main__":
    batch, seq_len = 2, 8
    input_size, hidden_size, num_layers, output_size = 8, 32, 4, 3

    key = jax.random.PRNGKey(0)
    key, pkey, xkey = jax.random.split(key, 3)
    raw_params = init_params(pkey, input_size, hidden_size, output_size, num_layers)
    packed, Hp, C = pack_params(raw_params, hidden_size, output_size)
    x = jax.random.normal(xkey, (batch, seq_len, input_size), jnp.float32)

    y = bigru_attention_forward(x, packed, Hp=Hp, C=C)
    y = jax.block_until_ready(y)

    assert y.shape == (batch, seq_len, output_size)
    y_ref = ref_forward(x, raw_params)
    # bf16 MXU operands (f32 gate math / accumulation) => loosened tolerance.
    tol = 1e-3 if MATMUL_DTYPE == jnp.float32 else 2e-2
    assert jnp.allclose(y, y_ref, atol=tol, rtol=tol), "mismatch vs reference"

    print("KERNEL_OK")
</pallas_src>

<mosaic_0001>
module attributes {stable_mosaic.version = 11 : i64} {
  func.func @_bigru_attn_fused_kernel(%arg0: i32, %arg1: memref<8x8x256xf32, #tpu.memory_space<vmem>>, %arg2: memref<4x256x768xbf16, #tpu.memory_space<vmem>>, %arg3: memref<4x1x768xf32, #tpu.memory_space<vmem>>, %arg4: memref<4x128x384xbf16, #tpu.memory_space<vmem>>, %arg5: memref<4x1x384xf32, #tpu.memory_space<vmem>>, %arg6: memref<4x128x384xbf16, #tpu.memory_space<vmem>>, %arg7: memref<4x1x384xf32, #tpu.memory_space<vmem>>, %arg8: memref<256x256xbf16, #tpu.memory_space<vmem>>, %arg9: memref<1x256xf32, #tpu.memory_space<vmem>>, %arg10: memref<256x128xbf16, #tpu.memory_space<vmem>>, %arg11: memref<1x128xf32, #tpu.memory_space<vmem>>, %arg12: memref<8x8x128xf32, #tpu.memory_space<vmem>>, %arg13: memref<8x8x256xf32, #tpu.memory_space<vmem>>, %arg14: memref<8x8x768xf32, #tpu.memory_space<vmem>>, %arg15: memref<8x128xf32, #tpu.memory_space<vmem>>, %arg16: memref<8x128xf32, #tpu.memory_space<vmem>>) attributes {dimension_semantics = [#tpu.dimension_semantics<parallel>], iteration_bounds = array<i64: 1>, scalar_prefetch = 0 : i64, scratch_operands = 4 : i64, tpu.core_type = #tpu.core_type<tc>, window_params = [{transform_indices = @transform_0, window_bounds = array<i64: 8, 8, 256>}, {pipeline_mode = #tpu.pipeline_mode<synchronous>, transform_indices = @transform_1, window_bounds = array<i64: 4, 256, 768>}, {pipeline_mode = #tpu.pipeline_mode<synchronous>, transform_indices = @transform_2, window_bounds = array<i64: 4, 1, 768>}, {pipeline_mode = #tpu.pipeline_mode<synchronous>, transform_indices = @transform_3, window_bounds = array<i64: 4, 128, 384>}, {pipeline_mode = #tpu.pipeline_mode<synchronous>, transform_indices = @transform_4, window_bounds = array<i64: 4, 1, 384>}, {pipeline_mode = #tpu.pipeline_mode<synchronous>, transform_indices = @transform_5, window_bounds = array<i64: 4, 128, 384>}, {pipeline_mode = #tpu.pipeline_mode<synchronous>, transform_indices = @transform_6, window_bounds = array<i64: 4, 1, 384>}, {pipeline_mode = #tpu.pipeline_mode<synchronous>, transform_indices = @transform_7, window_bounds = array<i64: 256, 256>}, {pipeline_mode = #tpu.pipeline_mode<synchronous>, transform_indices = @transform_8, window_bounds = array<i64: 1, 256>}, {pipeline_mode = #tpu.pipeline_mode<synchronous>, transform_indices = @transform_9, window_bounds = array<i64: 256, 128>}, {pipeline_mode = #tpu.pipeline_mode<synchronous>, transform_indices = @transform_10, window_bounds = array<i64: 1, 128>}, {transform_indices = @transform_11, window_bounds = array<i64: 8, 8, 128>}]} {
    %c0 = arith.constant 0 : index
    %c0_0 = arith.constant 0 : index
    %c0_1 = arith.constant 0 : index
    %0 = vector.load %arg1[%c0, %c0_0, %c0_1] : memref<8x8x256xf32, #tpu.memory_space<vmem>>, vector<8x8x256xf32>
    %c0_2 = arith.constant 0 : index
    %c0_3 = arith.constant 0 : index
    %c0_4 = arith.constant 0 : index
    %1 = vector.load %arg13[%c0_2, %c0_3, %c0_4] : memref<8x8x256xf32, #tpu.memory_space<vmem>>, vector<8x8x256xf32>
    tpu.vector_store %arg13[%c0_2, %c0_3, %c0_4], %0 {strides = array<i32>} : memref<8x8x256xf32, #tpu.memory_space<vmem>>, vector<8x8x256xf32>,
    %c0_i32 = arith.constant 0 : i32
    %c4_i32 = arith.constant 4 : i32
    %2 = arith.addi %c0_i32, %c4_i32 : i32
    %c1_i32 = arith.constant 1 : i32
    scf.for %arg17 = %c0_i32 to %2 step %c1_i32  : i32 {
      %21 = arith.index_cast %arg17 : i32 to index
      %c0_21 = arith.constant 0 : index
      %c0_22 = arith.constant 0 : index
      %22 = vector.load %arg2[%21, %c0_21, %c0_22] : memref<4x256x768xbf16, #tpu.memory_space<vmem>>, vector<1x256x768xbf16>
      %23 = vector.shape_cast %22 : vector<1x256x768xbf16> to vector<256x768xbf16>
      %24 = arith.index_cast %arg17 : i32 to index
      %c0_23 = arith.constant 0 : index
      %c0_24 = arith.constant 0 : index
      %25 = vector.load %arg3[%24, %c0_23, %c0_24] : memref<4x1x768xf32, #tpu.memory_space<vmem>>, vector<1x1x768xf32>
      %26 = vector.shape_cast %25 : vector<1x1x768xf32> to vector<1x768xf32>
      %c0_25 = arith.constant 0 : index
      %c0_26 = arith.constant 0 : index
      %c0_27 = arith.constant 0 : index
      %27 = vector.load %arg13[%c0_25, %c0_26, %c0_27] : memref<8x8x256xf32, #tpu.memory_space<vmem>>, vector<8x8x256xf32>
      %28 = vector.shape_cast %27 : vector<8x8x256xf32> to vector<64x256xf32>
      %29 = arith.truncf %28 : vector<64x256xf32> to vector<64x256xbf16>
      %cst_28 = arith.constant dense<0.000000e+00> : vector<64x768xf32>
      %30 = tpu.matmul %29, %23, %cst_28 {dimension_numbers = #tpu.dot_dimension_numbers<[1], [0], [0], [1], [0, 0, 1, 1], [], []>} : vector<64x256xbf16>, vector<256x768xbf16>, vector<64x768xf32> -> vector<64x768xf32>
      %31 = vector.broadcast %26 : vector<1x768xf32> to vector<64x768xf32>
      %32 = arith.addf %30, %31 : vector<64x768xf32>
      %33 = vector.shape_cast %32 : vector<64x768xf32> to vector<8x8x768xf32>
      %c0_29 = arith.constant 0 : index
      %c0_30 = arith.constant 0 : index
      %c0_31 = arith.constant 0 : index
      %34 = vector.load %arg14[%c0_29, %c0_30, %c0_31] : memref<8x8x768xf32, #tpu.memory_space<vmem>>, vector<8x8x768xf32>
      tpu.vector_store %arg14[%c0_29, %c0_30, %c0_31], %33 {strides = array<i32>} : memref<8x8x768xf32, #tpu.memory_space<vmem>>, vector<8x8x768xf32>,
      %35 = arith.index_cast %arg17 : i32 to index
      %c0_32 = arith.constant 0 : index
      %c0_33 = arith.constant 0 : index
      %36 = vector.load %arg4[%35, %c0_32, %c0_33] : memref<4x128x384xbf16, #tpu.memory_space<vmem>>, vector<1x128x384xbf16>
      %37 = vector.shape_cast %36 : vector<1x128x384xbf16> to vector<128x384xbf16>
      %38 = arith.index_cast %arg17 : i32 to index
      %c0_34 = arith.constant 0 : index
      %c0_35 = arith.constant 0 : index
      %39 = vector.load %arg5[%38, %c0_34, %c0_35] : memref<4x1x384xf32, #tpu.memory_space<vmem>>, vector<1x1x384xf32>
      %40 = vector.shape_cast %39 : vector<1x1x384xf32> to vector<1x384xf32>
      %41 = arith.index_cast %arg17 : i32 to index
      %c0_36 = arith.constant 0 : index
      %c0_37 = arith.constant 0 : index
      %42 = vector.load %arg6[%41, %c0_36, %c0_37] : memref<4x128x384xbf16, #tpu.memory_space<vmem>>, vector<1x128x384xbf16>
      %43 = vector.shape_cast %42 : vector<1x128x384xbf16> to vector<128x384xbf16>
      %44 = arith.index_cast %arg17 : i32 to index
      %c0_38 = arith.constant 0 : index
      %c0_39 = arith.constant 0 : index
      %45 = vector.load %arg7[%44, %c0_38, %c0_39] : memref<4x1x384xf32, #tpu.memory_space<vmem>>, vector<1x1x384xf32>
      %46 = vector.shape_cast %45 : vector<1x1x384xf32> to vector<1x384xf32>
      %cst_40 = arith.constant 0.000000e+00 : f32
      %47 = vector.broadcast %cst_40 : f32 to vector<8x128xf32>
      %c0_41 = arith.constant 0 : index
      %c0_42 = arith.constant 0 : index
      %48 = vector.load %arg15[%c0_41, %c0_42] : memref<8x128xf32, #tpu.memory_space<vmem>>, vector<8x128xf32>
      tpu.vector_store %arg15[%c0_41, %c0_42], %47 {strides = array<i32>} : memref<8x128xf32, #tpu.memory_space<vmem>>, vector<8x128xf32>,
      %cst_43 = arith.constant 0.000000e+00 : f32
      %49 = vector.broadcast %cst_43 : f32 to vector<8x128xf32>
      %c0_44 = arith.constant 0 : index
      %c0_45 = arith.constant 0 : index
      %50 = vector.load %arg16[%c0_44, %c0_45] : memref<8x128xf32, #tpu.memory_space<vmem>>, vector<8x128xf32>
      tpu.vector_store %arg16[%c0_44, %c0_45], %49 {strides = array<i32>} : memref<8x128xf32, #tpu.memory_space<vmem>>, vector<8x128xf32>,
      %c0_i32_46 = arith.constant 0 : i32
      %c7_i32 = arith.constant 7 : i32
      %51 = arith.subi %c7_i32, %c0_i32_46 : i32
      %52 = arith.index_cast %c0_i32_46 : i32 to index
      %c0_47 = arith.constant 0 : index
      %c0_48 = arith.constant 0 : index
      %53 = vector.load %arg14[%52, %c0_47, %c0_48] : memref<8x8x768xf32, #tpu.memory_space<vmem>>, vector<1x8x384xf32>
      %54 = vector.shape_cast %53 : vector<1x8x384xf32> to vector<8x384xf32>
      %55 = arith.index_cast %51 : i32 to index
      %c0_49 = arith.constant 0 : index
      %c384 = arith.constant 384 : index
      %56 = vector.load %arg14[%55, %c0_49, %c384] : memref<8x8x768xf32, #tpu.memory_space<vmem>>, vector<1x8x384xf32>
      %57 = vector.shape_cast %56 : vector<1x8x384xf32> to vector<8x384xf32>
      %c0_50 = arith.constant 0 : index
      %c0_51 = arith.constant 0 : index
      %58 = vector.load %arg15[%c0_50, %c0_51] : memref<8x128xf32, #tpu.memory_space<vmem>>, vector<8x128xf32>
      %59 = arith.truncf %58 : vector<8x128xf32> to vector<8x128xbf16>
      %cst_52 = arith.constant dense<0.000000e+00> : vector<8x384xf32>
      %60 = tpu.matmul %59, %37, %cst_52 {dimension_numbers = #tpu.dot_dimension_numbers<[1], [0], [0], [1], [0, 0, 1, 1], [], []>} : vector<8x128xbf16>, vector<128x384xbf16>, vector<8x384xf32> -> vector<8x384xf32>
      %61 = vector.broadcast %40 : vector<1x384xf32> to vector<8x384xf32>
      %62 = arith.addf %60, %61 : vector<8x384xf32>
      %63 = vector.extract_strided_slice %54 {offsets = [0, 0], sizes = [8, 128], strides = [1, 1]} : vector<8x384xf32> to vector<8x128xf32>
      %64 = vector.extract_strided_slice %62 {offsets = [0, 0], sizes = [8, 128], strides = [1, 1]} : vector<8x384xf32> to vector<8x128xf32>
      %65 = arith.addf %63, %64 : vector<8x128xf32>
      %66 = arith.negf %65 : vector<8x128xf32>
      %67 = math.exp %66 : vector<8x128xf32>
      %cst_53 = arith.constant 1.000000e+00 : f32
      %68 = vector.broadcast %cst_53 : f32 to vector<8x128xf32>
      %69 = arith.addf %68, %67 : vector<8x128xf32>
      %70 = arith.divf %68, %69 : vector<8x128xf32>
      %71 = vector.extract_strided_slice %54 {offsets = [0, 128], sizes = [8, 128], strides = [1, 1]} : vector<8x384xf32> to vector<8x128xf32>
      %72 = vector.extract_strided_slice %62 {offsets = [0, 128], sizes = [8, 128], strides = [1, 1]} : vector<8x384xf32> to vector<8x128xf32>
      %73 = arith.addf %71, %72 : vector<8x128xf32>
      %74 = arith.negf %73 : vector<8x128xf32>
      %75 = math.exp %74 : vector<8x128xf32>
      %cst_54 = arith.constant 1.000000e+00 : f32
      %76 = vector.broadcast %cst_54 : f32 to vector<8x128xf32>
      %77 = arith.addf %76, %75 : vector<8x128xf32>
      %78 = arith.divf %76, %77 : vector<8x128xf32>
      %79 = vector.extract_strided_slice %54 {offsets = [0, 256], sizes = [8, 128], strides = [1, 1]} : vector<8x384xf32> to vector<8x128xf32>
      %80 = vector.extract_strided_slice %62 {offsets = [0, 256], sizes = [8, 128], strides = [1, 1]} : vector<8x384xf32> to vector<8x128xf32>
      %81 = arith.mulf %70, %80 : vector<8x128xf32>
      %82 = arith.addf %79, %81 : vector<8x128xf32>
      %83 = math.tanh %82 : vector<8x128xf32>
      %cst_55 = arith.constant 1.000000e+00 : f32
      %84 = vector.broadcast %cst_55 : f32 to vector<8x128xf32>
      %85 = arith.subf %84, %78 : vector<8x128xf32>
      %86 = arith.mulf %85, %83 : vector<8x128xf32>
      %87 = arith.mulf %78, %58 : vector<8x128xf32>
      %88 = arith.addf %86, %87 : vector<8x128xf32>
      %c0_56 = arith.constant 0 : index
      %c0_57 = arith.constant 0 : index
      %89 = vector.load %arg16[%c0_56, %c0_57] : memref<8x128xf32, #tpu.memory_space<vmem>>, vector<8x128xf32>
      %90 = arith.truncf %89 : vector<8x128xf32> to vector<8x128xbf16>
      %cst_58 = arith.constant dense<0.000000e+00> : vector<8x384xf32>
      %91 = tpu.matmul %90, %43, %cst_58 {dimension_numbers = #tpu.dot_dimension_numbers<[1], [0], [0], [1], [0, 0, 1, 1], [], []>} : vector<8x128xbf16>, vector<128x384xbf16>, vector<8x384xf32> -> vector<8x384xf32>
      %92 = vector.broadcast %46 : vector<1x384xf32> to vector<8x384xf32>
      %93 = arith.addf %91, %92 : vector<8x384xf32>
      %94 = vector.extract_strided_slice %57 {offsets = [0, 0], sizes = [8, 128], strides = [1, 1]} : vector<8x384xf32> to vector<8x128xf32>
      %95 = vector.extract_strided_slice %93 {offsets = [0, 0], sizes = [8, 128], strides = [1, 1]} : vector<8x384xf32> to vector<8x128xf32>
      %96 = arith.addf %94, %95 : vector<8x128xf32>
      %97 = arith.negf %96 : vector<8x128xf32>
      %98 = math.exp %97 : vector<8x128xf32>
      %cst_59 = arith.constant 1.000000e+00 : f32
      %99 = vector.broadcast %cst_59 : f32 to vector<8x128xf32>
      %100 = arith.addf %99, %98 : vector<8x128xf32>
      %101 = arith.divf %99, %100 : vector<8x128xf32>
      %102 = vector.extract_strided_slice %57 {offsets = [0, 128], sizes = [8, 128], strides = [1, 1]} : vector<8x384xf32> to vector<8x128xf32>
      %103 = vector.extract_strided_slice %93 {offsets = [0, 128], sizes = [8, 128], strides = [1, 1]} : vector<8x384xf32> to vector<8x128xf32>
      %104 = arith.addf %102, %103 : vector<8x128xf32>
      %105 = arith.negf %104 : vector<8x128xf32>
      %106 = math.exp %105 : vector<8x128xf32>
      %cst_60 = arith.constant 1.000000e+00 : f32
      %107 = vector.broadcast %cst_60 : f32 to vector<8x128xf32>
      %108 = arith.addf %107, %106 : vector<8x128xf32>
      %109 = arith.divf %107, %108 : vector<8x128xf32>
      %110 = vector.extract_strided_slice %57 {offsets = [0, 256], sizes = [8, 128], strides = [1, 1]} : vector<8x384xf32> to vector<8x128xf32>
      %111 = vector.extract_strided_slice %93 {offsets = [0, 256], sizes = [8, 128], strides = [1, 1]} : vector<8x384xf32> to vector<8x128xf32>
      %112 = arith.mulf %101, %111 : vector<8x128xf32>
      %113 = arith.addf %110, %112 : vector<8x128xf32>
      %114 = math.tanh %113 : vector<8x128xf32>
      %cst_61 = arith.constant 1.000000e+00 : f32
      %115 = vector.broadcast %cst_61 : f32 to vector<8x128xf32>
      %116 = arith.subf %115, %109 : vector<8x128xf32>
      %117 = arith.mulf %116, %114 : vector<8x128xf32>
      %118 = arith.mulf %109, %89 : vector<8x128xf32>
      %119 = arith.addf %117, %118 : vector<8x128xf32>
      %c0_62 = arith.constant 0 : index
      %c0_63 = arith.constant 0 : index
      %120 = vector.load %arg15[%c0_62, %c0_63] : memref<8x128xf32, #tpu.memory_space<vmem>>, vector<8x128xf32>
      tpu.vector_store %arg15[%c0_62, %c0_63], %88 {strides = array<i32>} : memref<8x128xf32, #tpu.memory_space<vmem>>, vector<8x128xf32>,
      %c0_64 = arith.constant 0 : index
      %c0_65 = arith.constant 0 : index
      %121 = vector.load %arg16[%c0_64, %c0_65] : memref<8x128xf32, #tpu.memory_space<vmem>>, vector<8x128xf32>
      tpu.vector_store %arg16[%c0_64, %c0_65], %119 {strides = array<i32>} : memref<8x128xf32, #tpu.memory_space<vmem>>, vector<8x128xf32>,
      %122 = arith.index_cast %c0_i32_46 : i32 to index
      %c0_66 = arith.constant 0 : index
      %c0_67 = arith.constant 0 : index
      %123 = vector.load %arg13[%122, %c0_66, %c0_67] : memref<8x8x256xf32, #tpu.memory_space<vmem>>, vector<1x8x128xf32>
      %124 = vector.shape_cast %123 : vector<1x8x128xf32> to vector<8x128xf32>
      %125 = vector.shape_cast %88 : vector<8x128xf32> to vector<1x8x128xf32>
      tpu.vector_store %arg13[%122, %c0_66, %c0_67], %125 {strides = array<i32>} : memref<8x8x256xf32, #tpu.memory_space<vmem>>, vector<1x8x128xf32>,
      %126 = arith.index_cast %51 : i32 to index
      %c0_68 = arith.constant 0 : index
      %c128 = arith.constant 128 : index
      %127 = vector.load %arg13[%126, %c0_68, %c128] : memref<8x8x256xf32, #tpu.memory_space<vmem>>, vector<1x8x128xf32>
      %128 = vector.shape_cast %127 : vector<1x8x128xf32> to vector<8x128xf32>
      %129 = vector.shape_cast %119 : vector<8x128xf32> to vector<1x8x128xf32>
      tpu.vector_store %arg13[%126, %c0_68, %c128], %129 {strides = array<i32>} : memref<8x8x256xf32, #tpu.memory_space<vmem>>, vector<1x8x128xf32>,
      %c1_i32_69 = arith.constant 1 : i32
      %c7_i32_70 = arith.constant 7 : i32
      %130 = arith.subi %c7_i32_70, %c1_i32_69 : i32
      %131 = arith.index_cast %c1_i32_69 : i32 to index
      %c0_71 = arith.constant 0 : index
      %c0_72 = arith.constant 0 : index
      %132 = vector.load %arg14[%131, %c0_71, %c0_72] : memref<8x8x768xf32, #tpu.memory_space<vmem>>, vector<1x8x384xf32>
      %133 = vector.shape_cast %132 : vector<1x8x384xf32> to vector<8x384xf32>
      %134 = arith.index_cast %130 : i32 to index
      %c0_73 = arith.constant 0 : index
      %c384_74 = arith.constant 384 : index
      %135 = vector.load %arg14[%134, %c0_73, %c384_74] : memref<8x8x768xf32, #tpu.memory_space<vmem>>, vector<1x8x384xf32>
      %136 = vector.shape_cast %135 : vector<1x8x384xf32> to vector<8x384xf32>
      %c0_75 = arith.constant 0 : index
      %c0_76 = arith.constant 0 : index
      %137 = vector.load %arg15[%c0_75, %c0_76] : memref<8x128xf32, #tpu.memory_space<vmem>>, vector<8x128xf32>
      %138 = arith.truncf %137 : vector<8x128xf32> to vector<8x128xbf16>
      %cst_77 = arith.constant dense<0.000000e+00> : vector<8x384xf32>
      %139 = tpu.matmul %138, %37, %cst_77 {dimension_numbers = #tpu.dot_dimension_numbers<[1], [0], [0], [1], [0, 0, 1, 1], [], []>} : vector<8x128xbf16>, vector<128x384xbf16>, vector<8x384xf32> -> vector<8x384xf32>
      %140 = vector.broadcast %40 : vector<1x384xf32> to vector<8x384xf32>
      %141 = arith.addf %139, %140 : vector<8x384xf32>
      %142 = vector.extract_strided_slice %133 {offsets = [0, 0], sizes = [8, 128], strides = [1, 1]} : vector<8x384xf32> to vector<8x128xf32>
      %143 = vector.extract_strided_slice %141 {offsets = [0, 0], sizes = [8, 128], strides = [1, 1]} : vector<8x384xf32> to vector<8x128xf32>
      %144 = arith.addf %142, %143 : vector<8x128xf32>
      %145 = arith.negf %144 : vector<8x128xf32>
      %146 = math.exp %145 : vector<8x128xf32>
      %cst_78 = arith.constant 1.000000e+00 : f32
      %147 = vector.broadcast %cst_78 : f32 to vector<8x128xf32>
      %148 = arith.addf %147, %146 : vector<8x128xf32>
      %149 = arith.divf %147, %148 : vector<8x128xf32>
      %150 = vector.extract_strided_slice %133 {offsets = [0, 128], sizes = [8, 128], strides = [1, 1]} : vector<8x384xf32> to vector<8x128xf32>
      %151 = vector.extract_strided_slice %141 {offsets = [0, 128], sizes = [8, 128], strides = [1, 1]} : vector<8x384xf32> to vector<8x128xf32>
      %152 = arith.addf %150, %151 : vector<8x128xf32>
      %153 = arith.negf %152 : vector<8x128xf32>
      %154 = math.exp %153 : vector<8x128xf32>
      %cst_79 = arith.constant 1.000000e+00 : f32
      %155 = vector.broadcast %cst_79 : f32 to vector<8x128xf32>
      %156 = arith.addf %155, %154 : vector<8x128xf32>
      %157 = arith.divf %155, %156 : vector<8x128xf32>
      %158 = vector.extract_strided_slice %133 {offsets = [0, 256], sizes = [8, 128], strides = [1, 1]} : vector<8x384xf32> to vector<8x128xf32>
      %159 = vector.extract_strided_slice %141 {offsets = [0, 256], sizes = [8, 128], strides = [1, 1]} : vector<8x384xf32> to vector<8x128xf32>
      %160 = arith.mulf %149, %159 : vector<8x128xf32>
      %161 = arith.addf %158, %160 : vector<8x128xf32>
      %162 = math.tanh %161 : vector<8x128xf32>
      %cst_80 = arith.constant 1.000000e+00 : f32
      %163 = vector.broadcast %cst_80 : f32 to vector<8x128xf32>
      %164 = arith.subf %163, %157 : vector<8x128xf32>
      %165 = arith.mulf %164, %162 : vector<8x128xf32>
      %166 = arith.mulf %157, %137 : vector<8x128xf32>
      %167 = arith.addf %165, %166 : vector<8x128xf32>
      %c0_81 = arith.constant 0 : index
      %c0_82 = arith.constant 0 : index
      %168 = vector.load %arg16[%c0_81, %c0_82] : memref<8x128xf32, #tpu.memory_space<vmem>>, vector<8x128xf32>
      %169 = arith.truncf %168 : vector<8x128xf32> to vector<8x128xbf16>
      %cst_83 = arith.constant dense<0.000000e+00> : vector<8x384xf32>
      %170 = tpu.matmul %169, %43, %cst_83 {dimension_numbers = #tpu.dot_dimension_numbers<[1], [0], [0], [1], [0, 0, 1, 1], [], []>} : vector<8x128xbf16>, vector<128x384xbf16>, vector<8x384xf32> -> vector<8x384xf32>
      %171 = vector.broadcast %46 : vector<1x384xf32> to vector<8x384xf32>
      %172 = arith.addf %170, %171 : vector<8x384xf32>
      %173 = vector.extract_strided_slice %136 {offsets = [0, 0], sizes = [8, 128], strides = [1, 1]} : vector<8x384xf32> to vector<8x128xf32>
      %174 = vector.extract_strided_slice %172 {offsets = [0, 0], sizes = [8, 128], strides = [1, 1]} : vector<8x384xf32> to vector<8x128xf32>
      %175 = arith.addf %173, %174 : vector<8x128xf32>
      %176 = arith.negf %175 : vector<8x128xf32>
      %177 = math.exp %176 : vector<8x128xf32>
      %cst_84 = arith.constant 1.000000e+00 : f32
      %178 = vector.broadcast %cst_84 : f32 to vector<8x128xf32>
      %179 = arith.addf %178, %177 : vector<8x128xf32>
      %180 = arith.divf %178, %179 : vector<8x128xf32>
      %181 = vector.extract_strided_slice %136 {offsets = [0, 128], sizes = [8, 128], strides = [1, 1]} : vector<8x384xf32> to vector<8x128xf32>
      %182 = vector.extract_strided_slice %172 {offsets = [0, 128], sizes = [8, 128], strides = [1, 1]} : vector<8x384xf32> to vector<8x128xf32>
      %183 = arith.addf %181, %182 : vector<8x128xf32>
      %184 = arith.negf %183 : vector<8x128xf32>
      %185 = math.exp %184 : vector<8x128xf32>
      %cst_85 = arith.constant 1.000000e+00 : f32
      %186 = vector.broadcast %cst_85 : f32 to vector<8x128xf32>
      %187 = arith.addf %186, %185 : vector<8x128xf32>
      %188 = arith.divf %186, %187 : vector<8x128xf32>
      %189 = vector.extract_strided_slice %136 {offsets = [0, 256], sizes = [8, 128], strides = [1, 1]} : vector<8x384xf32> to vector<8x128xf32>
      %190 = vector.extract_strided_slice %172 {offsets = [0, 256], sizes = [8, 128], strides = [1, 1]} : vector<8x384xf32> to vector<8x128xf32>
      %191 = arith.mulf %180, %190 : vector<8x128xf32>
      %192 = arith.addf %189, %191 : vector<8x128xf32>
      %193 = math.tanh %192 : vector<8x128xf32>
      %cst_86 = arith.constant 1.000000e+00 : f32
      %194 = vector.broadcast %cst_86 : f32 to vector<8x128xf32>
      %195 = arith.subf %194, %188 : vector<8x128xf32>
      %196 = arith.mulf %195, %193 : vector<8x128xf32>
      %197 = arith.mulf %188, %168 : vector<8x128xf32>
      %198 = arith.addf %196, %197 : vector<8x128xf32>
      %c0_87 = arith.constant 0 : index
      %c0_88 = arith.constant 0 : index
      %199 = vector.load %arg15[%c0_87, %c0_88] : memref<8x128xf32, #tpu.memory_space<vmem>>, vector<8x128xf32>
      tpu.vector_store %arg15[%c0_87, %c0_88], %167 {strides = array<i32>} : memref<8x128xf32, #tpu.memory_space<vmem>>, vector<8x128xf32>,
      %c0_89 = arith.constant 0 : index
      %c0_90 = arith.constant 0 : index
      %200 = vector.load %arg16[%c0_89, %c0_90] : memref<8x128xf32, #tpu.memory_space<vmem>>, vector<8x128xf32>
      tpu.vector_store %arg16[%c0_89, %c0_90], %198 {strides = array<i32>} : memref<8x128xf32, #tpu.memory_space<vmem>>, vector<8x128xf32>,
      %201 = arith.index_cast %c1_i32_69 : i32 to index
      %c0_91 = arith.constant 0 : index
      %c0_92 = arith.constant 0 : index
      %202 = vector.load %arg13[%201, %c0_91, %c0_92] : memref<8x8x256xf32, #tpu.memory_space<vmem>>, vector<1x8x128xf32>
      %203 = vector.shape_cast %202 : vector<1x8x128xf32> to vector<8x128xf32>
      %204 = vector.shape_cast %167 : vector<8x128xf32> to vector<1x8x128xf32>
      tpu.vector_store %arg13[%201, %c0_91, %c0_92], %204 {strides = array<i32>} : memref<8x8x256xf32, #tpu.memory_space<vmem>>, vector<1x8x128xf32>,
      %205 = arith.index_cast %130 : i32 to index
      %c0_93 = arith.constant 0 : index
      %c128_94 = arith.constant 128 : index
      %206 = vector.load %arg13[%205, %c0_93, %c128_94] : memref<8x8x256xf32, #tpu.memory_space<vmem>>, vector<1x8x128xf32>
      %207 = vector.shape_cast %206 : vector<1x8x128xf32> to vector<8x128xf32>
      %208 = vector.shape_cast %198 : vector<8x128xf32> to vector<1x8x128xf32>
      tpu.vector_store %arg13[%205, %c0_93, %c128_94], %208 {strides = array<i32>} : memref<8x8x256xf32, #tpu.memory_space<vmem>>, vector<1x8x128xf32>,
      %c2_i32 = arith.constant 2 : i32
      %c7_i32_95 = arith.constant 7 : i32
      %209 = arith.subi %c7_i32_95, %c2_i32 : i32
      %210 = arith.index_cast %c2_i32 : i32 to index
      %c0_96 = arith.constant 0 : index
      %c0_97 = arith.constant 0 : index
      %211 = vector.load %arg14[%210, %c0_96, %c0_97] : memref<8x8x768xf32, #tpu.memory_space<vmem>>, vector<1x8x384xf32>
      %212 = vector.shape_cast %211 : vector<1x8x384xf32> to vector<8x384xf32>
      %213 = arith.index_cast %209 : i32 to index
      %c0_98 = arith.constant 0 : index
      %c384_99 = arith.constant 384 : index
      %214 = vector.load %arg14[%213, %c0_98, %c384_99] : memref<8x8x768xf32, #tpu.memory_space<vmem>>, vector<1x8x384xf32>
      %215 = vector.shape_cast %214 : vector<1x8x384xf32> to vector<8x384xf32>
      %c0_100 = arith.constant 0 : index
      %c0_101 = arith.constant 0 : index
      %216 = vector.load %arg15[%c0_100, %c0_101] : memref<8x128xf32, #tpu.memory_space<vmem>>, vector<8x128xf32>
      %217 = arith.truncf %216 : vector<8x128xf32> to vector<8x128xbf16>
      %cst_102 = arith.constant dense<0.000000e+00> : vector<8x384xf32>
      %218 = tpu.matmul %217, %37, %cst_102 {dimension_numbers = #tpu.dot_dimension_numbers<[1], [0], [0], [1], [0, 0, 1, 1], [], []>} : vector<8x128xbf16>, vector<128x384xbf16>, vector<8x384xf32> -> vector<8x384xf32>
      %219 = vector.broadcast %40 : vector<1x384xf32> to vector<8x384xf32>
      %220 = arith.addf %218, %219 : vector<8x384xf32>
      %221 = vector.extract_strided_slice %212 {offsets = [0, 0], sizes = [8, 128], strides = [1, 1]} : vector<8x384xf32> to vector<8x128xf32>
      %222 = vector.extract_strided_slice %220 {offsets = [0, 0], sizes = [8, 128], strides = [1, 1]} : vector<8x384xf32> to vector<8x128xf32>
      %223 = arith.addf %221, %222 : vector<8x128xf32>
      %224 = arith.negf %223 : vector<8x128xf32>
      %225 = math.exp %224 : vector<8x128xf32>
      %cst_103 = arith.constant 1.000000e+00 : f32
      %226 = vector.broadcast %cst_103 : f32 to vector<8x128xf32>
      %227 = arith.addf %226, %225 : vector<8x128xf32>
      %228 = arith.divf %226, %227 : vector<8x128xf32>
      %229 = vector.extract_strided_slice %212 {offsets = [0, 128], sizes = [8, 128], strides = [1, 1]} : vector<8x384xf32> to vector<8x128xf32>
      %230 = vector.extract_strided_slice %220 {offsets = [0, 128], sizes = [8, 128], strides = [1, 1]} : vector<8x384xf32> to vector<8x128xf32>
      %231 = arith.addf %229, %230 : vector<8x128xf32>
      %232 = arith.negf %231 : vector<8x128xf32>
      %233 = math.exp %232 : vector<8x128xf32>
      %cst_104 = arith.constant 1.000000e+00 : f32
      %234 = vector.broadcast %cst_104 : f32 to vector<8x128xf32>
      %235 = arith.addf %234, %233 : vector<8x128xf32>
      %236 = arith.divf %234, %235 : vector<8x128xf32>
      %237 = vector.extract_strided_slice %212 {offsets = [0, 256], sizes = [8, 128], strides = [1, 1]} : vector<8x384xf32> to vector<8x128xf32>
      %238 = vector.extract_strided_slice %220 {offsets = [0, 256], sizes = [8, 128], strides = [1, 1]} : vector<8x384xf32> to vector<8x128xf32>
      %239 = arith.mulf %228, %238 : vector<8x128xf32>
      %240 = arith.addf %237, %239 : vector<8x128xf32>
      %241 = math.tanh %240 : vector<8x128xf32>
      %cst_105 = arith.constant 1.000000e+00 : f32
      %242 = vector.broadcast %cst_105 : f32 to vector<8x128xf32>
      %243 = arith.subf %242, %236 : vector<8x128xf32>
      %244 = arith.mulf %243, %241 : vector<8x128xf32>
      %245 = arith.mulf %236, %216 : vector<8x128xf32>
      %246 = arith.addf %244, %245 : vector<8x128xf32>
      %c0_106 = arith.constant 0 : index
      %c0_107 = arith.constant 0 : index
      %247 = vector.load %arg16[%c0_106, %c0_107] : memref<8x128xf32, #tpu.memory_space<vmem>>, vector<8x128xf32>
      %248 = arith.truncf %247 : vector<8x128xf32> to vector<8x128xbf16>
      %cst_108 = arith.constant dense<0.000000e+00> : vector<8x384xf32>
      %249 = tpu.matmul %248, %43, %cst_108 {dimension_numbers = #tpu.dot_dimension_numbers<[1], [0], [0], [1], [0, 0, 1, 1], [], []>} : vector<8x128xbf16>, vector<128x384xbf16>, vector<8x384xf32> -> vector<8x384xf32>
      %250 = vector.broadcast %46 : vector<1x384xf32> to vector<8x384xf32>
      %251 = arith.addf %249, %250 : vector<8x384xf32>
      %252 = vector.extract_strided_slice %215 {offsets = [0, 0], sizes = [8, 128], strides = [1, 1]} : vector<8x384xf32> to vector<8x128xf32>
      %253 = vector.extract_strided_slice %251 {offsets = [0, 0], sizes = [8, 128], strides = [1, 1]} : vector<8x384xf32> to vector<8x128xf32>
      %254 = arith.addf %252, %253 : vector<8x128xf32>
      %255 = arith.negf %254 : vector<8x128xf32>
      %256 = math.exp %255 : vector<8x128xf32>
      %cst_109 = arith.constant 1.000000e+00 : f32
      %257 = vector.broadcast %cst_109 : f32 to vector<8x128xf32>
      %258 = arith.addf %257, %256 : vector<8x128xf32>
      %259 = arith.divf %257, %258 : vector<8x128xf32>
      %260 = vector.extract_strided_slice %215 {offsets = [0, 128], sizes = [8, 128], strides = [1, 1]} : vector<8x384xf32> to vector<8x128xf32>
      %261 = vector.extract_strided_slice %251 {offsets = [0, 128], sizes = [8, 128], strides = [1, 1]} : vector<8x384xf32> to vector<8x128xf32>
      %262 = arith.addf %260, %261 : vector<8x128xf32>
      %263 = arith.negf %262 : vector<8x128xf32>
      %264 = math.exp %263 : vector<8x128xf32>
      %cst_110 = arith.constant 1.000000e+00 : f32
      %265 = vector.broadcast %cst_110 : f32 to vector<8x128xf32>
      %266 = arith.addf %265, %264 : vector<8x128xf32>
      %267 = arith.divf %265, %266 : vector<8x128xf32>
      %268 = vector.extract_strided_slice %215 {offsets = [0, 256], sizes = [8, 128], strides = [1, 1]} : vector<8x384xf32> to vector<8x128xf32>
      %269 = vector.extract_strided_slice %251 {offsets = [0, 256], sizes = [8, 128], strides = [1, 1]} : vector<8x384xf32> to vector<8x128xf32>
      %270 = arith.mulf %259, %269 : vector<8x128xf32>
      %271 = arith.addf %268, %270 : vector<8x128xf32>
      %272 = math.tanh %271 : vector<8x128xf32>
      %cst_111 = arith.constant 1.000000e+00 : f32
      %273 = vector.broadcast %cst_111 : f32 to vector<8x128xf32>
      %274 = arith.subf %273, %267 : vector<8x128xf32>
      %275 = arith.mulf %274, %272 : vector<8x128xf32>
      %276 = arith.mulf %267, %247 : vector<8x128xf32>
      %277 = arith.addf %275, %276 : vector<8x128xf32>
      %c0_112 = arith.constant 0 : index
      %c0_113 = arith.constant 0 : index
      %278 = vector.load %arg15[%c0_112, %c0_113] : memref<8x128xf32, #tpu.memory_space<vmem>>, vector<8x128xf32>
      tpu.vector_store %arg15[%c0_112, %c0_113], %246 {strides = array<i32>} : memref<8x128xf32, #tpu.memory_space<vmem>>, vector<8x128xf32>,
      %c0_114 = arith.constant 0 : index
      %c0_115 = arith.constant 0 : index
      %279 = vector.load %arg16[%c0_114, %c0_115] : memref<8x128xf32, #tpu.memory_space<vmem>>, vector<8x128xf32>
      tpu.vector_store %arg16[%c0_114, %c0_115], %277 {strides = array<i32>} : memref<8x128xf32, #tpu.memory_space<vmem>>, vector<8x128xf32>,
      %280 = arith.index_cast %c2_i32 : i32 to index
      %c0_116 = arith.constant 0 : index
      %c0_117 = arith.constant 0 : index
      %281 = vector.load %arg13[%280, %c0_116, %c0_117] : memref<8x8x256xf32, #tpu.memory_space<vmem>>, vector<1x8x128xf32>
      %282 = vector.shape_cast %281 : vector<1x8x128xf32> to vector<8x128xf32>
      %283 = vector.shape_cast %246 : vector<8x128xf32> to vector<1x8x128xf32>
      tpu.vector_store %arg13[%280, %c0_116, %c0_117], %283 {strides = array<i32>} : memref<8x8x256xf32, #tpu.memory_space<vmem>>, vector<1x8x128xf32>,
      %284 = arith.index_cast %209 : i32 to index
      %c0_118 = arith.constant 0 : index
      %c128_119 = arith.constant 128 : index
      %285 = vector.load %arg13[%284, %c0_118, %c128_119] : memref<8x8x256xf32, #tpu.memory_space<vmem>>, vector<1x8x128xf32>
      %286 = vector.shape_cast %285 : vector<1x8x128xf32> to vector<8x128xf32>
      %287 = vector.shape_cast %277 : vector<8x128xf32> to vector<1x8x128xf32>
      tpu.vector_store %arg13[%284, %c0_118, %c128_119], %287 {strides = array<i32>} : memref<8x8x256xf32, #tpu.memory_space<vmem>>, vector<1x8x128xf32>,
      %c3_i32 = arith.constant 3 : i32
      %c7_i32_120 = arith.constant 7 : i32
      %288 = arith.subi %c7_i32_120, %c3_i32 : i32
      %289 = arith.index_cast %c3_i32 : i32 to index
      %c0_121 = arith.constant 0 : index
      %c0_122 = arith.constant 0 : index
      %290 = vector.load %arg14[%289, %c0_121, %c0_122] : memref<8x8x768xf32, #tpu.memory_space<vmem>>, vector<1x8x384xf32>
      %291 = vector.shape_cast %290 : vector<1x8x384xf32> to vector<8x384xf32>
      %292 = arith.index_cast %288 : i32 to index
      %c0_123 = arith.constant 0 : index
      %c384_124 = arith.constant 384 : index
      %293 = vector.load %arg14[%292, %c0_123, %c384_124] : memref<8x8x768xf32, #tpu.memory_space<vmem>>, vector<1x8x384xf32>
      %294 = vector.shape_cast %293 : vector<1x8x384xf32> to vector<8x384xf32>
      %c0_125 = arith.constant 0 : index
      %c0_126 = arith.constant 0 : index
      %295 = vector.load %arg15[%c0_125, %c0_126] : memref<8x128xf32, #tpu.memory_space<vmem>>, vector<8x128xf32>
      %296 = arith.truncf %295 : vector<8x128xf32> to vector<8x128xbf16>
      %cst_127 = arith.constant dense<0.000000e+00> : vector<8x384xf32>
      %297 = tpu.matmul %296, %37, %cst_127 {dimension_numbers = #tpu.dot_dimension_numbers<[1], [0], [0], [1], [0, 0, 1, 1], [], []>} : vector<8x128xbf16>, vector<128x384xbf16>, vector<8x384xf32> -> vector<8x384xf32>
      %298 = vector.broadcast %40 : vector<1x384xf32> to vector<8x384xf32>
      %299 = arith.addf %297, %298 : vector<8x384xf32>
      %300 = vector.extract_strided_slice %291 {offsets = [0, 0], sizes = [8, 128], strides = [1, 1]} : vector<8x384xf32> to vector<8x128xf32>
      %301 = vector.extract_strided_slice %299 {offsets = [0, 0], sizes = [8, 128], strides = [1, 1]} : vector<8x384xf32> to vector<8x128xf32>
      %302 = arith.addf %300, %301 : vector<8x128xf32>
      %303 = arith.negf %302 : vector<8x128xf32>
      %304 = math.exp %303 : vector<8x128xf32>
      %cst_128 = arith.constant 1.000000e+00 : f32
      %305 = vector.broadcast %cst_128 : f32 to vector<8x128xf32>
      %306 = arith.addf %305, %304 : vector<8x128xf32>
      %307 = arith.divf %305, %306 : vector<8x128xf32>
      %308 = vector.extract_strided_slice %291 {offsets = [0, 128], sizes = [8, 128], strides = [1, 1]} : vector<8x384xf32> to vector<8x128xf32>
      %309 = vector.extract_strided_slice %299 {offsets = [0, 128], sizes = [8, 128], strides = [1, 1]} : vector<8x384xf32> to vector<8x128xf32>
      %310 = arith.addf %308, %309 : vector<8x128xf32>
      %311 = arith.negf %310 : vector<8x128xf32>
      %312 = math.exp %311 : vector<8x128xf32>
      %cst_129 = arith.constant 1.000000e+00 : f32
      %313 = vector.broadcast %cst_129 : f32 to vector<8x128xf32>
      %314 = arith.addf %313, %312 : vector<8x128xf32>
      %315 = arith.divf %313, %314 : vector<8x128xf32>
      %316 = vector.extract_strided_slice %291 {offsets = [0, 256], sizes = [8, 128], strides = [1, 1]} : vector<8x384xf32> to vector<8x128xf32>
      %317 = vector.extract_strided_slice %299 {offsets = [0, 256], sizes = [8, 128], strides = [1, 1]} : vector<8x384xf32> to vector<8x128xf32>
      %318 = arith.mulf %307, %317 : vector<8x128xf32>
      %319 = arith.addf %316, %318 : vector<8x128xf32>
      %320 = math.tanh %319 : vector<8x128xf32>
      %cst_130 = arith.constant 1.000000e+00 : f32
      %321 = vector.broadcast %cst_130 : f32 to vector<8x128xf32>
      %322 = arith.subf %321, %315 : vector<8x128xf32>
      %323 = arith.mulf %322, %320 : vector<8x128xf32>
      %324 = arith.mulf %315, %295 : vector<8x128xf32>
      %325 = arith.addf %323, %324 : vector<8x128xf32>
      %c0_131 = arith.constant 0 : index
      %c0_132 = arith.constant 0 : index
      %326 = vector.load %arg16[%c0_131, %c0_132] : memref<8x128xf32, #tpu.memory_space<vmem>>, vector<8x128xf32>
      %327 = arith.truncf %326 : vector<8x128xf32> to vector<8x128xbf16>
      %cst_133 = arith.constant dense<0.000000e+00> : vector<8x384xf32>
      %328 = tpu.matmul %327, %43, %cst_133 {dimension_numbers = #tpu.dot_dimension_numbers<[1], [0], [0], [1], [0, 0, 1, 1], [], []>} : vector<8x128xbf16>, vector<128x384xbf16>, vector<8x384xf32> -> vector<8x384xf32>
      %329 = vector.broadcast %46 : vector<1x384xf32> to vector<8x384xf32>
      %330 = arith.addf %328, %329 : vector<8x384xf32>
      %331 = vector.extract_strided_slice %294 {offsets = [0, 0], sizes = [8, 128], strides = [1, 1]} : vector<8x384xf32> to vector<8x128xf32>
      %332 = vector.extract_strided_slice %330 {offsets = [0, 0], sizes = [8, 128], strides = [1, 1]} : vector<8x384xf32> to vector<8x128xf32>
      %333 = arith.addf %331, %332 : vector<8x128xf32>
      %334 = arith.negf %333 : vector<8x128xf32>
      %335 = math.exp %334 : vector<8x128xf32>
      %cst_134 = arith.constant 1.000000e+00 : f32
      %336 = vector.broadcast %cst_134 : f32 to vector<8x128xf32>
      %337 = arith.addf %336, %335 : vector<8x128xf32>
      %338 = arith.divf %336, %337 : vector<8x128xf32>
      %339 = vector.extract_strided_slice %294 {offsets = [0, 128], sizes = [8, 128], strides = [1, 1]} : vector<8x384xf32> to vector<8x128xf32>
      %340 = vector.extract_strided_slice %330 {offsets = [0, 128], sizes = [8, 128], strides = [1, 1]} : vector<8x384xf32> to vector<8x128xf32>
      %341 = arith.addf %339, %340 : vector<8x128xf32>
      %342 = arith.negf %341 : vector<8x128xf32>
      %343 = math.exp %342 : vector<8x128xf32>
      %cst_135 = arith.constant 1.000000e+00 : f32
      %344 = vector.broadcast %cst_135 : f32 to vector<8x128xf32>
      %345 = arith.addf %344, %343 : vector<8x128xf32>
      %346 = arith.divf %344, %345 : vector<8x128xf32>
      %347 = vector.extract_strided_slice %294 {offsets = [0, 256], sizes = [8, 128], strides = [1, 1]} : vector<8x384xf32> to vector<8x128xf32>
      %348 = vector.extract_strided_slice %330 {offsets = [0, 256], sizes = [8, 128], strides = [1, 1]} : vector<8x384xf32> to vector<8x128xf32>
      %349 = arith.mulf %338, %348 : vector<8x128xf32>
      %350 = arith.addf %347, %349 : vector<8x128xf32>
      %351 = math.tanh %350 : vector<8x128xf32>
      %cst_136 = arith.constant 1.000000e+00 : f32
      %352 = vector.broadcast %cst_136 : f32 to vector<8x128xf32>
      %353 = arith.subf %352, %346 : vector<8x128xf32>
      %354 = arith.mulf %353, %351 : vector<8x128xf32>
      %355 = arith.mulf %346, %326 : vector<8x128xf32>
      %356 = arith.addf %354, %355 : vector<8x128xf32>
      %c0_137 = arith.constant 0 : index
      %c0_138 = arith.constant 0 : index
      %357 = vector.load %arg15[%c0_137, %c0_138] : memref<8x128xf32, #tpu.memory_space<vmem>>, vector<8x128xf32>
      tpu.vector_store %arg15[%c0_137, %c0_138], %325 {strides = array<i32>} : memref<8x128xf32, #tpu.memory_space<vmem>>, vector<8x128xf32>,
      %c0_139 = arith.constant 0 : index
      %c0_140 = arith.constant 0 : index
      %358 = vector.load %arg16[%c0_139, %c0_140] : memref<8x128xf32, #tpu.memory_space<vmem>>, vector<8x128xf32>
      tpu.vector_store %arg16[%c0_139, %c0_140], %356 {strides = array<i32>} : memref<8x128xf32, #tpu.memory_space<vmem>>, vector<8x128xf32>,
      %359 = arith.index_cast %c3_i32 : i32 to index
      %c0_141 = arith.constant 0 : index
      %c0_142 = arith.constant 0 : index
      %360 = vector.load %arg13[%359, %c0_141, %c0_142] : memref<8x8x256xf32, #tpu.memory_space<vmem>>, vector<1x8x128xf32>
      %361 = vector.shape_cast %360 : vector<1x8x128xf32> to vector<8x128xf32>
      %362 = vector.shape_cast %325 : vector<8x128xf32> to vector<1x8x128xf32>
      tpu.vector_store %arg13[%359, %c0_141, %c0_142], %362 {strides = array<i32>} : memref<8x8x256xf32, #tpu.memory_space<vmem>>, vector<1x8x128xf32>,
      %363 = arith.index_cast %288 : i32 to index
      %c0_143 = arith.constant 0 : index
      %c128_144 = arith.constant 128 : index
      %364 = vector.load %arg13[%363, %c0_143, %c128_144] : memref<8x8x256xf32, #tpu.memory_space<vmem>>, vector<1x8x128xf32>
      %365 = vector.shape_cast %364 : vector<1x8x128xf32> to vector<8x128xf32>
      %366 = vector.shape_cast %356 : vector<8x128xf32> to vector<1x8x128xf32>
      tpu.vector_store %arg13[%363, %c0_143, %c128_144], %366 {strides = array<i32>} : memref<8x8x256xf32, #tpu.memory_space<vmem>>, vector<1x8x128xf32>,
      %c4_i32_145 = arith.constant 4 : i32
      %c7_i32_146 = arith.constant 7 : i32
      %367 = arith.subi %c7_i32_146, %c4_i32_145 : i32
      %368 = arith.index_cast %c4_i32_145 : i32 to index
      %c0_147 = arith.constant 0 : index
      %c0_148 = arith.constant 0 : index
      %369 = vector.load %arg14[%368, %c0_147, %c0_148] : memref<8x8x768xf32, #tpu.memory_space<vmem>>, vector<1x8x384xf32>
      %370 = vector.shape_cast %369 : vector<1x8x384xf32> to vector<8x384xf32>
      %371 = arith.index_cast %367 : i32 to index
      %c0_149 = arith.constant 0 : index
      %c384_150 = arith.constant 384 : index
      %372 = vector.load %arg14[%371, %c0_149, %c384_150] : memref<8x8x768xf32, #tpu.memory_space<vmem>>, vector<1x8x384xf32>
      %373 = vector.shape_cast %372 : vector<1x8x384xf32> to vector<8x384xf32>
      %c0_151 = arith.constant 0 : index
      %c0_152 = arith.constant 0 : index
      %374 = vector.load %arg15[%c0_151, %c0_152] : memref<8x128xf32, #tpu.memory_space<vmem>>, vector<8x128xf32>
      %375 = arith.truncf %374 : vector<8x128xf32> to vector<8x128xbf16>
      %cst_153 = arith.constant dense<0.000000e+00> : vector<8x384xf32>
      %376 = tpu.matmul %375, %37, %cst_153 {dimension_numbers = #tpu.dot_dimension_numbers<[1], [0], [0], [1], [0, 0, 1, 1], [], []>} : vector<8x128xbf16>, vector<128x384xbf16>, vector<8x384xf32> -> vector<8x384xf32>
      %377 = vector.broadcast %40 : vector<1x384xf32> to vector<8x384xf32>
      %378 = arith.addf %376, %377 : vector<8x384xf32>
      %379 = vector.extract_strided_slice %370 {offsets = [0, 0], sizes = [8, 128], strides = [1, 1]} : vector<8x384xf32> to vector<8x128xf32>
      %380 = vector.extract_strided_slice %378 {offsets = [0, 0], sizes = [8, 128], strides = [1, 1]} : vector<8x384xf32> to vector<8x128xf32>
      %381 = arith.addf %379, %380 : vector<8x128xf32>
      %382 = arith.negf %381 : vector<8x128xf32>
      %383 = math.exp %382 : vector<8x128xf32>
      %cst_154 = arith.constant 1.000000e+00 : f32
      %384 = vector.broadcast %cst_154 : f32 to vector<8x128xf32>
      %385 = arith.addf %384, %383 : vector<8x128xf32>
      %386 = arith.divf %384, %385 : vector<8x128xf32>
      %387 = vector.extract_strided_slice %370 {offsets = [0, 128], sizes = [8, 128], strides = [1, 1]} : vector<8x384xf32> to vector<8x128xf32>
      %388 = vector.extract_strided_slice %378 {offsets = [0, 128], sizes = [8, 128], strides = [1, 1]} : vector<8x384xf32> to vector<8x128xf32>
      %389 = arith.addf %387, %388 : vector<8x128xf32>
      %390 = arith.negf %389 : vector<8x128xf32>
      %391 = math.exp %390 : vector<8x128xf32>
      %cst_155 = arith.constant 1.000000e+00 : f32
      %392 = vector.broadcast %cst_155 : f32 to vector<8x128xf32>
      %393 = arith.addf %392, %391 : vector<8x128xf32>
      %394 = arith.divf %392, %393 : vector<8x128xf32>
      %395 = vector.extract_strided_slice %370 {offsets = [0, 256], sizes = [8, 128], strides = [1, 1]} : vector<8x384xf32> to vector<8x128xf32>
      %396 = vector.extract_strided_slice %378 {offsets = [0, 256], sizes = [8, 128], strides = [1, 1]} : vector<8x384xf32> to vector<8x128xf32>
      %397 = arith.mulf %386, %396 : vector<8x128xf32>
      %398 = arith.addf %395, %397 : vector<8x128xf32>
      %399 = math.tanh %398 : vector<8x128xf32>
      %cst_156 = arith.constant 1.000000e+00 : f32
      %400 = vector.broadcast %cst_156 : f32 to vector<8x128xf32>
      %401 = arith.subf %400, %394 : vector<8x128xf32>
      %402 = arith.mulf %401, %399 : vector<8x128xf32>
      %403 = arith.mulf %394, %374 : vector<8x128xf32>
      %404 = arith.addf %402, %403 : vector<8x128xf32>
      %c0_157 = arith.constant 0 : index
      %c0_158 = arith.constant 0 : index
      %405 = vector.load %arg16[%c0_157, %c0_158] : memref<8x128xf32, #tpu.memory_space<vmem>>, vector<8x128xf32>
      %406 = arith.truncf %405 : vector<8x128xf32> to vector<8x128xbf16>
      %cst_159 = arith.constant dense<0.000000e+00> : vector<8x384xf32>
      %407 = tpu.matmul %406, %43, %cst_159 {dimension_numbers = #tpu.dot_dimension_numbers<[1], [0], [0], [1], [0, 0, 1, 1], [], []>} : vector<8x128xbf16>, vector<128x384xbf16>, vector<8x384xf32> -> vector<8x384xf32>
      %408 = vector.broadcast %46 : vector<1x384xf32> to vector<8x384xf32>
      %409 = arith.addf %407, %408 : vector<8x384xf32>
      %410 = vector.extract_strided_slice %373 {offsets = [0, 0], sizes = [8, 128], strides = [1, 1]} : vector<8x384xf32> to vector<8x128xf32>
      %411 = vector.extract_strided_slice %409 {offsets = [0, 0], sizes = [8, 128], strides = [1, 1]} : vector<8x384xf32> to vector<8x128xf32>
      %412 = arith.addf %410, %411 : vector<8x128xf32>
      %413 = arith.negf %412 : vector<8x128xf32>
      %414 = math.exp %413 : vector<8x128xf32>
      %cst_160 = arith.constant 1.000000e+00 : f32
      %415 = vector.broadcast %cst_160 : f32 to vector<8x128xf32>
      %416 = arith.addf %415, %414 : vector<8x128xf32>
      %417 = arith.divf %415, %416 : vector<8x128xf32>
      %418 = vector.extract_strided_slice %373 {offsets = [0, 128], sizes = [8, 128], strides = [1, 1]} : vector<8x384xf32> to vector<8x128xf32>
      %419 = vector.extract_strided_slice %409 {offsets = [0, 128], sizes = [8, 128], strides = [1, 1]} : vector<8x384xf32> to vector<8x128xf32>
      %420 = arith.addf %418, %419 : vector<8x128xf32>
      %421 = arith.negf %420 : vector<8x128xf32>
      %422 = math.exp %421 : vector<8x128xf32>
      %cst_161 = arith.constant 1.000000e+00 : f32
      %423 = vector.broadcast %cst_161 : f32 to vector<8x128xf32>
      %424 = arith.addf %423, %422 : vector<8x128xf32>
      %425 = arith.divf %423, %424 : vector<8x128xf32>
      %426 = vector.extract_strided_slice %373 {offsets = [0, 256], sizes = [8, 128], strides = [1, 1]} : vector<8x384xf32> to vector<8x128xf32>
      %427 = vector.extract_strided_slice %409 {offsets = [0, 256], sizes = [8, 128], strides = [1, 1]} : vector<8x384xf32> to vector<8x128xf32>
      %428 = arith.mulf %417, %427 : vector<8x128xf32>
      %429 = arith.addf %426, %428 : vector<8x128xf32>
      %430 = math.tanh %429 : vector<8x128xf32>
      %cst_162 = arith.constant 1.000000e+00 : f32
      %431 = vector.broadcast %cst_162 : f32 to vector<8x128xf32>
      %432 = arith.subf %431, %425 : vector<8x128xf32>
      %433 = arith.mulf %432, %430 : vector<8x128xf32>
      %434 = arith.mulf %425, %405 : vector<8x128xf32>
      %435 = arith.addf %433, %434 : vector<8x128xf32>
      %c0_163 = arith.constant 0 : index
      %c0_164 = arith.constant 0 : index
      %436 = vector.load %arg15[%c0_163, %c0_164] : memref<8x128xf32, #tpu.memory_space<vmem>>, vector<8x128xf32>
      tpu.vector_store %arg15[%c0_163, %c0_164], %404 {strides = array<i32>} : memref<8x128xf32, #tpu.memory_space<vmem>>, vector<8x128xf32>,
      %c0_165 = arith.constant 0 : index
      %c0_166 = arith.constant 0 : index
      %437 = vector.load %arg16[%c0_165, %c0_166] : memref<8x128xf32, #tpu.memory_space<vmem>>, vector<8x128xf32>
      tpu.vector_store %arg16[%c0_165, %c0_166], %435 {strides = array<i32>} : memref<8x128xf32, #tpu.memory_space<vmem>>, vector<8x128xf32>,
      %438 = arith.index_cast %c4_i32_145 : i32 to index
      %c0_167 = arith.constant 0 : index
      %c0_168 = arith.constant 0 : index
      %439 = vector.load %arg13[%438, %c0_167, %c0_168] : memref<8x8x256xf32, #tpu.memory_space<vmem>>, vector<1x8x128xf32>
      %440 = vector.shape_cast %439 : vector<1x8x128xf32> to vector<8x128xf32>
      %441 = vector.shape_cast %404 : vector<8x128xf32> to vector<1x8x128xf32>
      tpu.vector_store %arg13[%438, %c0_167, %c0_168], %441 {strides = array<i32>} : memref<8x8x256xf32, #tpu.memory_space<vmem>>, vector<1x8x128xf32>,
      %442 = arith.index_cast %367 : i32 to index
      %c0_169 = arith.constant 0 : index
      %c128_170 = arith.constant 128 : index
      %443 = vector.load %arg13[%442, %c0_169, %c128_170] : memref<8x8x256xf32, #tpu.memory_space<vmem>>, vector<1x8x128xf32>
      %444 = vector.shape_cast %443 : vector<1x8x128xf32> to vector<8x128xf32>
      %445 = vector.shape_cast %435 : vector<8x128xf32> to vector<1x8x128xf32>
      tpu.vector_store %arg13[%442, %c0_169, %c128_170], %445 {strides = array<i32>} : memref<8x8x256xf32, #tpu.memory_space<vmem>>, vector<1x8x128xf32>,
      %c5_i32 = arith.constant 5 : i32
      %c7_i32_171 = arith.constant 7 : i32
      %446 = arith.subi %c7_i32_171, %c5_i32 : i32
      %447 = arith.index_cast %c5_i32 : i32 to index
      %c0_172 = arith.constant 0 : index
      %c0_173 = arith.constant 0 : index
      %448 = vector.load %arg14[%447, %c0_172, %c0_173] : memref<8x8x768xf32, #tpu.memory_space<vmem>>, vector<1x8x384xf32>
      %449 = vector.shape_cast %448 : vector<1x8x384xf32> to vector<8x384xf32>
      %450 = arith.index_cast %446 : i32 to index
      %c0_174 = arith.constant 0 : index
      %c384_175 = arith.constant 384 : index
      %451 = vector.load %arg14[%450, %c0_174, %c384_175] : memref<8x8x768xf32, #tpu.memory_space<vmem>>, vector<1x8x384xf32>
      %452 = vector.shape_cast %451 : vector<1x8x384xf32> to vector<8x384xf32>
      %c0_176 = arith.constant 0 : index
      %c0_177 = arith.constant 0 : index
      %453 = vector.load %arg15[%c0_176, %c0_177] : memref<8x128xf32, #tpu.memory_space<vmem>>, vector<8x128xf32>
      %454 = arith.truncf %453 : vector<8x128xf32> to vector<8x128xbf16>
      %cst_178 = arith.constant dense<0.000000e+00> : vector<8x384xf32>
      %455 = tpu.matmul %454, %37, %cst_178 {dimension_numbers = #tpu.dot_dimension_numbers<[1], [0], [0], [1], [0, 0, 1, 1], [], []>} : vector<8x128xbf16>, vector<128x384xbf16>, vector<8x384xf32> -> vector<8x384xf32>
      %456 = vector.broadcast %40 : vector<1x384xf32> to vector<8x384xf32>
      %457 = arith.addf %455, %456 : vector<8x384xf32>
      %458 = vector.extract_strided_slice %449 {offsets = [0, 0], sizes = [8, 128], strides = [1, 1]} : vector<8x384xf32> to vector<8x128xf32>
      %459 = vector.extract_strided_slice %457 {offsets = [0, 0], sizes = [8, 128], strides = [1, 1]} : vector<8x384xf32> to vector<8x128xf32>
      %460 = arith.addf %458, %459 : vector<8x128xf32>
      %461 = arith.negf %460 : vector<8x128xf32>
      %462 = math.exp %461 : vector<8x128xf32>
      %cst_179 = arith.constant 1.000000e+00 : f32
      %463 = vector.broadcast %cst_179 : f32 to vector<8x128xf32>
      %464 = arith.addf %463, %462 : vector<8x128xf32>
      %465 = arith.divf %463, %464 : vector<8x128xf32>
      %466 = vector.extract_strided_slice %449 {offsets = [0, 128], sizes = [8, 128], strides = [1, 1]} : vector<8x384xf32> to vector<8x128xf32>
      %467 = vector.extract_strided_slice %457 {offsets = [0, 128], sizes = [8, 128], strides = [1, 1]} : vector<8x384xf32> to vector<8x128xf32>
      %468 = arith.addf %466, %467 : vector<8x128xf32>
      %469 = arith.negf %468 : vector<8x128xf32>
      %470 = math.exp %469 : vector<8x128xf32>
      %cst_180 = arith.constant 1.000000e+00 : f32
      %471 = vector.broadcast %cst_180 : f32 to vector<8x128xf32>
      %472 = arith.addf %471, %470 : vector<8x128xf32>
      %473 = arith.divf %471, %472 : vector<8x128xf32>
      %474 = vector.extract_strided_slice %449 {offsets = [0, 256], sizes = [8, 128], strides = [1, 1]} : vector<8x384xf32> to vector<8x128xf32>
      %475 = vector.extract_strided_slice %457 {offsets = [0, 256], sizes = [8, 128], strides = [1, 1]} : vector<8x384xf32> to vector<8x128xf32>
      %476 = arith.mulf %465, %475 : vector<8x128xf32>
      %477 = arith.addf %474, %476 : vector<8x128xf32>
      %478 = math.tanh %477 : vector<8x128xf32>
      %cst_181 = arith.constant 1.000000e+00 : f32
      %479 = vector.broadcast %cst_181 : f32 to vector<8x128xf32>
      %480 = arith.subf %479, %473 : vector<8x128xf32>
      %481 = arith.mulf %480, %478 : vector<8x128xf32>
      %482 = arith.mulf %473, %453 : vector<8x128xf32>
      %483 = arith.addf %481, %482 : vector<8x128xf32>
      %c0_182 = arith.constant 0 : index
      %c0_183 = arith.constant 0 : index
      %484 = vector.load %arg16[%c0_182, %c0_183] : memref<8x128xf32, #tpu.memory_space<vmem>>, vector<8x128xf32>
      %485 = arith.truncf %484 : vector<8x128xf32> to vector<8x128xbf16>
      %cst_184 = arith.constant dense<0.000000e+00> : vector<8x384xf32>
      %486 = tpu.matmul %485, %43, %cst_184 {dimension_numbers = #tpu.dot_dimension_numbers<[1], [0], [0], [1], [0, 0, 1, 1], [], []>} : vector<8x128xbf16>, vector<128x384xbf16>, vector<8x384xf32> -> vector<8x384xf32>
      %487 = vector.broadcast %46 : vector<1x384xf32> to vector<8x384xf32>
      %488 = arith.addf %486, %487 : vector<8x384xf32>
      %489 = vector.extract_strided_slice %452 {offsets = [0, 0], sizes = [8, 128], strides = [1, 1]} : vector<8x384xf32> to vector<8x128xf32>
      %490 = vector.extract_strided_slice %488 {offsets = [0, 0], sizes = [8, 128], strides = [1, 1]} : vector<8x384xf32> to vector<8x128xf32>
      %491 = arith.addf %489, %490 : vector<8x128xf32>
      %492 = arith.negf %491 : vector<8x128xf32>
      %493 = math.exp %492 : vector<8x128xf32>
      %cst_185 = arith.constant 1.000000e+00 : f32
      %494 = vector.broadcast %cst_185 : f32 to vector<8x128xf32>
      %495 = arith.addf %494, %493 : vector<8x128xf32>
      %496 = arith.divf %494, %495 : vector<8x128xf32>
      %497 = vector.extract_strided_slice %452 {offsets = [0, 128], sizes = [8, 128], strides = [1, 1]} : vector<8x384xf32> to vector<8x128xf32>
      %498 = vector.extract_strided_slice %488 {offsets = [0, 128], sizes = [8, 128], strides = [1, 1]} : vector<8x384xf32> to vector<8x128xf32>
      %499 = arith.addf %497, %498 : vector<8x128xf32>
      %500 = arith.negf %499 : vector<8x128xf32>
      %501 = math.exp %500 : vector<8x128xf32>
      %cst_186 = arith.constant 1.000000e+00 : f32
      %502 = vector.broadcast %cst_186 : f32 to vector<8x128xf32>
      %503 = arith.addf %502, %501 : vector<8x128xf32>
      %504 = arith.divf %502, %503 : vector<8x128xf32>
      %505 = vector.extract_strided_slice %452 {offsets = [0, 256], sizes = [8, 128], strides = [1, 1]} : vector<8x384xf32> to vector<8x128xf32>
      %506 = vector.extract_strided_slice %488 {offsets = [0, 256], sizes = [8, 128], strides = [1, 1]} : vector<8x384xf32> to vector<8x128xf32>
      %507 = arith.mulf %496, %506 : vector<8x128xf32>
      %508 = arith.addf %505, %507 : vector<8x128xf32>
      %509 = math.tanh %508 : vector<8x128xf32>
      %cst_187 = arith.constant 1.000000e+00 : f32
      %510 = vector.broadcast %cst_187 : f32 to vector<8x128xf32>
      %511 = arith.subf %510, %504 : vector<8x128xf32>
      %512 = arith.mulf %511, %509 : vector<8x128xf32>
      %513 = arith.mulf %504, %484 : vector<8x128xf32>
      %514 = arith.addf %512, %513 : vector<8x128xf32>
      %c0_188 = arith.constant 0 : index
      %c0_189 = arith.constant 0 : index
      %515 = vector.load %arg15[%c0_188, %c0_189] : memref<8x128xf32, #tpu.memory_space<vmem>>, vector<8x128xf32>
      tpu.vector_store %arg15[%c0_188, %c0_189], %483 {strides = array<i32>} : memref<8x128xf32, #tpu.memory_space<vmem>>, vector<8x128xf32>,
      %c0_190 = arith.constant 0 : index
      %c0_191 = arith.constant 0 : index
      %516 = vector.load %arg16[%c0_190, %c0_191] : memref<8x128xf32, #tpu.memory_space<vmem>>, vector<8x128xf32>
      tpu.vector_store %arg16[%c0_190, %c0_191], %514 {strides = array<i32>} : memref<8x128xf32, #tpu.memory_space<vmem>>, vector<8x128xf32>,
      %517 = arith.index_cast %c5_i32 : i32 to index
      %c0_192 = arith.constant 0 : index
      %c0_193 = arith.constant 0 : index
      %518 = vector.load %arg13[%517, %c0_192, %c0_193] : memref<8x8x256xf32, #tpu.memory_space<vmem>>, vector<1x8x128xf32>
      %519 = vector.shape_cast %518 : vector<1x8x128xf32> to vector<8x128xf32>
      %520 = vector.shape_cast %483 : vector<8x128xf32> to vector<1x8x128xf32>
      tpu.vector_store %arg13[%517, %c0_192, %c0_193], %520 {strides = array<i32>} : memref<8x8x256xf32, #tpu.memory_space<vmem>>, vector<1x8x128xf32>,
      %521 = arith.index_cast %446 : i32 to index
      %c0_194 = arith.constant 0 : index
      %c128_195 = arith.constant 128 : index
      %522 = vector.load %arg13[%521, %c0_194, %c128_195] : memref<8x8x256xf32, #tpu.memory_space<vmem>>, vector<1x8x128xf32>
      %523 = vector.shape_cast %522 : vector<1x8x128xf32> to vector<8x128xf32>
      %524 = vector.shape_cast %514 : vector<8x128xf32> to vector<1x8x128xf32>
      tpu.vector_store %arg13[%521, %c0_194, %c128_195], %524 {strides = array<i32>} : memref<8x8x256xf32, #tpu.memory_space<vmem>>, vector<1x8x128xf32>,
      %c6_i32 = arith.constant 6 : i32
      %c7_i32_196 = arith.constant 7 : i32
      %525 = arith.subi %c7_i32_196, %c6_i32 : i32
      %526 = arith.index_cast %c6_i32 : i32 to index
      %c0_197 = arith.constant 0 : index
      %c0_198 = arith.constant 0 : index
      %527 = vector.load %arg14[%526, %c0_197, %c0_198] : memref<8x8x768xf32, #tpu.memory_space<vmem>>, vector<1x8x384xf32>
      %528 = vector.shape_cast %527 : vector<1x8x384xf32> to vector<8x384xf32>
      %529 = arith.index_cast %525 : i32 to index
      %c0_199 = arith.constant 0 : index
      %c384_200 = arith.constant 384 : index
      %530 = vector.load %arg14[%529, %c0_199, %c384_200] : memref<8x8x768xf32, #tpu.memory_space<vmem>>, vector<1x8x384xf32>
      %531 = vector.shape_cast %530 : vector<1x8x384xf32> to vector<8x384xf32>
      %c0_201 = arith.constant 0 : index
      %c0_202 = arith.constant 0 : index
      %532 = vector.load %arg15[%c0_201, %c0_202] : memref<8x128xf32, #tpu.memory_space<vmem>>, vector<8x128xf32>
      %533 = arith.truncf %532 : vector<8x128xf32> to vector<8x128xbf16>
      %cst_203 = arith.constant dense<0.000000e+00> : vector<8x384xf32>
      %534 = tpu.matmul %533, %37, %cst_203 {dimension_numbers = #tpu.dot_dimension_numbers<[1], [0], [0], [1], [0, 0, 1, 1], [], []>} : vector<8x128xbf16>, vector<128x384xbf16>, vector<8x384xf32> -> vector<8x384xf32>
      %535 = vector.broadcast %40 : vector<1x384xf32> to vector<8x384xf32>
      %536 = arith.addf %534, %535 : vector<8x384xf32>
      %537 = vector.extract_strided_slice %528 {offsets = [0, 0], sizes = [8, 128], strides = [1, 1]} : vector<8x384xf32> to vector<8x128xf32>
      %538 = vector.extract_strided_slice %536 {offsets = [0, 0], sizes = [8, 128], strides = [1, 1]} : vector<8x384xf32> to vector<8x128xf32>
      %539 = arith.addf %537, %538 : vector<8x128xf32>
      %540 = arith.negf %539 : vector<8x128xf32>
      %541 = math.exp %540 : vector<8x128xf32>
      %cst_204 = arith.constant 1.000000e+00 : f32
      %542 = vector.broadcast %cst_204 : f32 to vector<8x128xf32>
      %543 = arith.addf %542, %541 : vector<8x128xf32>
      %544 = arith.divf %542, %543 : vector<8x128xf32>
      %545 = vector.extract_strided_slice %528 {offsets = [0, 128], sizes = [8, 128], strides = [1, 1]} : vector<8x384xf32> to vector<8x128xf32>
      %546 = vector.extract_strided_slice %536 {offsets = [0, 128], sizes = [8, 128], strides = [1, 1]} : vector<8x384xf32> to vector<8x128xf32>
      %547 = arith.addf %545, %546 : vector<8x128xf32>
      %548 = arith.negf %547 : vector<8x128xf32>
      %549 = math.exp %548 : vector<8x128xf32>
      %cst_205 = arith.constant 1.000000e+00 : f32
      %550 = vector.broadcast %cst_205 : f32 to vector<8x128xf32>
      %551 = arith.addf %550, %549 : vector<8x128xf32>
      %552 = arith.divf %550, %551 : vector<8x128xf32>
      %553 = vector.extract_strided_slice %528 {offsets = [0, 256], sizes = [8, 128], strides = [1, 1]} : vector<8x384xf32> to vector<8x128xf32>
      %554 = vector.extract_strided_slice %536 {offsets = [0, 256], sizes = [8, 128], strides = [1, 1]} : vector<8x384xf32> to vector<8x128xf32>
      %555 = arith.mulf %544, %554 : vector<8x128xf32>
      %556 = arith.addf %553, %555 : vector<8x128xf32>
      %557 = math.tanh %556 : vector<8x128xf32>
      %cst_206 = arith.constant 1.000000e+00 : f32
      %558 = vector.broadcast %cst_206 : f32 to vector<8x128xf32>
      %559 = arith.subf %558, %552 : vector<8x128xf32>
      %560 = arith.mulf %559, %557 : vector<8x128xf32>
      %561 = arith.mulf %552, %532 : vector<8x128xf32>
      %562 = arith.addf %560, %561 : vector<8x128xf32>
      %c0_207 = arith.constant 0 : index
      %c0_208 = arith.constant 0 : index
      %563 = vector.load %arg16[%c0_207, %c0_208] : memref<8x128xf32, #tpu.memory_space<vmem>>, vector<8x128xf32>
      %564 = arith.truncf %563 : vector<8x128xf32> to vector<8x128xbf16>
      %cst_209 = arith.constant dense<0.000000e+00> : vector<8x384xf32>
      %565 = tpu.matmul %564, %43, %cst_209 {dimension_numbers = #tpu.dot_dimension_numbers<[1], [0], [0], [1], [0, 0, 1, 1], [], []>} : vector<8x128xbf16>, vector<128x384xbf16>, vector<8x384xf32> -> vector<8x384xf32>
      %566 = vector.broadcast %46 : vector<1x384xf32> to vector<8x384xf32>
      %567 = arith.addf %565, %566 : vector<8x384xf32>
      %568 = vector.extract_strided_slice %531 {offsets = [0, 0], sizes = [8, 128], strides = [1, 1]} : vector<8x384xf32> to vector<8x128xf32>
      %569 = vector.extract_strided_slice %567 {offsets = [0, 0], sizes = [8, 128], strides = [1, 1]} : vector<8x384xf32> to vector<8x128xf32>
      %570 = arith.addf %568, %569 : vector<8x128xf32>
      %571 = arith.negf %570 : vector<8x128xf32>
      %572 = math.exp %571 : vector<8x128xf32>
      %cst_210 = arith.constant 1.000000e+00 : f32
      %573 = vector.broadcast %cst_210 : f32 to vector<8x128xf32>
      %574 = arith.addf %573, %572 : vector<8x128xf32>
      %575 = arith.divf %573, %574 : vector<8x128xf32>
      %576 = vector.extract_strided_slice %531 {offsets = [0, 128], sizes = [8, 128], strides = [1, 1]} : vector<8x384xf32> to vector<8x128xf32>
      %577 = vector.extract_strided_slice %567 {offsets = [0, 128], sizes = [8, 128], strides = [1, 1]} : vector<8x384xf32> to vector<8x128xf32>
      %578 = arith.addf %576, %577 : vector<8x128xf32>
      %579 = arith.negf %578 : vector<8x128xf32>
      %580 = math.exp %579 : vector<8x128xf32>
      %cst_211 = arith.constant 1.000000e+00 : f32
      %581 = vector.broadcast %cst_211 : f32 to vector<8x128xf32>
      %582 = arith.addf %581, %580 : vector<8x128xf32>
      %583 = arith.divf %581, %582 : vector<8x128xf32>
      %584 = vector.extract_strided_slice %531 {offsets = [0, 256], sizes = [8, 128], strides = [1, 1]} : vector<8x384xf32> to vector<8x128xf32>
      %585 = vector.extract_strided_slice %567 {offsets = [0, 256], sizes = [8, 128], strides = [1, 1]} : vector<8x384xf32> to vector<8x128xf32>
      %586 = arith.mulf %575, %585 : vector<8x128xf32>
      %587 = arith.addf %584, %586 : vector<8x128xf32>
      %588 = math.tanh %587 : vector<8x128xf32>
      %cst_212 = arith.constant 1.000000e+00 : f32
      %589 = vector.broadcast %cst_212 : f32 to vector<8x128xf32>
      %590 = arith.subf %589, %583 : vector<8x128xf32>
      %591 = arith.mulf %590, %588 : vector<8x128xf32>
      %592 = arith.mulf %583, %563 : vector<8x128xf32>
      %593 = arith.addf %591, %592 : vector<8x128xf32>
      %c0_213 = arith.constant 0 : index
      %c0_214 = arith.constant 0 : index
      %594 = vector.load %arg15[%c0_213, %c0_214] : memref<8x128xf32, #tpu.memory_space<vmem>>, vector<8x128xf32>
      tpu.vector_store %arg15[%c0_213, %c0_214], %562 {strides = array<i32>} : memref<8x128xf32, #tpu.memory_space<vmem>>, vector<8x128xf32>,
      %c0_215 = arith.constant 0 : index
      %c0_216 = arith.constant 0 : index
      %595 = vector.load %arg16[%c0_215, %c0_216] : memref<8x128xf32, #tpu.memory_space<vmem>>, vector<8x128xf32>
      tpu.vector_store %arg16[%c0_215, %c0_216], %593 {strides = array<i32>} : memref<8x128xf32, #tpu.memory_space<vmem>>, vector<8x128xf32>,
      %596 = arith.index_cast %c6_i32 : i32 to index
      %c0_217 = arith.constant 0 : index
      %c0_218 = arith.constant 0 : index
      %597 = vector.load %arg13[%596, %c0_217, %c0_218] : memref<8x8x256xf32, #tpu.memory_space<vmem>>, vector<1x8x128xf32>
      %598 = vector.shape_cast %597 : vector<1x8x128xf32> to vector<8x128xf32>
      %599 = vector.shape_cast %562 : vector<8x128xf32> to vector<1x8x128xf32>
      tpu.vector_store %arg13[%596, %c0_217, %c0_218], %599 {strides = array<i32>} : memref<8x8x256xf32, #tpu.memory_space<vmem>>, vector<1x8x128xf32>,
      %600 = arith.index_cast %525 : i32 to index
      %c0_219 = arith.constant 0 : index
      %c128_220 = arith.constant 128 : index
      %601 = vector.load %arg13[%600, %c0_219, %c128_220] : memref<8x8x256xf32, #tpu.memory_space<vmem>>, vector<1x8x128xf32>
      %602 = vector.shape_cast %601 : vector<1x8x128xf32> to vector<8x128xf32>
      %603 = vector.shape_cast %593 : vector<8x128xf32> to vector<1x8x128xf32>
      tpu.vector_store %arg13[%600, %c0_219, %c128_220], %603 {strides = array<i32>} : memref<8x8x256xf32, #tpu.memory_space<vmem>>, vector<1x8x128xf32>,
      %c7_i32_221 = arith.constant 7 : i32
      %c7_i32_222 = arith.constant 7 : i32
      %604 = arith.subi %c7_i32_222, %c7_i32_221 : i32
      %605 = arith.index_cast %c7_i32_221 : i32 to index
      %c0_223 = arith.constant 0 : index
      %c0_224 = arith.constant 0 : index
      %606 = vector.load %arg14[%605, %c0_223, %c0_224] : memref<8x8x768xf32, #tpu.memory_space<vmem>>, vector<1x8x384xf32>
      %607 = vector.shape_cast %606 : vector<1x8x384xf32> to vector<8x384xf32>
      %608 = arith.index_cast %604 : i32 to index
      %c0_225 = arith.constant 0 : index
      %c384_226 = arith.constant 384 : index
      %609 = vector.load %arg14[%608, %c0_225, %c384_226] : memref<8x8x768xf32, #tpu.memory_space<vmem>>, vector<1x8x384xf32>
      %610 = vector.shape_cast %609 : vector<1x8x384xf32> to vector<8x384xf32>
      %c0_227 = arith.constant 0 : index
      %c0_228 = arith.constant 0 : index
      %611 = vector.load %arg15[%c0_227, %c0_228] : memref<8x128xf32, #tpu.memory_space<vmem>>, vector<8x128xf32>
      %612 = arith.truncf %611 : vector<8x128xf32> to vector<8x128xbf16>
      %cst_229 = arith.constant dense<0.000000e+00> : vector<8x384xf32>
      %613 = tpu.matmul %612, %37, %cst_229 {dimension_numbers = #tpu.dot_dimension_numbers<[1], [0], [0], [1], [0, 0, 1, 1], [], []>} : vector<8x128xbf16>, vector<128x384xbf16>, vector<8x384xf32> -> vector<8x384xf32>
      %614 = vector.broadcast %40 : vector<1x384xf32> to vector<8x384xf32>
      %615 = arith.addf %613, %614 : vector<8x384xf32>
      %616 = vector.extract_strided_slice %607 {offsets = [0, 0], sizes = [8, 128], strides = [1, 1]} : vector<8x384xf32> to vector<8x128xf32>
      %617 = vector.extract_strided_slice %615 {offsets = [0, 0], sizes = [8, 128], strides = [1, 1]} : vector<8x384xf32> to vector<8x128xf32>
      %618 = arith.addf %616, %617 : vector<8x128xf32>
      %619 = arith.negf %618 : vector<8x128xf32>
      %620 = math.exp %619 : vector<8x128xf32>
      %cst_230 = arith.constant 1.000000e+00 : f32
      %621 = vector.broadcast %cst_230 : f32 to vector<8x128xf32>
      %622 = arith.addf %621, %620 : vector<8x128xf32>
      %623 = arith.divf %621, %622 : vector<8x128xf32>
      %624 = vector.extract_strided_slice %607 {offsets = [0, 128], sizes = [8, 128], strides = [1, 1]} : vector<8x384xf32> to vector<8x128xf32>
      %625 = vector.extract_strided_slice %615 {offsets = [0, 128], sizes = [8, 128], strides = [1, 1]} : vector<8x384xf32> to vector<8x128xf32>
      %626 = arith.addf %624, %625 : vector<8x128xf32>
      %627 = arith.negf %626 : vector<8x128xf32>
      %628 = math.exp %627 : vector<8x128xf32>
      %cst_231 = arith.constant 1.000000e+00 : f32
      %629 = vector.broadcast %cst_231 : f32 to vector<8x128xf32>
      %630 = arith.addf %629, %628 : vector<8x128xf32>
      %631 = arith.divf %629, %630 : vector<8x128xf32>
      %632 = vector.extract_strided_slice %607 {offsets = [0, 256], sizes = [8, 128], strides = [1, 1]} : vector<8x384xf32> to vector<8x128xf32>
      %633 = vector.extract_strided_slice %615 {offsets = [0, 256], sizes = [8, 128], strides = [1, 1]} : vector<8x384xf32> to vector<8x128xf32>
      %634 = arith.mulf %623, %633 : vector<8x128xf32>
      %635 = arith.addf %632, %634 : vector<8x128xf32>
      %636 = math.tanh %635 : vector<8x128xf32>
      %cst_232 = arith.constant 1.000000e+00 : f32
      %637 = vector.broadcast %cst_232 : f32 to vector<8x128xf32>
      %638 = arith.subf %637, %631 : vector<8x128xf32>
      %639 = arith.mulf %638, %636 : vector<8x128xf32>
      %640 = arith.mulf %631, %611 : vector<8x128xf32>
      %641 = arith.addf %639, %640 : vector<8x128xf32>
      %c0_233 = arith.constant 0 : index
      %c0_234 = arith.constant 0 : index
      %642 = vector.load %arg16[%c0_233, %c0_234] : memref<8x128xf32, #tpu.memory_space<vmem>>, vector<8x128xf32>
      %643 = arith.truncf %642 : vector<8x128xf32> to vector<8x128xbf16>
      %cst_235 = arith.constant dense<0.000000e+00> : vector<8x384xf32>
      %644 = tpu.matmul %643, %43, %cst_235 {dimension_numbers = #tpu.dot_dimension_numbers<[1], [0], [0], [1], [0, 0, 1, 1], [], []>} : vector<8x128xbf16>, vector<128x384xbf16>, vector<8x384xf32> -> vector<8x384xf32>
      %645 = vector.broadcast %46 : vector<1x384xf32> to vector<8x384xf32>
      %646 = arith.addf %644, %645 : vector<8x384xf32>
      %647 = vector.extract_strided_slice %610 {offsets = [0, 0], sizes = [8, 128], strides = [1, 1]} : vector<8x384xf32> to vector<8x128xf32>
      %648 = vector.extract_strided_slice %646 {offsets = [0, 0], sizes = [8, 128], strides = [1, 1]} : vector<8x384xf32> to vector<8x128xf32>
      %649 = arith.addf %647, %648 : vector<8x128xf32>
      %650 = arith.negf %649 : vector<8x128xf32>
      %651 = math.exp %650 : vector<8x128xf32>
      %cst_236 = arith.constant 1.000000e+00 : f32
      %652 = vector.broadcast %cst_236 : f32 to vector<8x128xf32>
      %653 = arith.addf %652, %651 : vector<8x128xf32>
      %654 = arith.divf %652, %653 : vector<8x128xf32>
      %655 = vector.extract_strided_slice %610 {offsets = [0, 128], sizes = [8, 128], strides = [1, 1]} : vector<8x384xf32> to vector<8x128xf32>
      %656 = vector.extract_strided_slice %646 {offsets = [0, 128], sizes = [8, 128], strides = [1, 1]} : vector<8x384xf32> to vector<8x128xf32>
      %657 = arith.addf %655, %656 : vector<8x128xf32>
      %658 = arith.negf %657 : vector<8x128xf32>
      %659 = math.exp %658 : vector<8x128xf32>
      %cst_237 = arith.constant 1.000000e+00 : f32
      %660 = vector.broadcast %cst_237 : f32 to vector<8x128xf32>
      %661 = arith.addf %660, %659 : vector<8x128xf32>
      %662 = arith.divf %660, %661 : vector<8x128xf32>
      %663 = vector.extract_strided_slice %610 {offsets = [0, 256], sizes = [8, 128], strides = [1, 1]} : vector<8x384xf32> to vector<8x128xf32>
      %664 = vector.extract_strided_slice %646 {offsets = [0, 256], sizes = [8, 128], strides = [1, 1]} : vector<8x384xf32> to vector<8x128xf32>
      %665 = arith.mulf %654, %664 : vector<8x128xf32>
      %666 = arith.addf %663, %665 : vector<8x128xf32>
      %667 = math.tanh %666 : vector<8x128xf32>
      %cst_238 = arith.constant 1.000000e+00 : f32
      %668 = vector.broadcast %cst_238 : f32 to vector<8x128xf32>
      %669 = arith.subf %668, %662 : vector<8x128xf32>
      %670 = arith.mulf %669, %667 : vector<8x128xf32>
      %671 = arith.mulf %662, %642 : vector<8x128xf32>
      %672 = arith.addf %670, %671 : vector<8x128xf32>
      %c0_239 = arith.constant 0 : index
      %c0_240 = arith.constant 0 : index
      %673 = vector.load %arg15[%c0_239, %c0_240] : memref<8x128xf32, #tpu.memory_space<vmem>>, vector<8x128xf32>
      tpu.vector_store %arg15[%c0_239, %c0_240], %641 {strides = array<i32>} : memref<8x128xf32, #tpu.memory_space<vmem>>, vector<8x128xf32>,
      %c0_241 = arith.constant 0 : index
      %c0_242 = arith.constant 0 : index
      %674 = vector.load %arg16[%c0_241, %c0_242] : memref<8x128xf32, #tpu.memory_space<vmem>>, vector<8x128xf32>
      tpu.vector_store %arg16[%c0_241, %c0_242], %672 {strides = array<i32>} : memref<8x128xf32, #tpu.memory_space<vmem>>, vector<8x128xf32>,
      %675 = arith.index_cast %c7_i32_221 : i32 to index
      %c0_243 = arith.constant 0 : index
      %c0_244 = arith.constant 0 : index
      %676 = vector.load %arg13[%675, %c0_243, %c0_244] : memref<8x8x256xf32, #tpu.memory_space<vmem>>, vector<1x8x128xf32>
      %677 = vector.shape_cast %676 : vector<1x8x128xf32> to vector<8x128xf32>
      %678 = vector.shape_cast %641 : vector<8x128xf32> to vector<1x8x128xf32>
      tpu.vector_store %arg13[%675, %c0_243, %c0_244], %678 {strides = array<i32>} : memref<8x8x256xf32, #tpu.memory_space<vmem>>, vector<1x8x128xf32>,
      %679 = arith.index_cast %604 : i32 to index
      %c0_245 = arith.constant 0 : index
      %c128_246 = arith.constant 128 : index
      %680 = vector.load %arg13[%679, %c0_245, %c128_246] : memref<8x8x256xf32, #tpu.memory_space<vmem>>, vector<1x8x128xf32>
      %681 = vector.shape_cast %680 : vector<1x8x128xf32> to vector<8x128xf32>
      %682 = vector.shape_cast %672 : vector<8x128xf32> to vector<1x8x128xf32>
      tpu.vector_store %arg13[%679, %c0_245, %c128_246], %682 {strides = array<i32>} : memref<8x8x256xf32, #tpu.memory_space<vmem>>, vector<1x8x128xf32>,
      %c8_i32 = arith.constant 8 : i32
    }
    %c4_i32_5 = arith.constant 4 : i32
    %c0_6 = arith.constant 0 : index
    %c0_7 = arith.constant 0 : index
    %c0_8 = arith.constant 0 : index
    %3 = vector.load %arg13[%c0_6, %c0_7, %c0_8] : memref<8x8x256xf32, #tpu.memory_space<vmem>>, vector<8x8x256xf32>
    %4 = vector.shape_cast %3 : vector<8x8x256xf32> to vector<64x256xf32>
    %5 = arith.truncf %4 : vector<64x256xf32> to vector<64x256xbf16>
    %c0_9 = arith.constant 0 : index
    %c0_10 = arith.constant 0 : index
    %6 = vector.load %arg8[%c0_9, %c0_10] : memref<256x256xbf16, #tpu.memory_space<vmem>>, vector<256x256xbf16>
    %cst = arith.constant dense<0.000000e+00> : vector<64x256xf32>
    %7 = tpu.matmul %5, %6, %cst {dimension_numbers = #tpu.dot_dimension_numbers<[1], [0], [0], [1], [0, 0, 1, 1], [], []>} : vector<64x256xbf16>, vector<256x256xbf16>, vector<64x256xf32> -> vector<64x256xf32>
    %c0_11 = arith.constant 0 : index
    %c0_12 = arith.constant 0 : index
    %8 = vector.load %arg9[%c0_11, %c0_12] : memref<1x256xf32, #tpu.memory_space<vmem>>, vector<1x256xf32>
    %9 = vector.broadcast %8 : vector<1x256xf32> to vector<64x256xf32>
    %10 = arith.addf %7, %9 : vector<64x256xf32>
    %11 = math.tanh %10 : vector<64x256xf32>
    %12 = arith.mulf %11, %4 : vector<64x256xf32>
    %13 = arith.truncf %12 : vector<64x256xf32> to vector<64x256xbf16>
    %c0_13 = arith.constant 0 : index
    %c0_14 = arith.constant 0 : index
    %14 = vector.load %arg10[%c0_13, %c0_14] : memref<256x128xbf16, #tpu.memory_space<vmem>>, vector<256x128xbf16>
    %cst_15 = arith.constant dense<0.000000e+00> : vector<64x128xf32>
    %15 = tpu.matmul %13, %14, %cst_15 {dimension_numbers = #tpu.dot_dimension_numbers<[1], [0], [0], [1], [0, 0, 1, 1], [], []>} : vector<64x256xbf16>, vector<256x128xbf16>, vector<64x128xf32> -> vector<64x128xf32>
    %c0_16 = arith.constant 0 : index
    %c0_17 = arith.constant 0 : index
    %16 = vector.load %arg11[%c0_16, %c0_17] : memref<1x128xf32, #tpu.memory_space<vmem>>, vector<1x128xf32>
    %17 = vector.broadcast %16 : vector<1x128xf32> to vector<64x128xf32>
    %18 = arith.addf %15, %17 : vector<64x128xf32>
    %19 = vector.shape_cast %18 : vector<64x128xf32> to vector<8x8x128xf32>
    %c0_18 = arith.constant 0 : index
    %c0_19 = arith.constant 0 : index
    %c0_20 = arith.constant 0 : index
    %20 = vector.load %arg12[%c0_18, %c0_19, %c0_20] : memref<8x8x128xf32, #tpu.memory_space<vmem>>, vector<8x8x128xf32>
    tpu.vector_store %arg12[%c0_18, %c0_19, %c0_20], %19 {strides = array<i32>} : memref<8x8x128xf32, #tpu.memory_space<vmem>>, vector<8x8x128xf32>,
    return
  }
  func.func @transform_0(%arg0: i32) -> (i32, i32, i32) {
    %c0_i32 = arith.constant 0 : i32
    %c0_i32_0 = arith.constant 0 : i32
    %c0_i32_1 = arith.constant 0 : i32
    return %c0_i32, %arg0, %c0_i32_0 : i32, i32, i32
  }
  func.func @transform_1(%arg0: i32) -> (i32, i32, i32) {
    %c0_i32 = arith.constant 0 : i32
    %c0_i32_0 = arith.constant 0 : i32
    %c0_i32_1 = arith.constant 0 : i32
    %c0_i32_2 = arith.constant 0 : i32
    return %c0_i32, %c0_i32_0, %c0_i32_1 : i32, i32, i32
  }
  func.func @transform_2(%arg0: i32) -> (i32, i32, i32) {
    %c0_i32 = arith.constant 0 : i32
    %c0_i32_0 = arith.constant 0 : i32
    %c0_i32_1 = arith.constant 0 : i32
    %c0_i32_2 = arith.constant 0 : i32
    return %c0_i32, %c0_i32_0, %c0_i32_1 : i32, i32, i32
  }
  func.func @transform_3(%arg0: i32) -> (i32, i32, i32) {
    %c0_i32 = arith.constant 0 : i32
    %c0_i32_0 = arith.constant 0 : i32
    %c0_i32_1 = arith.constant 0 : i32
    %c0_i32_2 = arith.constant 0 : i32
    return %c0_i32, %c0_i32_0, %c0_i32_1 : i32, i32, i32
  }
  func.func @transform_4(%arg0: i32) -> (i32, i32, i32) {
    %c0_i32 = arith.constant 0 : i32
    %c0_i32_0 = arith.constant 0 : i32
    %c0_i32_1 = arith.constant 0 : i32
    %c0_i32_2 = arith.constant 0 : i32
    return %c0_i32, %c0_i32_0, %c0_i32_1 : i32, i32, i32
  }
  func.func @transform_5(%arg0: i32) -> (i32, i32, i32) {
    %c0_i32 = arith.constant 0 : i32
    %c0_i32_0 = arith.constant 0 : i32
    %c0_i32_1 = arith.constant 0 : i32
    %c0_i32_2 = arith.constant 0 : i32
    return %c0_i32, %c0_i32_0, %c0_i32_1 : i32, i32, i32
  }
  func.func @transform_6(%arg0: i32) -> (i32, i32, i32) {
    %c0_i32 = arith.constant 0 : i32
    %c0_i32_0 = arith.constant 0 : i32
    %c0_i32_1 = arith.constant 0 : i32
    %c0_i32_2 = arith.constant 0 : i32
    return %c0_i32, %c0_i32_0, %c0_i32_1 : i32, i32, i32
  }
  func.func @transform_7(%arg0: i32) -> (i32, i32) {
    %c0_i32 = arith.constant 0 : i32
    %c0_i32_0 = arith.constant 0 : i32
    %c0_i32_1 = arith.constant 0 : i32
    return %c0_i32, %c0_i32_0 : i32, i32
  }
  func.func @transform_8(%arg0: i32) -> (i32, i32) {
    %c0_i32 = arith.constant 0 : i32
    %c0_i32_0 = arith.constant 0 : i32
    %c0_i32_1 = arith.constant 0 : i32
    return %c0_i32, %c0_i32_0 : i32, i32
  }
  func.func @transform_9(%arg0: i32) -> (i32, i32) {
    %c0_i32 = arith.constant 0 : i32
    %c0_i32_0 = arith.constant 0 : i32
    %c0_i32_1 = arith.constant 0 : i32
    return %c0_i32, %c0_i32_0 : i32, i32
  }
  func.func @transform_10(%arg0: i32) -> (i32, i32) {
    %c0_i32 = arith.constant 0 : i32
    %c0_i32_0 = arith.constant 0 : i32
    %c0_i32_1 = arith.constant 0 : i32
    return %c0_i32, %c0_i32_0 : i32, i32
  }
  func.func @transform_11(%arg0: i32) -> (i32, i32, i32) {
    %c0_i32 = arith.constant 0 : i32
    %c0_i32_0 = arith.constant 0 : i32
    %c0_i32_1 = arith.constant 0 : i32
    return %c0_i32, %arg0, %c0_i32_0 : i32, i32, i32
  }
}

</mosaic_0001>

<llo_original>
// kernel: bigru_attention_forward.1
$region0: #{bigru_attention_forward.1}
  #allocation0 [shape = 'u32[]', space=smem, size = 0x4, offset = 0x4, fixed_abs, tag = 'smem constant byte address 0x4 - core index']
  #allocation1 [shape = 'u32[144,128]{1,0:T(1,128)}', space=vmem, size = 0x12000, scoped, tag = 'internal scratch']
  #allocation2 [shape = 'f32[8,8,256]{2,1,0:T(8,128)}', space=vmem, size = 0x10000, scoped, tag = 'scratch operand']
  #allocation3 [shape = 'f32[8,8,768]{2,1,0:T(8,128)}', space=vmem, size = 0x30000, scoped, tag = 'scratch operand']
  #allocation4 [shape = 'f32[8,128]{1,0:T(8,128)}', space=vmem, size = 0x1000, scoped, tag = 'scratch operand']
  #allocation5 [shape = 'f32[8,128]{1,0:T(8,128)}', space=vmem, size = 0x1000, scoped, tag = 'scratch operand']
  %s0 = inlined_call_operand.vmem [shape: f32[8,8,256], index: 0, kind: input, shape index: {}]
  %s1 = inlined_call_operand.hbm [shape: bf16[4,256,768], index: 1, kind: input, shape index: {}]
  %s2 = inlined_call_operand.hbm [shape: f32[4,1,768], index: 2, kind: input, shape index: {}]
  %s3 = inlined_call_operand.hbm [shape: bf16[4,128,384], index: 3, kind: input, shape index: {}]
  %s4 = inlined_call_operand.hbm [shape: f32[4,1,384], index: 4, kind: input, shape index: {}]
  %s5 = inlined_call_operand.hbm [shape: bf16[4,128,384], index: 5, kind: input, shape index: {}]
  %s6 = inlined_call_operand.hbm [shape: f32[4,1,384], index: 6, kind: input, shape index: {}]
  %s7 = inlined_call_operand.hbm [shape: bf16[256,256], index: 7, kind: input, shape index: {}]
  %s8 = inlined_call_operand.hbm [shape: f32[1,256], index: 8, kind: input, shape index: {}]
  %s9 = inlined_call_operand.hbm [shape: bf16[256,128], index: 9, kind: input, shape index: {}]
  %s10 = inlined_call_operand.hbm [shape: f32[1,128], index: 10, kind: input, shape index: {}]
  %s11 = inlined_call_operand.vmem [shape: f32[8,8,128], index: 11, kind: output, shape index: {}]
  %s12 = sld [smem:[#allocation0]]
  $region101: #{bigru_attention_forward.1} parent=0
    _
  %s14 = ssub.s32 1, %s12
  %s15 = scalar_select 0, %s14, %s12
  $region1: #{bigru_attention_forward.1} parent=0
    #allocation6 [shape = 'u8[1572864]{0}', space=vmem, size = 0x180000, scoped, tag = 'input window, operand 1, single buffered']
    #allocation7 [shape = 's32[1]{0}', space=sflag, size = 0x4, scoped, tag = 'scoped memory for bigru_attention_forward.1']
    #allocation8 [shape = 'u8[12288]{0}', space=vmem, size = 0x3000, scoped, tag = 'input window, operand 2, single buffered']
    #allocation9 [shape = 's32[1]{0}', space=sflag, size = 0x4, scoped, tag = 'scoped memory for bigru_attention_forward.1']
    #allocation10 [shape = 'u8[393216]{0}', space=vmem, size = 0x60000, scoped, tag = 'input window, operand 3, single buffered']
    #allocation11 [shape = 'u8[6144]{0}', space=vmem, size = 0x1800, scoped, tag = 'input window, operand 4, single buffered']
    #allocation12 [shape = 's32[1]{0}', space=sflag, size = 0x4, scoped, tag = 'scoped memory for bigru_attention_forward.1']
    #allocation13 [shape = 'u8[393216]{0}', space=vmem, size = 0x60000, scoped, tag = 'input window, operand 5, single buffered']
    #allocation14 [shape = 'u8[6144]{0}', space=vmem, size = 0x1800, scoped, tag = 'input window, operand 6, single buffered']
    #allocation15 [shape = 's32[1]{0}', space=sflag, size = 0x4, scoped, tag = 'scoped memory for bigru_attention_forward.1']
    #allocation16 [shape = 'u8[131072]{0}', space=vmem, size = 0x20000, scoped, tag = 'input window, operand 7, single buffered']
    #allocation17 [shape = 'u8[1024]{0}', space=vmem, size = 0x400, scoped, tag = 'input window, operand 8, single buffered']
    #allocation18 [shape = 's32[1]{0}', space=sflag, size = 0x4, scoped, tag = 'scoped memory for bigru_attention_forward.1']
    #allocation19 [shape = 'u8[65536]{0}', space=vmem, size = 0x10000, scoped, tag = 'input window, operand 9, single buffered']
    #allocation20 [shape = 'u8[512]{0}', space=vmem, size = 0x400, scoped, tag = 'input window, operand 10, single buffered']
    #allocation21 [shape = 's32[1]{0}', space=sflag, size = 0x4, scoped, tag = 'scoped memory for bigru_attention_forward.1']
    %16 = vsyncpa [#allocation7], 0
    %17 = vsyncpa [#allocation9], 0
    %18 = vsyncpa [#allocation12], 0
    %19 = vsyncpa [#allocation15], 0
    %20 = vsyncpa [#allocation18], 0
    %21 = vsyncpa [#allocation21], 0
    // Predicated region
    $region2: #{bigru_attention_forward.1} parent=1 // pred_check
      _
    $region3: #{bigru_attention_forward.1} parent=1 // pred_check_branch
      %23 = sbr.rel (0) target = $region5
    $region4: #{bigru_attention_forward.1} parent=1 // pred_region
      _
    $region5: #{bigru_attention_forward.1} parent=1 // pred_fallthru
      _
    // Predicated region
    $region6: #{bigru_attention_forward.1} parent=1 // pred_check
      _
    $region7: #{bigru_attention_forward.1} parent=1 // pred_check_branch
      %25 = sbr.rel (0) target = $region9
    $region8: #{bigru_attention_forward.1} parent=1 // pred_region
      %s27 = ssub.s32 49152, 49152
      %28 = vsyncadd [#allocation7], %s27
      %s29 = sshll.u32 [#allocation6], 4
      %s30 = int_to_ptr.vmem [resolvable:$true] %s29
      %35 = dma.hbm_to_vmem [thread:$0]  %s1, 49152, %s30, [#allocation7], 384, 384, 24
    $region9: #{bigru_attention_forward.1} parent=1 // pred_fallthru
      _
    // Predicated region
    $region10: #{bigru_attention_forward.1} parent=1 // pred_check
      _
    $region11: #{bigru_attention_forward.1} parent=1 // pred_check_branch
      %37 = sbr.rel (0) target = $region13
    $region12: #{bigru_attention_forward.1} parent=1 // pred_region
      %s39 = ssub.s32 384, 384
      %40 = vsyncadd [#allocation9], %s39
      %s41 = sshll.u32 [#allocation8], 4
      %s42 = int_to_ptr.vmem [resolvable:$true] %s41
      %47 = dma.hbm_to_vmem [thread:$0]  %s2, 384, %s42, [#allocation9], 96, 96, 6
    $region13: #{bigru_attention_forward.1} parent=1 // pred_fallthru
      _
    // Predicated region
    $region14: #{bigru_attention_forward.1} parent=1 // pred_check
      _
    $region15: #{bigru_attention_forward.1} parent=1 // pred_check_branch
      %49 = sbr.rel (0) target = $region17
    $region16: #{bigru_attention_forward.1} parent=1 // pred_region
      %s51 = ssub.s32 12288, 12288
      %52 = vsyncadd [#allocation9], %s51
      %s53 = sshll.u32 [#allocation10], 4
      %s54 = int_to_ptr.vmem [resolvable:$true] %s53
      %59 = dma.hbm_to_vmem [thread:$0]  %s3, 12288, %s54, [#allocation9], 192, 192, 12
    $region17: #{bigru_attention_forward.1} parent=1 // pred_fallthru
      _
    // Predicated region
    $region18: #{bigru_attention_forward.1} parent=1 // pred_check
      _
    $region19: #{bigru_attention_forward.1} parent=1 // pred_check_branch
      %61 = sbr.rel (0) target = $region21
    $region20: #{bigru_attention_forward.1} parent=1 // pred_region
      %s63 = ssub.s32 192, 192
      %64 = vsyncadd [#allocation12], %s63
      %s65 = sshll.u32 [#allocation11], 4
      %s66 = int_to_ptr.vmem [resolvable:$true] %s65
      %71 = dma.hbm_to_vmem [thread:$0]  %s4, 192, %s66, [#allocation12], 48, 48, 3
    $region21: #{bigru_attention_forward.1} parent=1 // pred_fallthru
      _
    // Predicated region
    $region22: #{bigru_attention_forward.1} parent=1 // pred_check
      _
    $region23: #{bigru_attention_forward.1} parent=1 // pred_check_branch
      %73 = sbr.rel (0) target = $region25
    $region24: #{bigru_attention_forward.1} parent=1 // pred_region
      %s75 = ssub.s32 12288, 12288
      %76 = vsyncadd [#allocation12], %s75
      %s77 = sshll.u32 [#allocation13], 4
      %s78 = int_to_ptr.vmem [resolvable:$true] %s77
      %83 = dma.hbm_to_vmem [thread:$0]  %s5, 12288, %s78, [#allocation12], 192, 192, 12
    $region25: #{bigru_attention_forward.1} parent=1 // pred_fallthru
      _
    // Predicated region
    $region26: #{bigru_attention_forward.1} parent=1 // pred_check
      _
    $region27: #{bigru_attention_forward.1} parent=1 // pred_check_branch
      %85 = sbr.rel (0) target = $region29
    $region28: #{bigru_attention_forward.1} parent=1 // pred_region
      %s87 = ssub.s32 192, 192
      %88 = vsyncadd [#allocation15], %s87
      %s89 = sshll.u32 [#allocation14], 4
      %s90 = int_to_ptr.vmem [resolvable:$true] %s89
      %95 = dma.hbm_to_vmem [thread:$0]  %s6, 192, %s90, [#allocation15], 48, 48, 3
    $region29: #{bigru_attention_forward.1} parent=1 // pred_fallthru
      _
    // Predicated region
    $region30: #{bigru_attention_forward.1} parent=1 // pred_check
      _
    $region31: #{bigru_attention_forward.1} parent=1 // pred_check_branch
      %97 = sbr.rel (0) target = $region33
    $region32: #{bigru_attention_forward.1} parent=1 // pred_region
      %s99 = ssub.s32 4096, 4096
      %100 = vsyncadd [#allocation15], %s99
      %s101 = sshll.u32 [#allocation16], 4
      %s102 = int_to_ptr.vmem [resolvable:$true] %s101
      %107 = dma.hbm_to_vmem [thread:$0]  %s7, 4096, %s102, [#allocation15], 128, 128, 8
    $region33: #{bigru_attention_forward.1} parent=1 // pred_fallthru
      _
    // Predicated region
    $region34: #{bigru_attention_forward.1} parent=1 // pred_check
      _
    $region35: #{bigru_attention_forward.1} parent=1 // pred_check_branch
      %109 = sbr.rel (0) target = $region37
    $region36: #{bigru_attention_forward.1} parent=1 // pred_region
      %s111 = ssub.s32 32, 32
      %112 = vsyncadd [#allocation18], %s111
      %s114 = sshll.u32 [#allocation17], 4
      %s115 = int_to_ptr.vmem [resolvable:$true] %s114
      %117 = dma.hbm_to_vmem [thread:$0]  %s8, 32, %s115, [#allocation18]
    $region37: #{bigru_attention_forward.1} parent=1 // pred_fallthru
      _
    // Predicated region
    $region38: #{bigru_attention_forward.1} parent=1 // pred_check
      _
    $region39: #{bigru_attention_forward.1} parent=1 // pred_check_branch
      %119 = sbr.rel (0) target = $region41
    $region40: #{bigru_attention_forward.1} parent=1 // pred_region
      %s121 = ssub.s32 2048, 2048
      %122 = vsyncadd [#allocation18], %s121
      %s123 = sshll.u32 [#allocation19], 4
      %s124 = int_to_ptr.vmem [resolvable:$true] %s123
      %129 = dma.hbm_to_vmem [thread:$0]  %s9, 2048, %s124, [#allocation18], 64, 64, 4
    $region41: #{bigru_attention_forward.1} parent=1 // pred_fallthru
      _
    // Predicated region
    $region42: #{bigru_attention_forward.1} parent=1 // pred_check
      _
    $region43: #{bigru_attention_forward.1} parent=1 // pred_check_branch
      %131 = sbr.rel (0) target = $region45
    $region44: #{bigru_attention_forward.1} parent=1 // pred_region
      %s133 = ssub.s32 16, 16
      %134 = vsyncadd [#allocation21], %s133
      %s136 = sshll.u32 [#allocation20], 4
      %s137 = int_to_ptr.vmem [resolvable:$true] %s136
      %139 = dma.hbm_to_vmem [thread:$0]  %s10, 16, %s137, [#allocation21]
    $region45: #{bigru_attention_forward.1} parent=1 // pred_fallthru
      _
    // Predicated region
    $region46: #{bigru_attention_forward.1} parent=1 // pred_check
      _
    $region47: #{bigru_attention_forward.1} parent=1 // pred_check_branch
      %141 = sbr.rel (0) target = $region49
    $region48: #{bigru_attention_forward.1} parent=1 // pred_region
      %142 = dma.done [#allocation7], 49152
    $region49: #{bigru_attention_forward.1} parent=1 // pred_fallthru
      _
    // Predicated region
    $region50: #{bigru_attention_forward.1} parent=1 // pred_check
      _
    $region51: #{bigru_attention_forward.1} parent=1 // pred_check_branch
      %144 = sbr.rel (0) target = $region53
    $region52: #{bigru_attention_forward.1} parent=1 // pred_region
      %145 = dma.done [#allocation9], 384
    $region53: #{bigru_attention_forward.1} parent=1 // pred_fallthru
      _
    // Predicated region
    $region54: #{bigru_attention_forward.1} parent=1 // pred_check
      _
    $region55: #{bigru_attention_forward.1} parent=1 // pred_check_branch
      %147 = sbr.rel (0) target = $region57
    $region56: #{bigru_attention_forward.1} parent=1 // pred_region
      %148 = dma.done [#allocation9], 12288
    $region57: #{bigru_attention_forward.1} parent=1 // pred_fallthru
      _
    // Predicated region
    $region58: #{bigru_attention_forward.1} parent=1 // pred_check
      _
    $region59: #{bigru_attention_forward.1} parent=1 // pred_check_branch
      %150 = sbr.rel (0) target = $region61
    $region60: #{bigru_attention_forward.1} parent=1 // pred_region
      %151 = dma.done [#allocation12], 192
    $region61: #{bigru_attention_forward.1} parent=1 // pred_fallthru
      _
    // Predicated region
    $region62: #{bigru_attention_forward.1} parent=1 // pred_check
      _
    $region63: #{bigru_attention_forward.1} parent=1 // pred_check_branch
      %153 = sbr.rel (0) target = $region65
    $region64: #{bigru_attention_forward.1} parent=1 // pred_region
      %154 = dma.done [#allocation12], 12288
    $region65: #{bigru_attention_forward.1} parent=1 // pred_fallthru
      _
    // Predicated region
    $region66: #{bigru_attention_forward.1} parent=1 // pred_check
      _
    $region67: #{bigru_attention_forward.1} parent=1 // pred_check_branch
      %156 = sbr.rel (0) target = $region69
    $region68: #{bigru_attention_forward.1} parent=1 // pred_region
      %157 = dma.done [#allocation15], 192
    $region69: #{bigru_attention_forward.1} parent=1 // pred_fallthru
      _
    // Predicated region
    $region70: #{bigru_attention_forward.1} parent=1 // pred_check
      _
    $region71: #{bigru_attention_forward.1} parent=1 // pred_check_branch
      %159 = sbr.rel (0) target = $region73
    $region72: #{bigru_attention_forward.1} parent=1 // pred_region
      %160 = dma.done [#allocation15], 4096
    $region73: #{bigru_attention_forward.1} parent=1 // pred_fallthru
      _
    // Predicated region
    $region74: #{bigru_attention_forward.1} parent=1 // pred_check
      _
    $region75: #{bigru_attention_forward.1} parent=1 // pred_check_branch
      %162 = sbr.rel (0) target = $region77
    $region76: #{bigru_attention_forward.1} parent=1 // pred_region
      %163 = dma.done [#allocation18], 32
    $region77: #{bigru_attention_forward.1} parent=1 // pred_fallthru
      _
    // Predicated region
    $region78: #{bigru_attention_forward.1} parent=1 // pred_check
      _
    $region79: #{bigru_attention_forward.1} parent=1 // pred_check_branch
      %165 = sbr.rel (0) target = $region81
    $region80: #{bigru_attention_forward.1} parent=1 // pred_region
      %166 = dma.done [#allocation18], 2048
    $region81: #{bigru_attention_forward.1} parent=1 // pred_fallthru
      _
    // Predicated region
    $region82: #{bigru_attention_forward.1} parent=1 // pred_check
      _
    $region83: #{bigru_attention_forward.1} parent=1 // pred_check_branch
      %168 = sbr.rel (0) target = $region85
    $region84: #{bigru_attention_forward.1} parent=1 // pred_region
      %169 = dma.done [#allocation21], 16
    $region85: #{bigru_attention_forward.1} parent=1 // pred_fallthru
      _
    %v171 = vld [vmem:[%s0] sm:$0xff]
    %v172 = vld [vmem:[%s0 + $0x8] sm:$0xff]
    %v173 = vld [vmem:[%s0 + $0x10] sm:$0xff]
    %v174 = vld [vmem:[%s0 + $0x18] sm:$0xff]
    %v175 = vld [vmem:[%s0 + $0x20] sm:$0xff]
    %v176 = vld [vmem:[%s0 + $0x28] sm:$0xff]
    %v177 = vld [vmem:[%s0 + $0x30] sm:$0xff]
    %v178 = vld [vmem:[%s0 + $0x38] sm:$0xff]
    %v179 = vld [vmem:[%s0 + $0x40] sm:$0xff]
    %v180 = vld [vmem:[%s0 + $0x48] sm:$0xff]
    %v181 = vld [vmem:[%s0 + $0x50] sm:$0xff]
    %v182 = vld [vmem:[%s0 + $0x58] sm:$0xff]
    %v183 = vld [vmem:[%s0 + $0x60] sm:$0xff]
    %v184 = vld [vmem:[%s0 + $0x68] sm:$0xff]
    %v185 = vld [vmem:[%s0 + $0x70] sm:$0xff]
    %v186 = vld [vmem:[%s0 + $0x78] sm:$0xff]
    %187 = vst [vmem:[#allocation2] sm:$0xff] %v171
    %188 = vst [vmem:[#allocation2 + $0x8] sm:$0xff] %v172
    %189 = vst [vmem:[#allocation2 + $0x10] sm:$0xff] %v173
    %190 = vst [vmem:[#allocation2 + $0x18] sm:$0xff] %v174
    %191 = vst [vmem:[#allocation2 + $0x20] sm:$0xff] %v175
    %192 = vst [vmem:[#allocation2 + $0x28] sm:$0xff] %v176
    %193 = vst [vmem:[#allocation2 + $0x30] sm:$0xff] %v177
    %194 = vst [vmem:[#allocation2 + $0x38] sm:$0xff] %v178
    %195 = vst [vmem:[#allocation2 + $0x40] sm:$0xff] %v179
    %196 = vst [vmem:[#allocation2 + $0x48] sm:$0xff] %v180
    %197 = vst [vmem:[#allocation2 + $0x50] sm:$0xff] %v181
    %198 = vst [vmem:[#allocation2 + $0x58] sm:$0xff] %v182
    %199 = vst [vmem:[#allocation2 + $0x60] sm:$0xff] %v183
    %200 = vst [vmem:[#allocation2 + $0x68] sm:$0xff] %v184
    %201 = vst [vmem:[#allocation2 + $0x70] sm:$0xff] %v185
    %202 = vst [vmem:[#allocation2 + $0x78] sm:$0xff] %v186
    loop: start=0, step=1, limit=4
    $region86: #{bigru_attention_forward.1} parent=1 // loop_pre_header
      _
    $region87: #{bigru_attention_forward.1} parent=1 // loop_header
      %s204 = sphi 0, %s208
      %p205 = scmp.ge.s32.totalorder %s204, 4
    $region88: #{bigru_attention_forward.1} parent=1 // loop_header_branch
      %207 = sbr.rel (%p205) target = $region92
    $region89: #{bigru_attention_forward.1} parent=1 // loop_body
      %s209 = smul.u32 %s204, 192
      %s210 = smul.addr %s209, 4
      %s211 = scalar_lea.vmem [#allocation6], %s210
      %v212 = vld [vmem:[%s211] sm:$0xff]
      %v213 = vld [vmem:[%s211 + $0x8] sm:$0xff]
      %v214 = vld [vmem:[%s211 + $0x10] sm:$0xff]
      %v215 = vld [vmem:[%s211 + $0x18] sm:$0xff]
      %v216 = vld [vmem:[%s211 + $0x20] sm:$0xff]
      %v217 = vld [vmem:[%s211 + $0x28] sm:$0xff]
      %v218 = vld [vmem:[%s211 + $0x30] sm:$0xff]
      %v219 = vld [vmem:[%s211 + $0x38] sm:$0xff]
      %v220 = vld [vmem:[%s211 + $0x40] sm:$0xff]
      %v221 = vld [vmem:[%s211 + $0x48] sm:$0xff]
      %v222 = vld [vmem:[%s211 + $0x50] sm:$0xff]
      %v223 = vld [vmem:[%s211 + $0x58] sm:$0xff]
      %v224 = vld [vmem:[%s211 + $0x60] sm:$0xff]
      %v225 = vld [vmem:[%s211 + $0x68] sm:$0xff]
      %v226 = vld [vmem:[%s211 + $0x70] sm:$0xff]
      %v227 = vld [vmem:[%s211 + $0x78] sm:$0xff]
      %v228 = vld [vmem:[%s211 + $0x80] sm:$0xff]
      %v229 = vld [vmem:[%s211 + $0x88] sm:$0xff]
      %v230 = vld [vmem:[%s211 + $0x90] sm:$0xff]
      %v231 = vld [vmem:[%s211 + $0x98] sm:$0xff]
      %v232 = vld [vmem:[%s211 + $0xa0] sm:$0xff]
      %v233 = vld [vmem:[%s211 + $0xa8] sm:$0xff]
      %v234 = vld [vmem:[%s211 + $0xb0] sm:$0xff]
      %v235 = vld [vmem:[%s211 + $0xb8] sm:$0xff]
      %v236 = vld [vmem:[%s211 + $0xc0] sm:$0xff]
      %v237 = vld [vmem:[%s211 + $0xc8] sm:$0xff]
      %v238 = vld [vmem:[%s211 + $0xd0] sm:$0xff]
      %v239 = vld [vmem:[%s211 + $0xd8] sm:$0xff]
      %v240 = vld [vmem:[%s211 + $0xe0] sm:$0xff]
      %v241 = vld [vmem:[%s211 + $0xe8] sm:$0xff]
      %v242 = vld [vmem:[%s211 + $0xf0] sm:$0xff]
      %v243 = vld [vmem:[%s211 + $0xf8] sm:$0xff]
      %v244 = vld [vmem:[%s211 + $0x100] sm:$0xff]
      %v245 = vld [vmem:[%s211 + $0x108] sm:$0xff]
      %v246 = vld [vmem:[%s211 + $0x110] sm:$0xff]
      %v247 = vld [vmem:[%s211 + $0x118] sm:$0xff]
      %v248 = vld [vmem:[%s211 + $0x120] sm:$0xff]
      %v249 = vld [vmem:[%s211 + $0x128] sm:$0xff]
      %v250 = vld [vmem:[%s211 + $0x130] sm:$0xff]
      %v251 = vld [vmem:[%s211 + $0x138] sm:$0xff]
      %v252 = vld [vmem:[%s211 + $0x140] sm:$0xff]
      %v253 = vld [vmem:[%s211 + $0x148] sm:$0xff]
      %v254 = vld [vmem:[%s211 + $0x150] sm:$0xff]
      %v255 = vld [vmem:[%s211 + $0x158] sm:$0xff]
      %v256 = vld [vmem:[%s211 + $0x160] sm:$0xff]
      %v257 = vld [vmem:[%s211 + $0x168] sm:$0xff]
      %v258 = vld [vmem:[%s211 + $0x170] sm:$0xff]
      %v259 = vld [vmem:[%s211 + $0x178] sm:$0xff]
      %v260 = vld [vmem:[%s211 + $0x180] sm:$0xff]
      %v261 = vld [vmem:[%s211 + $0x188] sm:$0xff]
      %v262 = vld [vmem:[%s211 + $0x190] sm:$0xff]
      %v263 = vld [vmem:[%s211 + $0x198] sm:$0xff]
      %v264 = vld [vmem:[%s211 + $0x1a0] sm:$0xff]
      %v265 = vld [vmem:[%s211 + $0x1a8] sm:$0xff]
      %v266 = vld [vmem:[%s211 + $0x1b0] sm:$0xff]
      %v267 = vld [vmem:[%s211 + $0x1b8] sm:$0xff]
      %v268 = vld [vmem:[%s211 + $0x1c0] sm:$0xff]
      %v269 = vld [vmem:[%s211 + $0x1c8] sm:$0xff]
      %v270 = vld [vmem:[%s211 + $0x1d0] sm:$0xff]
      %v271 = vld [vmem:[%s211 + $0x1d8] sm:$0xff]
      %v272 = vld [vmem:[%s211 + $0x1e0] sm:$0xff]
      %v273 = vld [vmem:[%s211 + $0x1e8] sm:$0xff]
      %v274 = vld [vmem:[%s211 + $0x1f0] sm:$0xff]
      %v275 = vld [vmem:[%s211 + $0x1f8] sm:$0xff]
      %v276 = vld [vmem:[%s211 + $0x200] sm:$0xff]
      %v277 = vld [vmem:[%s211 + $0x208] sm:$0xff]
      %v278 = vld [vmem:[%s211 + $0x210] sm:$0xff]
      %v279 = vld [vmem:[%s211 + $0x218] sm:$0xff]
      %v280 = vld [vmem:[%s211 + $0x220] sm:$0xff]
      %v281 = vld [vmem:[%s211 + $0x228] sm:$0xff]
      %v282 = vld [vmem:[%s211 + $0x230] sm:$0xff]
      %v283 = vld [vmem:[%s211 + $0x238] sm:$0xff]
      %v284 = vld [vmem:[%s211 + $0x240] sm:$0xff]
      %v285 = vld [vmem:[%s211 + $0x248] sm:$0xff]
      %v286 = vld [vmem:[%s211 + $0x250] sm:$0xff]
      %v287 = vld [vmem:[%s211 + $0x258] sm:$0xff]
      %v288 = vld [vmem:[%s211 + $0x260] sm:$0xff]
      %v289 = vld [vmem:[%s211 + $0x268] sm:$0xff]
      %v290 = vld [vmem:[%s211 + $0x270] sm:$0xff]
      %v291 = vld [vmem:[%s211 + $0x278] sm:$0xff]
      %v292 = vld [vmem:[%s211 + $0x280] sm:$0xff]
      %v293 = vld [vmem:[%s211 + $0x288] sm:$0xff]
      %v294 = vld [vmem:[%s211 + $0x290] sm:$0xff]
      %v295 = vld [vmem:[%s211 + $0x298] sm:$0xff]
      %v296 = vld [vmem:[%s211 + $0x2a0] sm:$0xff]
      %v297 = vld [vmem:[%s211 + $0x2a8] sm:$0xff]
      %v298 = vld [vmem:[%s211 + $0x2b0] sm:$0xff]
      %v299 = vld [vmem:[%s211 + $0x2b8] sm:$0xff]
      %v300 = vld [vmem:[%s211 + $0x2c0] sm:$0xff]
      %v301 = vld [vmem:[%s211 + $0x2c8] sm:$0xff]
      %v302 = vld [vmem:[%s211 + $0x2d0] sm:$0xff]
      %v303 = vld [vmem:[%s211 + $0x2d8] sm:$0xff]
      %v304 = vld [vmem:[%s211 + $0x2e0] sm:$0xff]
      %v305 = vld [vmem:[%s211 + $0x2e8] sm:$0xff]
      %v306 = vld [vmem:[%s211 + $0x2f0] sm:$0xff]
      %v307 = vld [vmem:[%s211 + $0x2f8] sm:$0xff]
      %s308 = smul.u32 %s204, 6
      %s309 = scalar_lea.vmem [#allocation8], %s308
      %v310 = vld [vmem:[%s309] sm:$0x3f]
      %v311 = vld [vmem:[#allocation2] sm:$0xff]
      %v312 = vld [vmem:[#allocation2 + $0x8] sm:$0xff]
      %v313 = vld [vmem:[#allocation2 + $0x10] sm:$0xff]
      %v314 = vld [vmem:[#allocation2 + $0x18] sm:$0xff]
      %v315 = vld [vmem:[#allocation2 + $0x20] sm:$0xff]
      %v316 = vld [vmem:[#allocation2 + $0x28] sm:$0xff]
      %v317 = vld [vmem:[#allocation2 + $0x30] sm:$0xff]
      %v318 = vld [vmem:[#allocation2 + $0x38] sm:$0xff]
      %v319 = vld [vmem:[#allocation2 + $0x40] sm:$0xff]
      %v320 = vld [vmem:[#allocation2 + $0x48] sm:$0xff]
      %v321 = vld [vmem:[#allocation2 + $0x50] sm:$0xff]
      %v322 = vld [vmem:[#allocation2 + $0x58] sm:$0xff]
      %v323 = vld [vmem:[#allocation2 + $0x60] sm:$0xff]
      %v324 = vld [vmem:[#allocation2 + $0x68] sm:$0xff]
      %v325 = vld [vmem:[#allocation2 + $0x70] sm:$0xff]
      %v326 = vld [vmem:[#allocation2 + $0x78] sm:$0xff]
      %v327 = vpack.c.bf16 %v313, %v311
      %v328 = vpack.c.bf16 %v314, %v312
      %v329 = vpack.c.bf16 %v317, %v315
      %v330 = vpack.c.bf16 %v318, %v316
      %v331 = vpack.c.bf16 %v321, %v319
      %v332 = vpack.c.bf16 %v322, %v320
      %v333 = vpack.c.bf16 %v325, %v323
      %v334 = vpack.c.bf16 %v326, %v324
      %v336 = vlaneseq
      %v337 = vshrl.u32 %v336, 7
      %v338 = vsub.s32 0, %v337
      %v339 = vrot.slane %v310, %v338
      %v340 = vlaneseq
      %v341 = vshrl.u32 %v340, 7
      %v342 = vsub.s32 1, %v341
      %v343 = vrot.slane %v310, %v342
      %v344 = vlaneseq
      %v345 = vshrl.u32 %v344, 7
      %v346 = vsub.s32 2, %v345
      %v347 = vrot.slane %v310, %v346
      %v348 = vlaneseq
      %v349 = vshrl.u32 %v348, 7
      %v350 = vsub.s32 3, %v349
      %v351 = vrot.slane %v310, %v350
      %v352 = vlaneseq
      %v353 = vshrl.u32 %v352, 7
      %v354 = vsub.s32 4, %v353
      %v355 = vrot.slane %v310, %v354
      %v356 = vlaneseq
      %v357 = vshrl.u32 %v356, 7
      %v358 = vsub.s32 5, %v357
      %v359 = vrot.slane %v310, %v358
      %v462 = vunpack.c.l.b16 %v212
      %v463 = vunpack.c.h.b16 %v212
      %v464 = vunpack.c.l.b16 %v213
      %v465 = vunpack.c.h.b16 %v213
      %v466 = vunpack.c.l.b16 %v214
      %v467 = vunpack.c.h.b16 %v214
      %v468 = vunpack.c.l.b16 %v215
      %v469 = vunpack.c.h.b16 %v215
      %v470 = vunpack.c.l.b16 %v216
      %v471 = vunpack.c.h.b16 %v216
      %v472 = vunpack.c.l.b16 %v217
      %v473 = vunpack.c.h.b16 %v217
      %v474 = vunpack.c.l.b16 %v218
      %v475 = vunpack.c.h.b16 %v218
      %v476 = vunpack.c.l.b16 %v219
      %v477 = vunpack.c.h.b16 %v219
      %v478 = vunpack.c.l.b16 %v220
      %v479 = vunpack.c.h.b16 %v220
      %v480 = vunpack.c.l.b16 %v221
      %v481 = vunpack.c.h.b16 %v221
      %v482 = vunpack.c.l.b16 %v222
      %v483 = vunpack.c.h.b16 %v222
      %v484 = vunpack.c.l.b16 %v223
      %v485 = vunpack.c.h.b16 %v223
      %v486 = vunpack.c.l.b16 %v224
      %v487 = vunpack.c.h.b16 %v224
      %v488 = vunpack.c.l.b16 %v225
      %v489 = vunpack.c.h.b16 %v225
      %v490 = vunpack.c.l.b16 %v226
      %v491 = vunpack.c.h.b16 %v226
      %v492 = vunpack.c.l.b16 %v227
      %v493 = vunpack.c.h.b16 %v227
      %v494 = vunpack.c.l.b16 %v228
      %v495 = vunpack.c.h.b16 %v228
      %v496 = vunpack.c.l.b16 %v229
      %v497 = vunpack.c.h.b16 %v229
      %v498 = vunpack.c.l.b16 %v230
      %v499 = vunpack.c.h.b16 %v230
      %v500 = vunpack.c.l.b16 %v231
      %v501 = vunpack.c.h.b16 %v231
      %v502 = vunpack.c.l.b16 %v232
      %v503 = vunpack.c.h.b16 %v232
      %v504 = vunpack.c.l.b16 %v233
      %v505 = vunpack.c.h.b16 %v233
      %v506 = vunpack.c.l.b16 %v234
      %v507 = vunpack.c.h.b16 %v234
      %v508 = vunpack.c.l.b16 %v235
      %v509 = vunpack.c.h.b16 %v235
      %v510 = vunpack.c.l.b16 %v236
      %v511 = vunpack.c.h.b16 %v236
      %v512 = vunpack.c.l.b16 %v237
      %v513 = vunpack.c.h.b16 %v237
      %v514 = vunpack.c.l.b16 %v238
      %v515 = vunpack.c.h.b16 %v238
      %v516 = vunpack.c.l.b16 %v239
      %v517 = vunpack.c.h.b16 %v239
      %v518 = vunpack.c.l.b16 %v240
      %v519 = vunpack.c.h.b16 %v240
      %v520 = vunpack.c.l.b16 %v241
      %v521 = vunpack.c.h.b16 %v241
      %v522 = vunpack.c.l.b16 %v242
      %v523 = vunpack.c.h.b16 %v242
      %v524 = vunpack.c.l.b16 %v243
      %v525 = vunpack.c.h.b16 %v243
      %v526 = vunpack.c.l.b16 %v244
      %v527 = vunpack.c.h.b16 %v244
      %v528 = vunpack.c.l.b16 %v245
      %v529 = vunpack.c.h.b16 %v245
      %v530 = vunpack.c.l.b16 %v246
      %v531 = vunpack.c.h.b16 %v246
      %v532 = vunpack.c.l.b16 %v247
      %v533 = vunpack.c.h.b16 %v247
      %v534 = vunpack.c.l.b16 %v248
      %v535 = vunpack.c.h.b16 %v248
      %v536 = vunpack.c.l.b16 %v249
      %v537 = vunpack.c.h.b16 %v249
      %v538 = vunpack.c.l.b16 %v250
      %v539 = vunpack.c.h.b16 %v250
      %v540 = vunpack.c.l.b16 %v251
      %v541 = vunpack.c.h.b16 %v251
      %v542 = vunpack.c.l.b16 %v252
      %v543 = vunpack.c.h.b16 %v252
      %v544 = vunpack.c.l.b16 %v253
      %v545 = vunpack.c.h.b16 %v253
      %v546 = vunpack.c.l.b16 %v254
      %v547 = vunpack.c.h.b16 %v254
      %v548 = vunpack.c.l.b16 %v255
      %v549 = vunpack.c.h.b16 %v255
      %v550 = vunpack.c.l.b16 %v256
      %v551 = vunpack.c.h.b16 %v256
      %v552 = vunpack.c.l.b16 %v257
      %v553 = vunpack.c.h.b16 %v257
      %v554 = vunpack.c.l.b16 %v258
      %v555 = vunpack.c.h.b16 %v258
      %v556 = vunpack.c.l.b16 %v259
      %v557 = vunpack.c.h.b16 %v259
      %v558 = vunpack.c.l.b16 %v260
      %v559 = vunpack.c.h.b16 %v260
      %v560 = vunpack.c.l.b16 %v261
      %v561 = vunpack.c.h.b16 %v261
      %v562 = vunpack.c.l.b16 %v262
      %v563 = vunpack.c.h.b16 %v262
      %v564 = vunpack.c.l.b16 %v263
      %v565 = vunpack.c.h.b16 %v263
      %v566 = vunpack.c.l.b16 %v264
      %v567 = vunpack.c.h.b16 %v264
      %v568 = vunpack.c.l.b16 %v265
      %v569 = vunpack.c.h.b16 %v265
      %v570 = vunpack.c.l.b16 %v266
      %v571 = vunpack.c.h.b16 %v266
      %v572 = vunpack.c.l.b16 %v267
      %v573 = vunpack.c.h.b16 %v267
      %v574 = vunpack.c.l.b16 %v268
      %v575 = vunpack.c.h.b16 %v268
      %v576 = vunpack.c.l.b16 %v269
      %v577 = vunpack.c.h.b16 %v269
      %v578 = vunpack.c.l.b16 %v270
      %v579 = vunpack.c.h.b16 %v270
      %v580 = vunpack.c.l.b16 %v271
      %v581 = vunpack.c.h.b16 %v271
      %v582 = vunpack.c.l.b16 %v272
      %v583 = vunpack.c.h.b16 %v272
      %v584 = vunpack.c.l.b16 %v273
      %v585 = vunpack.c.h.b16 %v273
      %v586 = vunpack.c.l.b16 %v274
      %v587 = vunpack.c.h.b16 %v274
      %v588 = vunpack.c.l.b16 %v275
      %v589 = vunpack.c.h.b16 %v275
      %v590 = vunpack.c.l.b16 %v276
      %v591 = vunpack.c.h.b16 %v276
      %v592 = vunpack.c.l.b16 %v277
      %v593 = vunpack.c.h.b16 %v277
      %v594 = vunpack.c.l.b16 %v278
      %v595 = vunpack.c.h.b16 %v278
      %v596 = vunpack.c.l.b16 %v279
      %v597 = vunpack.c.h.b16 %v279
      %v598 = vunpack.c.l.b16 %v280
      %v599 = vunpack.c.h.b16 %v280
      %v600 = vunpack.c.l.b16 %v281
      %v601 = vunpack.c.h.b16 %v281
      %v602 = vunpack.c.l.b16 %v282
      %v603 = vunpack.c.h.b16 %v282
      %v604 = vunpack.c.l.b16 %v283
      %v605 = vunpack.c.h.b16 %v283
      %v606 = vunpack.c.l.b16 %v284
      %v607 = vunpack.c.h.b16 %v284
      %v608 = vunpack.c.l.b16 %v285
      %v609 = vunpack.c.h.b16 %v285
      %v610 = vunpack.c.l.b16 %v286
      %v611 = vunpack.c.h.b16 %v286
      %v612 = vunpack.c.l.b16 %v287
      %v613 = vunpack.c.h.b16 %v287
      %v614 = vunpack.c.l.b16 %v288
      %v615 = vunpack.c.h.b16 %v288
      %v616 = vunpack.c.l.b16 %v289
      %v617 = vunpack.c.h.b16 %v289
      %v618 = vunpack.c.l.b16 %v290
      %v619 = vunpack.c.h.b16 %v290
      %v620 = vunpack.c.l.b16 %v291
      %v621 = vunpack.c.h.b16 %v291
      %v622 = vunpack.c.l.b16 %v292
      %v623 = vunpack.c.h.b16 %v292
      %v624 = vunpack.c.l.b16 %v293
      %v625 = vunpack.c.h.b16 %v293
      %v626 = vunpack.c.l.b16 %v294
      %v627 = vunpack.c.h.b16 %v294
      %v628 = vunpack.c.l.b16 %v295
      %v629 = vunpack.c.h.b16 %v295
      %v630 = vunpack.c.l.b16 %v296
      %v631 = vunpack.c.h.b16 %v296
      %v632 = vunpack.c.l.b16 %v297
      %v633 = vunpack.c.h.b16 %v297
      %v634 = vunpack.c.l.b16 %v298
      %v635 = vunpack.c.h.b16 %v298
      %v636 = vunpack.c.l.b16 %v299
      %v637 = vunpack.c.h.b16 %v299
      %v638 = vunpack.c.l.b16 %v300
      %v639 = vunpack.c.h.b16 %v300
      %v640 = vunpack.c.l.b16 %v301
      %v641 = vunpack.c.h.b16 %v301
      %v642 = vunpack.c.l.b16 %v302
      %v643 = vunpack.c.h.b16 %v302
      %v644 = vunpack.c.l.b16 %v303
      %v645 = vunpack.c.h.b16 %v303
      %v646 = vunpack.c.l.b16 %v304
      %v647 = vunpack.c.h.b16 %v304
      %v648 = vunpack.c.l.b16 %v305
      %v649 = vunpack.c.h.b16 %v305
      %v650 = vunpack.c.l.b16 %v306
      %v651 = vunpack.c.h.b16 %v306
      %v652 = vunpack.c.l.b16 %v307
      %v653 = vunpack.c.h.b16 %v307
      %v654 = vpack.c.b16 %v468, %v462
      %v655 = vpack.c.b16 %v469, %v463
      %v656 = vpack.c.b16 %v470, %v464
      %v657 = vpack.c.b16 %v471, %v465
      %v658 = vpack.c.b16 %v472, %v466
      %v659 = vpack.c.b16 %v473, %v467
      %v660 = vpack.c.b16 %v480, %v474
      %v661 = vpack.c.b16 %v481, %v475
      %v662 = vpack.c.b16 %v482, %v476
      %v663 = vpack.c.b16 %v483, %v477
      %v664 = vpack.c.b16 %v484, %v478
      %v665 = vpack.c.b16 %v485, %v479
      %v666 = vpack.c.b16 %v492, %v486
      %v667 = vpack.c.b16 %v493, %v487
      %v668 = vpack.c.b16 %v494, %v488
      %v669 = vpack.c.b16 %v495, %v489
      %v670 = vpack.c.b16 %v496, %v490
      %v671 = vpack.c.b16 %v497, %v491
      %v672 = vpack.c.b16 %v504, %v498
      %v673 = vpack.c.b16 %v505, %v499
      %v674 = vpack.c.b16 %v506, %v500
      %v675 = vpack.c.b16 %v507, %v501
      %v676 = vpack.c.b16 %v508, %v502
      %v677 = vpack.c.b16 %v509, %v503
      %v678 = vpack.c.b16 %v516, %v510
      %v679 = vpack.c.b16 %v517, %v511
      %v680 = vpack.c.b16 %v518, %v512
      %v681 = vpack.c.b16 %v519, %v513
      %v682 = vpack.c.b16 %v520, %v514
      %v683 = vpack.c.b16 %v521, %v515
      %v684 = vpack.c.b16 %v528, %v522
      %v685 = vpack.c.b16 %v529, %v523
      %v686 = vpack.c.b16 %v530, %v524
      %v687 = vpack.c.b16 %v531, %v525
      %v688 = vpack.c.b16 %v532, %v526
      %v689 = vpack.c.b16 %v533, %v527
      %v690 = vpack.c.b16 %v540, %v534
      %v691 = vpack.c.b16 %v541, %v535
      %v692 = vpack.c.b16 %v542, %v536
      %v693 = vpack.c.b16 %v543, %v537
      %v694 = vpack.c.b16 %v544, %v538
      %v695 = vpack.c.b16 %v545, %v539
      %v696 = vpack.c.b16 %v552, %v546
      %v697 = vpack.c.b16 %v553, %v547
      %v698 = vpack.c.b16 %v554, %v548
      %v699 = vpack.c.b16 %v555, %v549
      %v700 = vpack.c.b16 %v556, %v550
      %v701 = vpack.c.b16 %v557, %v551
      %v702 = vpack.c.b16 %v564, %v558
      %v703 = vpack.c.b16 %v565, %v559
      %v704 = vpack.c.b16 %v566, %v560
      %v705 = vpack.c.b16 %v567, %v561
      %v706 = vpack.c.b16 %v568, %v562
      %v707 = vpack.c.b16 %v569, %v563
      %v708 = vpack.c.b16 %v576, %v570
      %v709 = vpack.c.b16 %v577, %v571
      %v710 = vpack.c.b16 %v578, %v572
      %v711 = vpack.c.b16 %v579, %v573
      %v712 = vpack.c.b16 %v580, %v574
      %v713 = vpack.c.b16 %v581, %v575
      %v714 = vpack.c.b16 %v588, %v582
      %v715 = vpack.c.b16 %v589, %v583
      %v716 = vpack.c.b16 %v590, %v584
      %v717 = vpack.c.b16 %v591, %v585
      %v718 = vpack.c.b16 %v592, %v586
      %v719 = vpack.c.b16 %v593, %v587
      %v720 = vpack.c.b16 %v600, %v594
      %v721 = vpack.c.b16 %v601, %v595
      %v722 = vpack.c.b16 %v602, %v596
      %v723 = vpack.c.b16 %v603, %v597
      %v724 = vpack.c.b16 %v604, %v598
      %v725 = vpack.c.b16 %v605, %v599
      %v726 = vpack.c.b16 %v612, %v606
      %v727 = vpack.c.b16 %v613, %v607
      %v728 = vpack.c.b16 %v614, %v608
      %v729 = vpack.c.b16 %v615, %v609
      %v730 = vpack.c.b16 %v616, %v610
      %v731 = vpack.c.b16 %v617, %v611
      %v732 = vpack.c.b16 %v624, %v618
      %v733 = vpack.c.b16 %v625, %v619
      %v734 = vpack.c.b16 %v626, %v620
      %v735 = vpack.c.b16 %v627, %v621
      %v736 = vpack.c.b16 %v628, %v622
      %v737 = vpack.c.b16 %v629, %v623
      %v738 = vpack.c.b16 %v636, %v630
      %v739 = vpack.c.b16 %v637, %v631
      %v740 = vpack.c.b16 %v638, %v632
      %v741 = vpack.c.b16 %v639, %v633
      %v742 = vpack.c.b16 %v640, %v634
      %v743 = vpack.c.b16 %v641, %v635
      %v744 = vpack.c.b16 %v648, %v642
      %v745 = vpack.c.b16 %v649, %v643
      %v746 = vpack.c.b16 %v650, %v644
      %v747 = vpack.c.b16 %v651, %v645
      %v748 = vpack.c.b16 %v652, %v646
      %v749 = vpack.c.b16 %v653, %v647
      %846 = vmatprep.subr.bf16.mxu0 %v655
      %847 = vmatpush1.bf16.msra.mxu0 %v654
      %848 = vmatprep.subr.bf16.mxu0 %v661
      %849 = vmatpush1.bf16.msra.mxu0 %v660
      %850 = vmatprep.subr.bf16.mxu0 %v667
      %851 = vmatpush1.bf16.msra.mxu0 %v666
      %852 = vmatprep.subr.bf16.mxu0 %v673
      %853 = vmatpush1.bf16.msra.mxu0 %v672
      %854 = vmatprep.subr.bf16.mxu0 %v679
      %855 = vmatpush1.bf16.msra.mxu0 %v678
      %856 = vmatprep.subr.bf16.mxu0 %v685
      %857 = vmatpush1.bf16.msra.mxu0 %v684
      %858 = vmatprep.subr.bf16.mxu0 %v691
      %859 = vmatpush1.bf16.msra.mxu0 %v690
      %860 = vmatprep.subr.bf16.mxu0 %v697
      %861 = vmatpush1.bf16.msra.mxu0 %v696
      %862 = vmatprep.subr.bf16.mxu0 %v703
      %863 = vmatpush1.bf16.msra.mxu0 %v702
      %864 = vmatprep.subr.bf16.mxu0 %v709
      %865 = vmatpush1.bf16.msra.mxu0 %v708
      %866 = vmatprep.subr.bf16.mxu0 %v715
      %867 = vmatpush1.bf16.msra.mxu0 %v714
      %868 = vmatprep.subr.bf16.mxu0 %v721
      %869 = vmatpush1.bf16.msra.mxu0 %v720
      %870 = vmatprep.subr.bf16.mxu0 %v727
      %871 = vmatpush1.bf16.msra.mxu0 %v726
      %872 = vmatprep.subr.bf16.mxu0 %v733
      %873 = vmatpush1.bf16.msra.mxu0 %v732
      %874 = vmatprep.subr.bf16.mxu0 %v739
      %875 = vmatpush1.bf16.msra.mxu0 %v738
      %876 = vmatprep.subr.bf16.mxu0 %v745
      %877 = vmatpush1.bf16.msra.mxu0 %v744
      %878 = vmatprep.mubr.bf16.mxu0 %v328
      %879 = vmatmul.mubr.bf16.gmra.mrb[0].mxu0 %v327
      %v880 = vpop.f32.mrb[0].mxu0
      %v881 = vadd.f32 %v339, %v880
      %v882 = vpop.f32.mrb[0].mxu0
      %v883 = vadd.f32 %v343, %v882
      %v884 = vpop.f32.mrb[0].mxu0
      %v885 = vadd.f32 %v339, %v884
      %v886 = vpop.f32.mrb[0].mxu0
      %v887 = vadd.f32 %v343, %v886
      %888 = vmatprep.mubr.bf16.mxu0 %v330
      %889 = vmatmul.mubr.bf16.gmra.mrb[0].mxu0 %v329
      %v890 = vpop.f32.mrb[0].mxu0
      %v891 = vadd.f32 %v339, %v890
      %v892 = vpop.f32.mrb[0].mxu0
      %v893 = vadd.f32 %v343, %v892
      %v894 = vpop.f32.mrb[0].mxu0
      %v895 = vadd.f32 %v339, %v894
      %v896 = vpop.f32.mrb[0].mxu0
      %v897 = vadd.f32 %v343, %v896
      %898 = vmatprep.mubr.bf16.mxu0 %v332
      %899 = vmatmul.mubr.bf16.gmra.mrb[0].mxu0 %v331
      %v900 = vpop.f32.mrb[0].mxu0
      %v901 = vadd.f32 %v339, %v900
      %v902 = vpop.f32.mrb[0].mxu0
      %v903 = vadd.f32 %v343, %v902
      %v904 = vpop.f32.mrb[0].mxu0
      %v905 = vadd.f32 %v339, %v904
      %v906 = vpop.f32.mrb[0].mxu0
      %v907 = vadd.f32 %v343, %v906
      %908 = vmatprep.mubr.bf16.mxu0 %v334
      %909 = vmatmul.mubr.bf16.gmra.mrb[0].mxu0 %v333
      %v910 = vpop.f32.mrb[0].mxu0
      %v911 = vadd.f32 %v339, %v910
      %v912 = vpop.f32.mrb[0].mxu0
      %v913 = vadd.f32 %v343, %v912
      %v914 = vpop.f32.mrb[0].mxu0
      %v915 = vadd.f32 %v339, %v914
      %v916 = vpop.f32.mrb[0].mxu0
      %v917 = vadd.f32 %v343, %v916
      %918 = vdwg.mxu0
      %919 = vmatprep.subr.bf16.mxu0 %v657
      %920 = vmatpush1.bf16.msra.mxu0 %v656
      %921 = vmatprep.subr.bf16.mxu0 %v663
      %922 = vmatpush1.bf16.msra.mxu0 %v662
      %923 = vmatprep.subr.bf16.mxu0 %v669
      %924 = vmatpush1.bf16.msra.mxu0 %v668
      %925 = vmatprep.subr.bf16.mxu0 %v675
      %926 = vmatpush1.bf16.msra.mxu0 %v674
      %927 = vmatprep.subr.bf16.mxu0 %v681
      %928 = vmatpush1.bf16.msra.mxu0 %v680
      %929 = vmatprep.subr.bf16.mxu0 %v687
      %930 = vmatpush1.bf16.msra.mxu0 %v686
      %931 = vmatprep.subr.bf16.mxu0 %v693
      %932 = vmatpush1.bf16.msra.mxu0 %v692
      %933 = vmatprep.subr.bf16.mxu0 %v699
      %934 = vmatpush1.bf16.msra.mxu0 %v698
      %935 = vmatprep.subr.bf16.mxu0 %v705
      %936 = vmatpush1.bf16.msra.mxu0 %v704
      %937 = vmatprep.subr.bf16.mxu0 %v711
      %938 = vmatpush1.bf16.msra.mxu0 %v710
      %939 = vmatprep.subr.bf16.mxu0 %v717
      %940 = vmatpush1.bf16.msra.mxu0 %v716
      %941 = vmatprep.subr.bf16.mxu0 %v723
      %942 = vmatpush1.bf16.msra.mxu0 %v722
      %943 = vmatprep.subr.bf16.mxu0 %v729
      %944 = vmatpush1.bf16.msra.mxu0 %v728
      %945 = vmatprep.subr.bf16.mxu0 %v735
      %946 = vmatpush1.bf16.msra.mxu0 %v734
      %947 = vmatprep.subr.bf16.mxu0 %v741
      %948 = vmatpush1.bf16.msra.mxu0 %v740
      %949 = vmatprep.subr.bf16.mxu0 %v747
      %950 = vmatpush1.bf16.msra.mxu0 %v746
      %951 = vmatprep.mubr.bf16.mxu0 %v328
      %952 = vmatmul.mubr.bf16.gmra.mrb[0].mxu0 %v327
      %v953 = vpop.f32.mrb[0].mxu0
      %v954 = vadd.f32 %v347, %v953
      %v955 = vpop.f32.mrb[0].mxu0
      %v956 = vadd.f32 %v351, %v955
      %v957 = vpop.f32.mrb[0].mxu0
      %v958 = vadd.f32 %v347, %v957
      %v959 = vpop.f32.mrb[0].mxu0
      %v960 = vadd.f32 %v351, %v959
      %961 = vmatprep.mubr.bf16.mxu0 %v330
      %962 = vmatmul.mubr.bf16.gmra.mrb[0].mxu0 %v329
      %v963 = vpop.f32.mrb[0].mxu0
      %v964 = vadd.f32 %v347, %v963
      %v965 = vpop.f32.mrb[0].mxu0
      %v966 = vadd.f32 %v351, %v965
      %v967 = vpop.f32.mrb[0].mxu0
      %v968 = vadd.f32 %v347, %v967
      %v969 = vpop.f32.mrb[0].mxu0
      %v970 = vadd.f32 %v351, %v969
      %971 = vmatprep.mubr.bf16.mxu0 %v332
      %972 = vmatmul.mubr.bf16.gmra.mrb[0].mxu0 %v331
      %v973 = vpop.f32.mrb[0].mxu0
      %v974 = vadd.f32 %v347, %v973
      %v975 = vpop.f32.mrb[0].mxu0
      %v976 = vadd.f32 %v351, %v975
      %v977 = vpop.f32.mrb[0].mxu0
      %v978 = vadd.f32 %v347, %v977
      %v979 = vpop.f32.mrb[0].mxu0
      %v980 = vadd.f32 %v351, %v979
      %981 = vmatprep.mubr.bf16.mxu0 %v334
      %982 = vmatmul.mubr.bf16.gmra.mrb[0].mxu0 %v333
      %v983 = vpop.f32.mrb[0].mxu0
      %v984 = vadd.f32 %v347, %v983
      %v985 = vpop.f32.mrb[0].mxu0
      %v986 = vadd.f32 %v351, %v985
      %v987 = vpop.f32.mrb[0].mxu0
      %v988 = vadd.f32 %v347, %v987
      %v989 = vpop.f32.mrb[0].mxu0
      %v990 = vadd.f32 %v351, %v989
      %991 = vdwg.mxu0
      %992 = vmatprep.subr.bf16.mxu0 %v659
      %993 = vmatpush1.bf16.msra.mxu0 %v658
      %994 = vmatprep.subr.bf16.mxu0 %v665
      %995 = vmatpush1.bf16.msra.mxu0 %v664
      %996 = vmatprep.subr.bf16.mxu0 %v671
      %997 = vmatpush1.bf16.msra.mxu0 %v670
      %998 = vmatprep.subr.bf16.mxu0 %v677
      %999 = vmatpush1.bf16.msra.mxu0 %v676
      %1000 = vmatprep.subr.bf16.mxu0 %v683
      %1001 = vmatpush1.bf16.msra.mxu0 %v682
      %1002 = vmatprep.subr.bf16.mxu0 %v689
      %1003 = vmatpush1.bf16.msra.mxu0 %v688
      %1004 = vmatprep.subr.bf16.mxu0 %v695
      %1005 = vmatpush1.bf16.msra.mxu0 %v694
      %1006 = vmatprep.subr.bf16.mxu0 %v701
      %1007 = vmatpush1.bf16.msra.mxu0 %v700
      %1008 = vmatprep.subr.bf16.mxu0 %v707
      %1009 = vmatpush1.bf16.msra.mxu0 %v706
      %1010 = vmatprep.subr.bf16.mxu0 %v713
      %1011 = vmatpush1.bf16.msra.mxu0 %v712
      %1012 = vmatprep.subr.bf16.mxu0 %v719
      %1013 = vmatpush1.bf16.msra.mxu0 %v718
      %1014 = vmatprep.subr.bf16.mxu0 %v725
      %1015 = vmatpush1.bf16.msra.mxu0 %v724
      %1016 = vmatprep.subr.bf16.mxu0 %v731
      %1017 = vmatpush1.bf16.msra.mxu0 %v730
      %1018 = vmatprep.subr.bf16.mxu0 %v737
      %1019 = vmatpush1.bf16.msra.mxu0 %v736
      %1020 = vmatprep.subr.bf16.mxu0 %v743
      %1021 = vmatpush1.bf16.msra.mxu0 %v742
      %1022 = vmatprep.subr.bf16.mxu0 %v749
      %1023 = vmatpush1.bf16.msra.mxu0 %v748
      %1024 = vmatprep.mubr.bf16.mxu0 %v328
      %1025 = vmatmul.mubr.bf16.gmra.mrb[0].mxu0 %v327
      %v1026 = vpop.f32.mrb[0].mxu0
      %v1027 = vadd.f32 %v355, %v1026
      %v1028 = vpop.f32.mrb[0].mxu0
      %v1029 = vadd.f32 %v359, %v1028
      %v1030 = vpop.f32.mrb[0].mxu0
      %v1031 = vadd.f32 %v355, %v1030
      %v1032 = vpop.f32.mrb[0].mxu0
      %v1033 = vadd.f32 %v359, %v1032
      %1034 = vmatprep.mubr.bf16.mxu0 %v330
      %1035 = vmatmul.mubr.bf16.gmra.mrb[0].mxu0 %v329
      %v1036 = vpop.f32.mrb[0].mxu0
      %v1037 = vadd.f32 %v355, %v1036
      %v1038 = vpop.f32.mrb[0].mxu0
      %v1039 = vadd.f32 %v359, %v1038
      %v1040 = vpop.f32.mrb[0].mxu0
      %v1041 = vadd.f32 %v355, %v1040
      %v1042 = vpop.f32.mrb[0].mxu0
      %v1043 = vadd.f32 %v359, %v1042
      %1044 = vmatprep.mubr.bf16.mxu0 %v332
      %1045 = vmatmul.mubr.bf16.gmra.mrb[0].mxu0 %v331
      %v1046 = vpop.f32.mrb[0].mxu0
      %v1047 = vadd.f32 %v355, %v1046
      %v1048 = vpop.f32.mrb[0].mxu0
      %v1049 = vadd.f32 %v359, %v1048
      %v1050 = vpop.f32.mrb[0].mxu0
      %v1051 = vadd.f32 %v355, %v1050
      %v1052 = vpop.f32.mrb[0].mxu0
      %v1053 = vadd.f32 %v359, %v1052
      %1054 = vmatprep.mubr.bf16.mxu0 %v334
      %1055 = vmatmul.mubr.bf16.gmra.mrb[0].mxu0 %v333
      %v1056 = vpop.f32.mrb[0].mxu0
      %v1057 = vadd.f32 %v355, %v1056
      %v1058 = vpop.f32.mrb[0].mxu0
      %v1059 = vadd.f32 %v359, %v1058
      %v1060 = vpop.f32.mrb[0].mxu0
      %v1061 = vadd.f32 %v355, %v1060
      %v1062 = vpop.f32.mrb[0].mxu0
      %v1063 = vadd.f32 %v359, %v1062
      %1064 = vdwg.mxu0
      %1065 = vst [vmem:[#allocation3] sm:$0xff] %v881
      %1066 = vst [vmem:[#allocation3 + $0x8] sm:$0xff] %v883
      %1067 = vst [vmem:[#allocation3 + $0x10] sm:$0xff] %v954
      %1068 = vst [vmem:[#allocation3 + $0x18] sm:$0xff] %v956
      %1069 = vst [vmem:[#allocation3 + $0x20] sm:$0xff] %v1027
      %1070 = vst [vmem:[#allocation3 + $0x28] sm:$0xff] %v1029
      %1071 = vst [vmem:[#allocation3 + $0x30] sm:$0xff] %v885
      %1072 = vst [vmem:[#allocation3 + $0x38] sm:$0xff] %v887
      %1073 = vst [vmem:[#allocation3 + $0x40] sm:$0xff] %v958
      %1074 = vst [vmem:[#allocation3 + $0x48] sm:$0xff] %v960
      %1075 = vst [vmem:[#allocation3 + $0x50] sm:$0xff] %v1031
      %1076 = vst [vmem:[#allocation3 + $0x58] sm:$0xff] %v1033
      %1077 = vst [vmem:[#allocation3 + $0x60] sm:$0xff] %v891
      %1078 = vst [vmem:[#allocation3 + $0x68] sm:$0xff] %v893
      %1079 = vst [vmem:[#allocation3 + $0x70] sm:$0xff] %v964
      %1080 = vst [vmem:[#allocation3 + $0x78] sm:$0xff] %v966
      %1081 = vst [vmem:[#allocation3 + $0x80] sm:$0xff] %v1037
      %1082 = vst [vmem:[#allocation3 + $0x88] sm:$0xff] %v1039
      %1083 = vst [vmem:[#allocation3 + $0x90] sm:$0xff] %v895
      %1084 = vst [vmem:[#allocation3 + $0x98] sm:$0xff] %v897
      %1085 = vst [vmem:[#allocation3 + $0xa0] sm:$0xff] %v968
      %1086 = vst [vmem:[#allocation3 + $0xa8] sm:$0xff] %v970
      %1087 = vst [vmem:[#allocation3 + $0xb0] sm:$0xff] %v1041
      %1088 = vst [vmem:[#allocation3 + $0xb8] sm:$0xff] %v1043
      %1089 = vst [vmem:[#allocation3 + $0xc0] sm:$0xff] %v901
      %1090 = vst [vmem:[#allocation3 + $0xc8] sm:$0xff] %v903
      %1091 = vst [vmem:[#allocation3 + $0xd0] sm:$0xff] %v974
      %1092 = vst [vmem:[#allocation3 + $0xd8] sm:$0xff] %v976
      %1093 = vst [vmem:[#allocation3 + $0xe0] sm:$0xff] %v1047
      %1094 = vst [vmem:[#allocation3 + $0xe8] sm:$0xff] %v1049
      %1095 = vst [vmem:[#allocation3 + $0xf0] sm:$0xff] %v905
      %1096 = vst [vmem:[#allocation3 + $0xf8] sm:$0xff] %v907
      %1097 = vst [vmem:[#allocation3 + $0x100] sm:$0xff] %v978
      %1098 = vst [vmem:[#allocation3 + $0x108] sm:$0xff] %v980
      %1099 = vst [vmem:[#allocation3 + $0x110] sm:$0xff] %v1051
      %1100 = vst [vmem:[#allocation3 + $0x118] sm:$0xff] %v1053
      %1101 = vst [vmem:[#allocation3 + $0x120] sm:$0xff] %v911
      %1102 = vst [vmem:[#allocation3 + $0x128] sm:$0xff] %v913
      %1103 = vst [vmem:[#allocation3 + $0x130] sm:$0xff] %v984
      %1104 = vst [vmem:[#allocation3 + $0x138] sm:$0xff] %v986
      %1105 = vst [vmem:[#allocation3 + $0x140] sm:$0xff] %v1057
      %1106 = vst [vmem:[#allocation3 + $0x148] sm:$0xff] %v1059
      %1107 = vst [vmem:[#allocation3 + $0x150] sm:$0xff] %v915
      %1108 = vst [vmem:[#allocation3 + $0x158] sm:$0xff] %v917
      %1109 = vst [vmem:[#allocation3 + $0x160] sm:$0xff] %v988
      %1110 = vst [vmem:[#allocation3 + $0x168] sm:$0xff] %v990
      %1111 = vst [vmem:[#allocation3 + $0x170] sm:$0xff] %v1061
      %1112 = vst [vmem:[#allocation3 + $0x178] sm:$0xff] %v1063
      %s1113 = smul.u32 %s204, 48
      %s1114 = smul.addr %s1113, 4
      %s1115 = scalar_lea.vmem [#allocation10], %s1114
      %v1116 = vld [vmem:[%s1115] sm:$0xff]
      %v1117 = vld [vmem:[%s1115 + $0x8] sm:$0xf]
      %v1118 = vld [vmem:[%s1115 + $0xc] sm:$0xff]
      %v1119 = vld [vmem:[%s1115 + $0x14] sm:$0xf]
      %v1120 = vld [vmem:[%s1115 + $0x18] sm:$0xff]
      %v1121 = vld [vmem:[%s1115 + $0x20] sm:$0xf]
      %v1122 = vld [vmem:[%s1115 + $0x24] sm:$0xff]
      %v1123 = vld [vmem:[%s1115 + $0x2c] sm:$0xf]
      %v1124 = vld [vmem:[%s1115 + $0x30] sm:$0xff]
      %v1125 = vld [vmem:[%s1115 + $0x38] sm:$0xf]
      %v1126 = vld [vmem:[%s1115 + $0x3c] sm:$0xff]
      %v1127 = vld [vmem:[%s1115 + $0x44] sm:$0xf]
      %v1128 = vld [vmem:[%s1115 + $0x48] sm:$0xff]
      %v1129 = vld [vmem:[%s1115 + $0x50] sm:$0xf]
      %v1130 = vld [vmem:[%s1115 + $0x54] sm:$0xff]
      %v1131 = vld [vmem:[%s1115 + $0x5c] sm:$0xf]
      %v1132 = vld [vmem:[%s1115 + $0x60] sm:$0xff]
      %v1133 = vld [vmem:[%s1115 + $0x68] sm:$0xf]
      %v1134 = vld [vmem:[%s1115 + $0x6c] sm:$0xff]
      %v1135 = vld [vmem:[%s1115 + $0x74] sm:$0xf]
      %v1136 = vld [vmem:[%s1115 + $0x78] sm:$0xff]
      %v1137 = vld [vmem:[%s1115 + $0x80] sm:$0xf]
      %v1138 = vld [vmem:[%s1115 + $0x84] sm:$0xff]
      %v1139 = vld [vmem:[%s1115 + $0x8c] sm:$0xf]
      %v1140 = vld [vmem:[%s1115 + $0x90] sm:$0xff]
      %v1141 = vld [vmem:[%s1115 + $0x98] sm:$0xf]
      %v1142 = vld [vmem:[%s1115 + $0x9c] sm:$0xff]
      %v1143 = vld [vmem:[%s1115 + $0xa4] sm:$0xf]
      %v1144 = vld [vmem:[%s1115 + $0xa8] sm:$0xff]
      %v1145 = vld [vmem:[%s1115 + $0xb0] sm:$0xf]
      %v1146 = vld [vmem:[%s1115 + $0xb4] sm:$0xff]
      %v1147 = vld [vmem:[%s1115 + $0xbc] sm:$0xf]
      %s1148 = smul.u32 %s204, 3
      %s1149 = scalar_lea.vmem [#allocation11], %s1148
      %v1150 = vld [vmem:[%s1149] sm:$0x7]
      %s1151 = smul.addr %s1113, 4
      %s1152 = scalar_lea.vmem [#allocation13], %s1151
      %v1153 = vld [vmem:[%s1152] sm:$0xff]
      %v1154 = vld [vmem:[%s1152 + $0x8] sm:$0xf]
      %v1155 = vld [vmem:[%s1152 + $0xc] sm:$0xff]
      %v1156 = vld [vmem:[%s1152 + $0x14] sm:$0xf]
      %v1157 = vld [vmem:[%s1152 + $0x18] sm:$0xff]
      %v1158 = vld [vmem:[%s1152 + $0x20] sm:$0xf]
      %v1159 = vld [vmem:[%s1152 + $0x24] sm:$0xff]
      %v1160 = vld [vmem:[%s1152 + $0x2c] sm:$0xf]
      %v1161 = vld [vmem:[%s1152 + $0x30] sm:$0xff]
      %v1162 = vld [vmem:[%s1152 + $0x38] sm:$0xf]
      %v1163 = vld [vmem:[%s1152 + $0x3c] sm:$0xff]
      %v1164 = vld [vmem:[%s1152 + $0x44] sm:$0xf]
      %v1165 = vld [vmem:[%s1152 + $0x48] sm:$0xff]
      %v1166 = vld [vmem:[%s1152 + $0x50] sm:$0xf]
      %v1167 = vld [vmem:[%s1152 + $0x54] sm:$0xff]
      %v1168 = vld [vmem:[%s1152 + $0x5c] sm:$0xf]
      %v1169 = vld [vmem:[%s1152 + $0x60] sm:$0xff]
      %v1170 = vld [vmem:[%s1152 + $0x68] sm:$0xf]
      %v1171 = vld [vmem:[%s1152 + $0x6c] sm:$0xff]
      %v1172 = vld [vmem:[%s1152 + $0x74] sm:$0xf]
      %v1173 = vld [vmem:[%s1152 + $0x78] sm:$0xff]
      %v1174 = vld [vmem:[%s1152 + $0x80] sm:$0xf]
      %v1175 = vld [vmem:[%s1152 + $0x84] sm:$0xff]
      %v1176 = vld [vmem:[%s1152 + $0x8c] sm:$0xf]
      %v1177 = vld [vmem:[%s1152 + $0x90] sm:$0xff]
      %v1178 = vld [vmem:[%s1152 + $0x98] sm:$0xf]
      %v1179 = vld [vmem:[%s1152 + $0x9c] sm:$0xff]
      %v1180 = vld [vmem:[%s1152 + $0xa4] sm:$0xf]
      %v1181 = vld [vmem:[%s1152 + $0xa8] sm:$0xff]
      %v1182 = vld [vmem:[%s1152 + $0xb0] sm:$0xf]
      %v1183 = vld [vmem:[%s1152 + $0xb4] sm:$0xff]
      %v1184 = vld [vmem:[%s1152 + $0xbc] sm:$0xf]
      %s1185 = scalar_lea.vmem [#allocation14], %s1148
      %v1186 = vld [vmem:[%s1185] sm:$0x7]
      %1187 = vst [vmem:[#allocation4] sm:$0xff] 0.0
      %1188 = vst [vmem:[#allocation5] sm:$0xff] 0.0
      %v1189 = vld [vmem:[#allocation3] sm:$0xff]
      %v1190 = vld [vmem:[#allocation3 + $0x8] sm:$0xff]
      %v1191 = vld [vmem:[#allocation3 + $0x10] sm:$0xff]
      %s1192 = scalar_lea.vmem [#allocation3], 336
      %v1193 = vld [vmem:[%s1192 + $0x18] sm:$0xff]
      %v1194 = vld [vmem:[%s1192 + $0x20] sm:$0xff]
      %v1195 = vld [vmem:[%s1192 + $0x28] sm:$0xff]
      %v1196 = vld [vmem:[#allocation4] sm:$0xff]
      %v1197 = vpack.c.bf16 %v1196, %v1196
      %v1199 = vlaneseq
      %v1200 = vshrl.u32 %v1199, 7
      %v1201 = vsub.s32 0, %v1200
      %v1202 = vrot.slane %v1150, %v1201
      %v1203 = vlaneseq
      %v1204 = vshrl.u32 %v1203, 7
      %v1205 = vsub.s32 1, %v1204
      %v1206 = vrot.slane %v1150, %v1205
      %v1207 = vlaneseq
      %v1208 = vshrl.u32 %v1207, 7
      %v1209 = vsub.s32 2, %v1208
      %v1210 = vrot.slane %v1150, %v1209
      %v1246 = vunpack.c.l.b16 %v1116
      %v1247 = vunpack.c.h.b16 %v1116
      %v1248 = vunpack.c.l.b16 %v1117
      %v1249 = vunpack.c.l.b16 %v1118
      %v1250 = vunpack.c.h.b16 %v1118
      %v1251 = vunpack.c.l.b16 %v1119
      %v1252 = vunpack.c.l.b16 %v1120
      %v1253 = vunpack.c.h.b16 %v1120
      %v1254 = vunpack.c.l.b16 %v1121
      %v1255 = vunpack.c.l.b16 %v1122
      %v1256 = vunpack.c.h.b16 %v1122
      %v1257 = vunpack.c.l.b16 %v1123
      %v1258 = vunpack.c.l.b16 %v1124
      %v1259 = vunpack.c.h.b16 %v1124
      %v1260 = vunpack.c.l.b16 %v1125
      %v1261 = vunpack.c.l.b16 %v1126
      %v1262 = vunpack.c.h.b16 %v1126
      %v1263 = vunpack.c.l.b16 %v1127
      %v1264 = vunpack.c.l.b16 %v1128
      %v1265 = vunpack.c.h.b16 %v1128
      %v1266 = vunpack.c.l.b16 %v1129
      %v1267 = vunpack.c.l.b16 %v1130
      %v1268 = vunpack.c.h.b16 %v1130
      %v1269 = vunpack.c.l.b16 %v1131
      %v1270 = vunpack.c.l.b16 %v1132
      %v1271 = vunpack.c.h.b16 %v1132
      %v1272 = vunpack.c.l.b16 %v1133
      %v1273 = vunpack.c.l.b16 %v1134
      %v1274 = vunpack.c.h.b16 %v1134
      %v1275 = vunpack.c.l.b16 %v1135
      %v1276 = vunpack.c.l.b16 %v1136
      %v1277 = vunpack.c.h.b16 %v1136
      %v1278 = vunpack.c.l.b16 %v1137
      %v1279 = vunpack.c.l.b16 %v1138
      %v1280 = vunpack.c.h.b16 %v1138
      %v1281 = vunpack.c.l.b16 %v1139
      %v1282 = vunpack.c.l.b16 %v1140
      %v1283 = vunpack.c.h.b16 %v1140
      %v1284 = vunpack.c.l.b16 %v1141
      %v1285 = vunpack.c.l.b16 %v1142
      %v1286 = vunpack.c.h.b16 %v1142
      %v1287 = vunpack.c.l.b16 %v1143
      %v1288 = vunpack.c.l.b16 %v1144
      %v1289 = vunpack.c.h.b16 %v1144
      %v1290 = vunpack.c.l.b16 %v1145
      %v1291 = vunpack.c.l.b16 %v1146
      %v1292 = vunpack.c.h.b16 %v1146
      %v1293 = vunpack.c.l.b16 %v1147
      %v1294 = vpack.c.b16 %v1249, %v1246
      %v1295 = vpack.c.b16 %v1250, %v1247
      %v1296 = vpack.c.b16 %v1251, %v1248
      %v1297 = vpack.c.b16 %v1255, %v1252
      %v1298 = vpack.c.b16 %v1256, %v1253
      %v1299 = vpack.c.b16 %v1257, %v1254
      %v1300 = vpack.c.b16 %v1261, %v1258
      %v1301 = vpack.c.b16 %v1262, %v1259
      %v1302 = vpack.c.b16 %v1263, %v1260
      %v1303 = vpack.c.b16 %v1267, %v1264
      %v1304 = vpack.c.b16 %v1268, %v1265
      %v1305 = vpack.c.b16 %v1269, %v1266
      %v1306 = vpack.c.b16 %v1273, %v1270
      %v1307 = vpack.c.b16 %v1274, %v1271
      %v1308 = vpack.c.b16 %v1275, %v1272
      %v1309 = vpack.c.b16 %v1279, %v1276
      %v1310 = vpack.c.b16 %v1280, %v1277
      %v1311 = vpack.c.b16 %v1281, %v1278
      %v1312 = vpack.c.b16 %v1285, %v1282
      %v1313 = vpack.c.b16 %v1286, %v1283
      %v1314 = vpack.c.b16 %v1287, %v1284
      %v1315 = vpack.c.b16 %v1291, %v1288
      %v1316 = vpack.c.b16 %v1292, %v1289
      %v1317 = vpack.c.b16 %v1293, %v1290
      %1342 = vmatprep.subr.bf16.mxu0 %v1295
      %1343 = vmatpush1.bf16.msra.mxu0 %v1294
      %1344 = vmatprep.subr.bf16.mxu0 %v1298
      %1345 = vmatpush1.bf16.msra.mxu0 %v1297
      %1346 = vmatprep.subr.bf16.mxu0 %v1301
      %1347 = vmatpush1.bf16.msra.mxu0 %v1300
      %1348 = vmatprep.subr.bf16.mxu0 %v1304
      %1349 = vmatpush1.bf16.msra.mxu0 %v1303
      %1350 = vmatprep.subr.bf16.mxu0 %v1307
      %1351 = vmatpush1.bf16.msra.mxu0 %v1306
      %1352 = vmatprep.subr.bf16.mxu0 %v1310
      %1353 = vmatpush1.bf16.msra.mxu0 %v1309
      %1354 = vmatprep.subr.bf16.mxu0 %v1313
      %1355 = vmatpush1.bf16.msra.mxu0 %v1312
      %1356 = vmatprep.subr.bf16.mxu0 %v1316
      %1357 = vmatpush1.bf16.msra.mxu0 %v1315
      %1358 = vmatprep.subr.bf16.mxu0 0
      %1359 = vmatpush1.bf16.msra.mxu0 0
      %1360 = vmatprep.subr.bf16.mxu0 0
      %1361 = vmatpush1.bf16.msra.mxu0 0
      %1362 = vmatprep.subr.bf16.mxu0 0
      %1363 = vmatpush1.bf16.msra.mxu0 0
      %1364 = vmatprep.subr.bf16.mxu0 0
      %1365 = vmatpush1.bf16.msra.mxu0 0
      %1366 = vmatprep.subr.bf16.mxu0 0
      %1367 = vmatpush1.bf16.msra.mxu0 0
      %1368 = vmatprep.subr.bf16.mxu0 0
      %1369 = vmatpush1.bf16.msra.mxu0 0
      %1370 = vmatprep.subr.bf16.mxu0 0
      %1371 = vmatpush1.bf16.msra.mxu0 0
      %1372 = vmatprep.subr.bf16.mxu0 0
      %1373 = vmatpush1.bf16.msra.mxu0 0
      %1374 = vmatprep.mubr.bf16.mxu0 0
      %1375 = vmatmul.mubr.bf16.gmra.mrb[0].mxu0 %v1197
      %v1376 = vpop.f32.mrb[0].mxu0
      %v1377 = vadd.f32 %v1202, %v1376
      %v1378 = vpop.f32.mrb[0].mxu0
      %v1379 = vadd.f32 %v1206, %v1378
      %v1380 = vpop.f32.mrb[0].mxu0
      %v1381 = vpop.f32.mrb[0].mxu0
      %1382 = vdwg.mxu0
      %1383 = vmatprep.subr.bf16.mxu0 0
      %1384 = vmatpush1.bf16.msra.mxu0 %v1296
      %1385 = vmatprep.subr.bf16.mxu0 0
      %1386 = vmatpush1.bf16.msra.mxu0 %v1299
      %1387 = vmatprep.subr.bf16.mxu0 0
      %1388 = vmatpush1.bf16.msra.mxu0 %v1302
      %1389 = vmatprep.subr.bf16.mxu0 0
      %1390 = vmatpush1.bf16.msra.mxu0 %v1305
      %1391 = vmatprep.subr.bf16.mxu0 0
      %1392 = vmatpush1.bf16.msra.mxu0 %v1308
      %1393 = vmatprep.subr.bf16.mxu0 0
      %1394 = vmatpush1.bf16.msra.mxu0 %v1311
      %1395 = vmatprep.subr.bf16.mxu0 0
      %1396 = vmatpush1.bf16.msra.mxu0 %v1314
      %1397 = vmatprep.subr.bf16.mxu0 0
      %1398 = vmatpush1.bf16.msra.mxu0 %v1317
      %1399 = vmatprep.subr.bf16.mxu0 0
      %1400 = vmatpush1.bf16.msra.mxu0 0
      %1401 = vmatprep.subr.bf16.mxu0 0
      %1402 = vmatpush1.bf16.msra.mxu0 0
      %1403 = vmatprep.subr.bf16.mxu0 0
      %1404 = vmatpush1.bf16.msra.mxu0 0
      %1405 = vmatprep.subr.bf16.mxu0 0
      %1406 = vmatpush1.bf16.msra.mxu0 0
      %1407 = vmatprep.subr.bf16.mxu0 0
      %1408 = vmatpush1.bf16.msra.mxu0 0
      %1409 = vmatprep.subr.bf16.mxu0 0
      %1410 = vmatpush1.bf16.msra.mxu0 0
      %1411 = vmatprep.subr.bf16.mxu0 0
      %1412 = vmatpush1.bf16.msra.mxu0 0
      %1413 = vmatprep.subr.bf16.mxu0 0
      %1414 = vmatpush1.bf16.msra.mxu0 0
      %1415 = vmatprep.mubr.bf16.mxu0 0
      %1416 = vmatmul.mubr.bf16.gmra.mrb[0].mxu0 %v1197
      %v1417 = vpop.f32.mrb[0].mxu0
      %v1418 = vadd.f32 %v1210, %v1417
      %v1419 = vpop.f32.mrb[0].mxu0
      %v1420 = vpop.f32.mrb[0].mxu0
      %v1421 = vpop.f32.mrb[0].mxu0
      %1422 = vdwg.mxu0
      %v1423 = vadd.f32 %v1189, %v1377
      %v1424 = vxor.u32 %v1423, 2147483648
      %v1425 = vmul.f32 %v1424, 1.442695
      %v1426 = vpow.pop %v1425
      %v1427 = vadd.f32 %v1426, 1.0
      %v1428 = vrcp.pop %v1427
      %v1429 = vmul.f32 1.0, %v1428
      %v1430 = vadd.f32 %v1190, %v1379
      %v1431 = vxor.u32 %v1430, 2147483648
      %v1432 = vmul.f32 %v1431, 1.442695
      %v1433 = vpow.pop %v1432
      %v1434 = vadd.f32 %v1433, 1.0
      %v1435 = vrcp.pop %v1434
      %v1436 = vmul.f32 1.0, %v1435
      %v1437 = vmul.f32 %v1429, %v1418
      %v1438 = vadd.f32 %v1191, %v1437
      %v1439 = vtanh.pop %v1438
      %v1440 = vsub.f32 1.0, %v1436
      %v1441 = vmul.f32 %v1440, %v1439
      %v1442 = vmul.f32 %v1436, %v1196
      %v1443 = vadd.f32 %v1441, %v1442
      %v1444 = vld [vmem:[#allocation5] sm:$0xff]
      %v1445 = vpack.c.bf16 %v1444, %v1444
      %v1447 = vlaneseq
      %v1448 = vshrl.u32 %v1447, 7
      %v1449 = vsub.s32 0, %v1448
      %v1450 = vrot.slane %v1186, %v1449
      %v1451 = vlaneseq
      %v1452 = vshrl.u32 %v1451, 7
      %v1453 = vsub.s32 1, %v1452
      %v1454 = vrot.slane %v1186, %v1453
      %v1455 = vlaneseq
      %v1456 = vshrl.u32 %v1455, 7
      %v1457 = vsub.s32 2, %v1456
      %v1458 = vrot.slane %v1186, %v1457
      %v1494 = vunpack.c.l.b16 %v1153
      %v1495 = vunpack.c.h.b16 %v1153
      %v1496 = vunpack.c.l.b16 %v1154
      %v1497 = vunpack.c.l.b16 %v1155
      %v1498 = vunpack.c.h.b16 %v1155
      %v1499 = vunpack.c.l.b16 %v1156
      %v1500 = vunpack.c.l.b16 %v1157
      %v1501 = vunpack.c.h.b16 %v1157
      %v1502 = vunpack.c.l.b16 %v1158
      %v1503 = vunpack.c.l.b16 %v1159
      %v1504 = vunpack.c.h.b16 %v1159
      %v1505 = vunpack.c.l.b16 %v1160
      %v1506 = vunpack.c.l.b16 %v1161
      %v1507 = vunpack.c.h.b16 %v1161
      %v1508 = vunpack.c.l.b16 %v1162
      %v1509 = vunpack.c.l.b16 %v1163
      %v1510 = vunpack.c.h.b16 %v1163
      %v1511 = vunpack.c.l.b16 %v1164
      %v1512 = vunpack.c.l.b16 %v1165
      %v1513 = vunpack.c.h.b16 %v1165
      %v1514 = vunpack.c.l.b16 %v1166
      %v1515 = vunpack.c.l.b16 %v1167
      %v1516 = vunpack.c.h.b16 %v1167
      %v1517 = vunpack.c.l.b16 %v1168
      %v1518 = vunpack.c.l.b16 %v1169
      %v1519 = vunpack.c.h.b16 %v1169
      %v1520 = vunpack.c.l.b16 %v1170
      %v1521 = vunpack.c.l.b16 %v1171
      %v1522 = vunpack.c.h.b16 %v1171
      %v1523 = vunpack.c.l.b16 %v1172
      %v1524 = vunpack.c.l.b16 %v1173
      %v1525 = vunpack.c.h.b16 %v1173
      %v1526 = vunpack.c.l.b16 %v1174
      %v1527 = vunpack.c.l.b16 %v1175
      %v1528 = vunpack.c.h.b16 %v1175
      %v1529 = vunpack.c.l.b16 %v1176
      %v1530 = vunpack.c.l.b16 %v1177
      %v1531 = vunpack.c.h.b16 %v1177
      %v1532 = vunpack.c.l.b16 %v1178
      %v1533 = vunpack.c.l.b16 %v1179
      %v1534 = vunpack.c.h.b16 %v1179
      %v1535 = vunpack.c.l.b16 %v1180
      %v1536 = vunpack.c.l.b16 %v1181
      %v1537 = vunpack.c.h.b16 %v1181
      %v1538 = vunpack.c.l.b16 %v1182
      %v1539 = vunpack.c.l.b16 %v1183
      %v1540 = vunpack.c.h.b16 %v1183
      %v1541 = vunpack.c.l.b16 %v1184
      %v1542 = vpack.c.b16 %v1497, %v1494
      %v1543 = vpack.c.b16 %v1498, %v1495
      %v1544 = vpack.c.b16 %v1499, %v1496
      %v1545 = vpack.c.b16 %v1503, %v1500
      %v1546 = vpack.c.b16 %v1504, %v1501
      %v1547 = vpack.c.b16 %v1505, %v1502
      %v1548 = vpack.c.b16 %v1509, %v1506
      %v1549 = vpack.c.b16 %v1510, %v1507
      %v1550 = vpack.c.b16 %v1511, %v1508
      %v1551 = vpack.c.b16 %v1515, %v1512
      %v1552 = vpack.c.b16 %v1516, %v1513
      %v1553 = vpack.c.b16 %v1517, %v1514
      %v1554 = vpack.c.b16 %v1521, %v1518
      %v1555 = vpack.c.b16 %v1522, %v1519
      %v1556 = vpack.c.b16 %v1523, %v1520
      %v1557 = vpack.c.b16 %v1527, %v1524
      %v1558 = vpack.c.b16 %v1528, %v1525
      %v1559 = vpack.c.b16 %v1529, %v1526
      %v1560 = vpack.c.b16 %v1533, %v1530
      %v1561 = vpack.c.b16 %v1534, %v1531
      %v1562 = vpack.c.b16 %v1535, %v1532
      %v1563 = vpack.c.b16 %v1539, %v1536
      %v1564 = vpack.c.b16 %v1540, %v1537
      %v1565 = vpack.c.b16 %v1541, %v1538
      %1590 = vmatprep.subr.bf16.mxu0 %v1543
      %1591 = vmatpush1.bf16.msra.mxu0 %v1542
      %1592 = vmatprep.subr.bf16.mxu0 %v1546
      %1593 = vmatpush1.bf16.msra.mxu0 %v1545
      %1594 = vmatprep.subr.bf16.mxu0 %v1549
      %1595 = vmatpush1.bf16.msra.mxu0 %v1548
      %1596 = vmatprep.subr.bf16.mxu0 %v1552
      %1597 = vmatpush1.bf16.msra.mxu0 %v1551
      %1598 = vmatprep.subr.bf16.mxu0 %v1555
      %1599 = vmatpush1.bf16.msra.mxu0 %v1554
      %1600 = vmatprep.subr.bf16.mxu0 %v1558
      %1601 = vmatpush1.bf16.msra.mxu0 %v1557
      %1602 = vmatprep.subr.bf16.mxu0 %v1561
      %1603 = vmatpush1.bf16.msra.mxu0 %v1560
      %1604 = vmatprep.subr.bf16.mxu0 %v1564
      %1605 = vmatpush1.bf16.msra.mxu0 %v1563
      %1606 = vmatprep.subr.bf16.mxu0 0
      %1607 = vmatpush1.bf16.msra.mxu0 0
      %1608 = vmatprep.subr.bf16.mxu0 0
      %1609 = vmatpush1.bf16.msra.mxu0 0
      %1610 = vmatprep.subr.bf16.mxu0 0
      %1611 = vmatpush1.bf16.msra.mxu0 0
      %1612 = vmatprep.subr.bf16.mxu0 0
      %1613 = vmatpush1.bf16.msra.mxu0 0
      %1614 = vmatprep.subr.bf16.mxu0 0
      %1615 = vmatpush1.bf16.msra.mxu0 0
      %1616 = vmatprep.subr.bf16.mxu0 0
      %1617 = vmatpush1.bf16.msra.mxu0 0
      %1618 = vmatprep.subr.bf16.mxu0 0
      %1619 = vmatpush1.bf16.msra.mxu0 0
      %1620 = vmatprep.subr.bf16.mxu0 0
      %1621 = vmatpush1.bf16.msra.mxu0 0
      %1622 = vmatprep.mubr.bf16.mxu0 0
      %1623 = vmatmul.mubr.bf16.gmra.mrb[0].mxu0 %v1445
      %v1624 = vpop.f32.mrb[0].mxu0
      %v1625 = vadd.f32 %v1450, %v1624
      %v1626 = vpop.f32.mrb[0].mxu0
      %v1627 = vadd.f32 %v1454, %v1626
      %v1628 = vpop.f32.mrb[0].mxu0
      %v1629 = vpop.f32.mrb[0].mxu0
      %1630 = vdwg.mxu0
      %1631 = vmatprep.subr.bf16.mxu0 0
      %1632 = vmatpush1.bf16.msra.mxu0 %v1544
      %1633 = vmatprep.subr.bf16.mxu0 0
      %1634 = vmatpush1.bf16.msra.mxu0 %v1547
      %1635 = vmatprep.subr.bf16.mxu0 0
      %1636 = vmatpush1.bf16.msra.mxu0 %v1550
      %1637 = vmatprep.subr.bf16.mxu0 0
      %1638 = vmatpush1.bf16.msra.mxu0 %v1553
      %1639 = vmatprep.subr.bf16.mxu0 0
      %1640 = vmatpush1.bf16.msra.mxu0 %v1556
      %1641 = vmatprep.subr.bf16.mxu0 0
      %1642 = vmatpush1.bf16.msra.mxu0 %v1559
      %1643 = vmatprep.subr.bf16.mxu0 0
      %1644 = vmatpush1.bf16.msra.mxu0 %v1562
      %1645 = vmatprep.subr.bf16.mxu0 0
      %1646 = vmatpush1.bf16.msra.mxu0 %v1565
      %1647 = vmatprep.subr.bf16.mxu0 0
      %1648 = vmatpush1.bf16.msra.mxu0 0
      %1649 = vmatprep.subr.bf16.mxu0 0
      %1650 = vmatpush1.bf16.msra.mxu0 0
      %1651 = vmatprep.subr.bf16.mxu0 0
      %1652 = vmatpush1.bf16.msra.mxu0 0
      %1653 = vmatprep.subr.bf16.mxu0 0
      %1654 = vmatpush1.bf16.msra.mxu0 0
      %1655 = vmatprep.subr.bf16.mxu0 0
      %1656 = vmatpush1.bf16.msra.mxu0 0
      %1657 = vmatprep.subr.bf16.mxu0 0
      %1658 = vmatpush1.bf16.msra.mxu0 0
      %1659 = vmatprep.subr.bf16.mxu0 0
      %1660 = vmatpush1.bf16.msra.mxu0 0
      %1661 = vmatprep.subr.bf16.mxu0 0
      %1662 = vmatpush1.bf16.msra.mxu0 0
      %1663 = vmatprep.mubr.bf16.mxu0 0
      %1664 = vmatmul.mubr.bf16.gmra.mrb[0].mxu0 %v1445
      %v1665 = vpop.f32.mrb[0].mxu0
      %v1666 = vadd.f32 %v1458, %v1665
      %v1667 = vpop.f32.mrb[0].mxu0
      %v1668 = vpop.f32.mrb[0].mxu0
      %v1669 = vpop.f32.mrb[0].mxu0
      %1670 = vdwg.mxu0
      %v1671 = vadd.f32 %v1193, %v1625
      %v1672 = vxor.u32 %v1671, 2147483648
      %v1673 = vmul.f32 %v1672, 1.442695
      %v1674 = vpow.pop %v1673
      %v1675 = vadd.f32 %v1674, 1.0
      %v1676 = vrcp.pop %v1675
      %v1677 = vmul.f32 1.0, %v1676
      %v1678 = vadd.f32 %v1194, %v1627
      %v1679 = vxor.u32 %v1678, 2147483648
      %v1680 = vmul.f32 %v1679, 1.442695
      %v1681 = vpow.pop %v1680
      %v1682 = vadd.f32 %v1681, 1.0
      %v1683 = vrcp.pop %v1682
      %v1684 = vmul.f32 1.0, %v1683
      %v1685 = vmul.f32 %v1677, %v1666
      %v1686 = vadd.f32 %v1195, %v1685
      %v1687 = vtanh.pop %v1686
      %v1688 = vsub.f32 1.0, %v1684
      %v1689 = vmul.f32 %v1688, %v1687
      %v1690 = vmul.f32 %v1684, %v1444
      %v1691 = vadd.f32 %v1689, %v1690
      %1692 = vst [vmem:[#allocation4] sm:$0xff] %v1443
      %1693 = vst [vmem:[#allocation5] sm:$0xff] %v1691
      %1694 = vst [vmem:[#allocation2] sm:$0xff] %v1443
      %s1695 = scalar_lea.vmem [#allocation2], 112
      %1696 = vst [vmem:[%s1695 + $0x8] sm:$0xff] %v1691
      %s1697 = scalar_lea.vmem [#allocation3], 48
      %v1698 = vld [vmem:[%s1697] sm:$0xff]
      %v1699 = vld [vmem:[%s1697 + $0x8] sm:$0xff]
      %v1700 = vld [vmem:[%s1697 + $0x10] sm:$0xff]
      %s1701 = scalar_lea.vmem [#allocation3], 288
      %v1702 = vld [vmem:[%s1701 + $0x18] sm:$0xff]
      %v1703 = vld [vmem:[%s1701 + $0x20] sm:$0xff]
      %v1704 = vld [vmem:[%s1701 + $0x28] sm:$0xff]
      %v1705 = vld [vmem:[#allocation4] sm:$0xff]
      %v1706 = vpack.c.bf16 %v1705, %v1705
      %1707 = vmatprep.subr.bf16.mxu0 %v1295
      %1708 = vmatpush1.bf16.msra.mxu0 %v1294
      %1709 = vmatprep.subr.bf16.mxu0 %v1298
      %1710 = vmatpush1.bf16.msra.mxu0 %v1297
      %1711 = vmatprep.subr.bf16.mxu0 %v1301
      %1712 = vmatpush1.bf16.msra.mxu0 %v1300
      %1713 = vmatprep.subr.bf16.mxu0 %v1304
      %1714 = vmatpush1.bf16.msra.mxu0 %v1303
      %1715 = vmatprep.subr.bf16.mxu0 %v1307
      %1716 = vmatpush1.bf16.msra.mxu0 %v1306
      %1717 = vmatprep.subr.bf16.mxu0 %v1310
      %1718 = vmatpush1.bf16.msra.mxu0 %v1309
      %1719 = vmatprep.subr.bf16.mxu0 %v1313
      %1720 = vmatpush1.bf16.msra.mxu0 %v1312
      %1721 = vmatprep.subr.bf16.mxu0 %v1316
      %1722 = vmatpush1.bf16.msra.mxu0 %v1315
      %1723 = vmatprep.subr.bf16.mxu0 0
      %1724 = vmatpush1.bf16.msra.mxu0 0
      %1725 = vmatprep.subr.bf16.mxu0 0
      %1726 = vmatpush1.bf16.msra.mxu0 0
      %1727 = vmatprep.subr.bf16.mxu0 0
      %1728 = vmatpush1.bf16.msra.mxu0 0
      %1729 = vmatprep.subr.bf16.mxu0 0
      %1730 = vmatpush1.bf16.msra.mxu0 0
      %1731 = vmatprep.subr.bf16.mxu0 0
      %1732 = vmatpush1.bf16.msra.mxu0 0
      %1733 = vmatprep.subr.bf16.mxu0 0
      %1734 = vmatpush1.bf16.msra.mxu0 0
      %1735 = vmatprep.subr.bf16.mxu0 0
      %1736 = vmatpush1.bf16.msra.mxu0 0
      %1737 = vmatprep.subr.bf16.mxu0 0
      %1738 = vmatpush1.bf16.msra.mxu0 0
      %1739 = vmatprep.mubr.bf16.mxu0 0
      %1740 = vmatmul.mubr.bf16.gmra.mrb[0].mxu0 %v1706
      %v1741 = vpop.f32.mrb[0].mxu0
      %v1742 = vadd.f32 %v1202, %v1741
      %v1743 = vpop.f32.mrb[0].mxu0
      %v1744 = vadd.f32 %v1206, %v1743
      %v1745 = vpop.f32.mrb[0].mxu0
      %v1746 = vpop.f32.mrb[0].mxu0
      %1747 = vdwg.mxu0
      %1748 = vmatprep.subr.bf16.mxu0 0
      %1749 = vmatpush1.bf16.msra.mxu0 %v1296
      %1750 = vmatprep.subr.bf16.mxu0 0
      %1751 = vmatpush1.bf16.msra.mxu0 %v1299
      %1752 = vmatprep.subr.bf16.mxu0 0
      %1753 = vmatpush1.bf16.msra.mxu0 %v1302
      %1754 = vmatprep.subr.bf16.mxu0 0
      %1755 = vmatpush1.bf16.msra.mxu0 %v1305
      %1756 = vmatprep.subr.bf16.mxu0 0
      %1757 = vmatpush1.bf16.msra.mxu0 %v1308
      %1758 = vmatprep.subr.bf16.mxu0 0
      %1759 = vmatpush1.bf16.msra.mxu0 %v1311
      %1760 = vmatprep.subr.bf16.mxu0 0
      %1761 = vmatpush1.bf16.msra.mxu0 %v1314
      %1762 = vmatprep.subr.bf16.mxu0 0
      %1763 = vmatpush1.bf16.msra.mxu0 %v1317
      %1764 = vmatprep.subr.bf16.mxu0 0
      %1765 = vmatpush1.bf16.msra.mxu0 0
      %1766 = vmatprep.subr.bf16.mxu0 0
      %1767 = vmatpush1.bf16.msra.mxu0 0
      %1768 = vmatprep.subr.bf16.mxu0 0
      %1769 = vmatpush1.bf16.msra.mxu0 0
      %1770 = vmatprep.subr.bf16.mxu0 0
      %1771 = vmatpush1.bf16.msra.mxu0 0
      %1772 = vmatprep.subr.bf16.mxu0 0
      %1773 = vmatpush1.bf16.msra.mxu0 0
      %1774 = vmatprep.subr.bf16.mxu0 0
      %1775 = vmatpush1.bf16.msra.mxu0 0
      %1776 = vmatprep.subr.bf16.mxu0 0
      %1777 = vmatpush1.bf16.msra.mxu0 0
      %1778 = vmatprep.subr.bf16.mxu0 0
      %1779 = vmatpush1.bf16.msra.mxu0 0
      %1780 = vmatprep.mubr.bf16.mxu0 0
      %1781 = vmatmul.mubr.bf16.gmra.mrb[0].mxu0 %v1706
      %v1782 = vpop.f32.mrb[0].mxu0
      %v1783 = vadd.f32 %v1210, %v1782
      %v1784 = vpop.f32.mrb[0].mxu0
      %v1785 = vpop.f32.mrb[0].mxu0
      %v1786 = vpop.f32.mrb[0].mxu0
      %1787 = vdwg.mxu0
      %v1788 = vadd.f32 %v1698, %v1742
      %v1789 = vxor.u32 %v1788, 2147483648
      %v1790 = vmul.f32 %v1789, 1.442695
      %v1791 = vpow.pop %v1790
      %v1792 = vadd.f32 %v1791, 1.0
      %v1793 = vrcp.pop %v1792
      %v1794 = vmul.f32 1.0, %v1793
      %v1795 = vadd.f32 %v1699, %v1744
      %v1796 = vxor.u32 %v1795, 2147483648
      %v1797 = vmul.f32 %v1796, 1.442695
      %v1798 = vpow.pop %v1797
      %v1799 = vadd.f32 %v1798, 1.0
      %v1800 = vrcp.pop %v1799
      %v1801 = vmul.f32 1.0, %v1800
      %v1802 = vmul.f32 %v1794, %v1783
      %v1803 = vadd.f32 %v1700, %v1802
      %v1804 = vtanh.pop %v1803
      %v1805 = vsub.f32 1.0, %v1801
      %v1806 = vmul.f32 %v1805, %v1804
      %v1807 = vmul.f32 %v1801, %v1705
      %v1808 = vadd.f32 %v1806, %v1807
      %v1809 = vld [vmem:[#allocation5] sm:$0xff]
      %v1810 = vpack.c.bf16 %v1809, %v1809
      %1811 = vmatprep.subr.bf16.mxu0 %v1543
      %1812 = vmatpush1.bf16.msra.mxu0 %v1542
      %1813 = vmatprep.subr.bf16.mxu0 %v1546
      %1814 = vmatpush1.bf16.msra.mxu0 %v1545
      %1815 = vmatprep.subr.bf16.mxu0 %v1549
      %1816 = vmatpush1.bf16.msra.mxu0 %v1548
      %1817 = vmatprep.subr.bf16.mxu0 %v1552
      %1818 = vmatpush1.bf16.msra.mxu0 %v1551
      %1819 = vmatprep.subr.bf16.mxu0 %v1555
      %1820 = vmatpush1.bf16.msra.mxu0 %v1554
      %1821 = vmatprep.subr.bf16.mxu0 %v1558
      %1822 = vmatpush1.bf16.msra.mxu0 %v1557
      %1823 = vmatprep.subr.bf16.mxu0 %v1561
      %1824 = vmatpush1.bf16.msra.mxu0 %v1560
      %1825 = vmatprep.subr.bf16.mxu0 %v1564
      %1826 = vmatpush1.bf16.msra.mxu0 %v1563
      %1827 = vmatprep.subr.bf16.mxu0 0
      %1828 = vmatpush1.bf16.msra.mxu0 0
      %1829 = vmatprep.subr.bf16.mxu0 0
      %1830 = vmatpush1.bf16.msra.mxu0 0
      %1831 = vmatprep.subr.bf16.mxu0 0
      %1832 = vmatpush1.bf16.msra.mxu0 0
      %1833 = vmatprep.subr.bf16.mxu0 0
      %1834 = vmatpush1.bf16.msra.mxu0 0
      %1835 = vmatprep.subr.bf16.mxu0 0
      %1836 = vmatpush1.bf16.msra.mxu0 0
      %1837 = vmatprep.subr.bf16.mxu0 0
      %1838 = vmatpush1.bf16.msra.mxu0 0
      %1839 = vmatprep.subr.bf16.mxu0 0
      %1840 = vmatpush1.bf16.msra.mxu0 0
      %1841 = vmatprep.subr.bf16.mxu0 0
      %1842 = vmatpush1.bf16.msra.mxu0 0
      %1843 = vmatprep.mubr.bf16.mxu0 0
      %1844 = vmatmul.mubr.bf16.gmra.mrb[0].mxu0 %v1810
      %v1845 = vpop.f32.mrb[0].mxu0
      %v1846 = vadd.f32 %v1450, %v1845
      %v1847 = vpop.f32.mrb[0].mxu0
      %v1848 = vadd.f32 %v1454, %v1847
      %v1849 = vpop.f32.mrb[0].mxu0
      %v1850 = vpop.f32.mrb[0].mxu0
      %1851 = vdwg.mxu0
      %1852 = vmatprep.subr.bf16.mxu0 0
      %1853 = vmatpush1.bf16.msra.mxu0 %v1544
      %1854 = vmatprep.subr.bf16.mxu0 0
      %1855 = vmatpush1.bf16.msra.mxu0 %v1547
      %1856 = vmatprep.subr.bf16.mxu0 0
      %1857 = vmatpush1.bf16.msra.mxu0 %v1550
      %1858 = vmatprep.subr.bf16.mxu0 0
      %1859 = vmatpush1.bf16.msra.mxu0 %v1553
      %1860 = vmatprep.subr.bf16.mxu0 0
      %1861 = vmatpush1.bf16.msra.mxu0 %v1556
      %1862 = vmatprep.subr.bf16.mxu0 0
      %1863 = vmatpush1.bf16.msra.mxu0 %v1559
      %1864 = vmatprep.subr.bf16.mxu0 0
      %1865 = vmatpush1.bf16.msra.mxu0 %v1562
      %1866 = vmatprep.subr.bf16.mxu0 0
      %1867 = vmatpush1.bf16.msra.mxu0 %v1565
      %1868 = vmatprep.subr.bf16.mxu0 0
      %1869 = vmatpush1.bf16.msra.mxu0 0
      %1870 = vmatprep.subr.bf16.mxu0 0
      %1871 = vmatpush1.bf16.msra.mxu0 0
      %1872 = vmatprep.subr.bf16.mxu0 0
      %1873 = vmatpush1.bf16.msra.mxu0 0
      %1874 = vmatprep.subr.bf16.mxu0 0
      %1875 = vmatpush1.bf16.msra.mxu0 0
      %1876 = vmatprep.subr.bf16.mxu0 0
      %1877 = vmatpush1.bf16.msra.mxu0 0
      %1878 = vmatprep.subr.bf16.mxu0 0
      %1879 = vmatpush1.bf16.msra.mxu0 0
      %1880 = vmatprep.subr.bf16.mxu0 0
      %1881 = vmatpush1.bf16.msra.mxu0 0
      %1882 = vmatprep.subr.bf16.mxu0 0
      %1883 = vmatpush1.bf16.msra.mxu0 0
      %1884 = vmatprep.mubr.bf16.mxu0 0
      %1885 = vmatmul.mubr.bf16.gmra.mrb[0].mxu0 %v1810
      %v1886 = vpop.f32.mrb[0].mxu0
      %v1887 = vadd.f32 %v1458, %v1886
      %v1888 = vpop.f32.mrb[0].mxu0
      %v1889 = vpop.f32.mrb[0].mxu0
      %v1890 = vpop.f32.mrb[0].mxu0
      %1891 = vdwg.mxu0
      %v1892 = vadd.f32 %v1702, %v1846
      %v1893 = vxor.u32 %v1892, 2147483648
      %v1894 = vmul.f32 %v1893, 1.442695
      %v1895 = vpow.pop %v1894
      %v1896 = vadd.f32 %v1895, 1.0
      %v1897 = vrcp.pop %v1896
      %v1898 = vmul.f32 1.0, %v1897
      %v1899 = vadd.f32 %v1703, %v1848
      %v1900 = vxor.u32 %v1899, 2147483648
      %v1901 = vmul.f32 %v1900, 1.442695
      %v1902 = vpow.pop %v1901
      %v1903 = vadd.f32 %v1902, 1.0
      %v1904 = vrcp.pop %v1903
      %v1905 = vmul.f32 1.0, %v1904
      %v1906 = vmul.f32 %v1898, %v1887
      %v1907 = vadd.f32 %v1704, %v1906
      %v1908 = vtanh.pop %v1907
      %v1909 = vsub.f32 1.0, %v1905
      %v1910 = vmul.f32 %v1909, %v1908
      %v1911 = vmul.f32 %v1905, %v1809
      %v1912 = vadd.f32 %v1910, %v1911
      %1913 = vst [vmem:[#allocation4] sm:$0xff] %v1808
      %1914 = vst [vmem:[#allocation5] sm:$0xff] %v1912
      %s1915 = scalar_lea.vmem [#allocation2], 16
      %1916 = vst [vmem:[%s1915] sm:$0xff] %v1808
      %s1917 = scalar_lea.vmem [#allocation2], 96
      %1918 = vst [vmem:[%s1917 + $0x8] sm:$0xff] %v1912
      %s1919 = scalar_lea.vmem [#allocation3], 96
      %v1920 = vld [vmem:[%s1919] sm:$0xff]
      %v1921 = vld [vmem:[%s1919 + $0x8] sm:$0xff]
      %v1922 = vld [vmem:[%s1919 + $0x10] sm:$0xff]
      %s1923 = scalar_lea.vmem [#allocation3], 240
      %v1924 = vld [vmem:[%s1923 + $0x18] sm:$0xff]
      %v1925 = vld [vmem:[%s1923 + $0x20] sm:$0xff]
      %v1926 = vld [vmem:[%s1923 + $0x28] sm:$0xff]
      %v1927 = vld [vmem:[#allocation4] sm:$0xff]
      %v1928 = vpack.c.bf16 %v1927, %v1927
      %1929 = vmatprep.subr.bf16.mxu0 %v1295
      %1930 = vmatpush1.bf16.msra.mxu0 %v1294
      %1931 = vmatprep.subr.bf16.mxu0 %v1298
      %1932 = vmatpush1.bf16.msra.mxu0 %v1297
      %1933 = vmatprep.subr.bf16.mxu0 %v1301
      %1934 = vmatpush1.bf16.msra.mxu0 %v1300
      %1935 = vmatprep.subr.bf16.mxu0 %v1304
      %1936 = vmatpush1.bf16.msra.mxu0 %v1303
      %1937 = vmatprep.subr.bf16.mxu0 %v1307
      %1938 = vmatpush1.bf16.msra.mxu0 %v1306
      %1939 = vmatprep.subr.bf16.mxu0 %v1310
      %1940 = vmatpush1.bf16.msra.mxu0 %v1309
      %1941 = vmatprep.subr.bf16.mxu0 %v1313
      %1942 = vmatpush1.bf16.msra.mxu0 %v1312
      %1943 = vmatprep.subr.bf16.mxu0 %v1316
      %1944 = vmatpush1.bf16.msra.mxu0 %v1315
      %1945 = vmatprep.subr.bf16.mxu0 0
      %1946 = vmatpush1.bf16.msra.mxu0 0
      %1947 = vmatprep.subr.bf16.mxu0 0
      %1948 = vmatpush1.bf16.msra.mxu0 0
      %1949 = vmatprep.subr.bf16.mxu0 0
      %1950 = vmatpush1.bf16.msra.mxu0 0
      %1951 = vmatprep.subr.bf16.mxu0 0
      %1952 = vmatpush1.bf16.msra.mxu0 0
      %1953 = vmatprep.subr.bf16.mxu0 0
      %1954 = vmatpush1.bf16.msra.mxu0 0
      %1955 = vmatprep.subr.bf16.mxu0 0
      %1956 = vmatpush1.bf16.msra.mxu0 0
      %1957 = vmatprep.subr.bf16.mxu0 0
      %1958 = vmatpush1.bf16.msra.mxu0 0
      %1959 = vmatprep.subr.bf16.mxu0 0
      %1960 = vmatpush1.bf16.msra.mxu0 0
      %1961 = vmatprep.mubr.bf16.mxu0 0
      %1962 = vmatmul.mubr.bf16.gmra.mrb[0].mxu0 %v1928
      %v1963 = vpop.f32.mrb[0].mxu0
      %v1964 = vadd.f32 %v1202, %v1963
      %v1965 = vpop.f32.mrb[0].mxu0
      %v1966 = vadd.f32 %v1206, %v1965
      %v1967 = vpop.f32.mrb[0].mxu0
      %v1968 = vpop.f32.mrb[0].mxu0
      %1969 = vdwg.mxu0
      %1970 = vmatprep.subr.bf16.mxu0 0
      %1971 = vmatpush1.bf16.msra.mxu0 %v1296
      %1972 = vmatprep.subr.bf16.mxu0 0
      %1973 = vmatpush1.bf16.msra.mxu0 %v1299
      %1974 = vmatprep.subr.bf16.mxu0 0
      %1975 = vmatpush1.bf16.msra.mxu0 %v1302
      %1976 = vmatprep.subr.bf16.mxu0 0
      %1977 = vmatpush1.bf16.msra.mxu0 %v1305
      %1978 = vmatprep.subr.bf16.mxu0 0
      %1979 = vmatpush1.bf16.msra.mxu0 %v1308
      %1980 = vmatprep.subr.bf16.mxu0 0
      %1981 = vmatpush1.bf16.msra.mxu0 %v1311
      %1982 = vmatprep.subr.bf16.mxu0 0
      %1983 = vmatpush1.bf16.msra.mxu0 %v1314
      %1984 = vmatprep.subr.bf16.mxu0 0
      %1985 = vmatpush1.bf16.msra.mxu0 %v1317
      %1986 = vmatprep.subr.bf16.mxu0 0
      %1987 = vmatpush1.bf16.msra.mxu0 0
      %1988 = vmatprep.subr.bf16.mxu0 0
      %1989 = vmatpush1.bf16.msra.mxu0 0
      %1990 = vmatprep.subr.bf16.mxu0 0
      %1991 = vmatpush1.bf16.msra.mxu0 0
      %1992 = vmatprep.subr.bf16.mxu0 0
      %1993 = vmatpush1.bf16.msra.mxu0 0
      %1994 = vmatprep.subr.bf16.mxu0 0
      %1995 = vmatpush1.bf16.msra.mxu0 0
      %1996 = vmatprep.subr.bf16.mxu0 0
      %1997 = vmatpush1.bf16.msra.mxu0 0
      %1998 = vmatprep.subr.bf16.mxu0 0
      %1999 = vmatpush1.bf16.msra.mxu0 0
      %2000 = vmatprep.subr.bf16.mxu0 0
      %2001 = vmatpush1.bf16.msra.mxu0 0
      %2002 = vmatprep.mubr.bf16.mxu0 0
      %2003 = vmatmul.mubr.bf16.gmra.mrb[0].mxu0 %v1928
      %v2004 = vpop.f32.mrb[0].mxu0
      %v2005 = vadd.f32 %v1210, %v2004
      %v2006 = vpop.f32.mrb[0].mxu0
      %v2007 = vpop.f32.mrb[0].mxu0
      %v2008 = vpop.f32.mrb[0].mxu0
      %2009 = vdwg.mxu0
      %v2010 = vadd.f32 %v1920, %v1964
      %v2011 = vxor.u32 %v2010, 2147483648
      %v2012 = vmul.f32 %v2011, 1.442695
      %v2013 = vpow.pop %v2012
      %v2014 = vadd.f32 %v2013, 1.0
      %v2015 = vrcp.pop %v2014
      %v2016 = vmul.f32 1.0, %v2015
      %v2017 = vadd.f32 %v1921, %v1966
      %v2018 = vxor.u32 %v2017, 2147483648
      %v2019 = vmul.f32 %v2018, 1.442695
      %v2020 = vpow.pop %v2019
      %v2021 = vadd.f32 %v2020, 1.0
      %v2022 = vrcp.pop %v2021
      %v2023 = vmul.f32 1.0, %v2022
      %v2024 = vmul.f32 %v2016, %v2005
      %v2025 = vadd.f32 %v1922, %v2024
      %v2026 = vtanh.pop %v2025
      %v2027 = vsub.f32 1.0, %v2023
      %v2028 = vmul.f32 %v2027, %v2026
      %v2029 = vmul.f32 %v2023, %v1927
      %v2030 = vadd.f32 %v2028, %v2029
      %v2031 = vld [vmem:[#allocation5] sm:$0xff]
      %v2032 = vpack.c.bf16 %v2031, %v2031
      %2033 = vmatprep.subr.bf16.mxu0 %v1543
      %2034 = vmatpush1.bf16.msra.mxu0 %v1542
      %2035 = vmatprep.subr.bf16.mxu0 %v1546
      %2036 = vmatpush1.bf16.msra.mxu0 %v1545
      %2037 = vmatprep.subr.bf16.mxu0 %v1549
      %2038 = vmatpush1.bf16.msra.mxu0 %v1548
      %2039 = vmatprep.subr.bf16.mxu0 %v1552
      %2040 = vmatpush1.bf16.msra.mxu0 %v1551
      %2041 = vmatprep.subr.bf16.mxu0 %v1555
      %2042 = vmatpush1.bf16.msra.mxu0 %v1554
      %2043 = vmatprep.subr.bf16.mxu0 %v1558
      %2044 = vmatpush1.bf16.msra.mxu0 %v1557
      %2045 = vmatprep.subr.bf16.mxu0 %v1561
      %2046 = vmatpush1.bf16.msra.mxu0 %v1560
      %2047 = vmatprep.subr.bf16.mxu0 %v1564
      %2048 = vmatpush1.bf16.msra.mxu0 %v1563
      %2049 = vmatprep.subr.bf16.mxu0 0
      %2050 = vmatpush1.bf16.msra.mxu0 0
      %2051 = vmatprep.subr.bf16.mxu0 0
      %2052 = vmatpush1.bf16.msra.mxu0 0
      %2053 = vmatprep.subr.bf16.mxu0 0
      %2054 = vmatpush1.bf16.msra.mxu0 0
      %2055 = vmatprep.subr.bf16.mxu0 0
      %2056 = vmatpush1.bf16.msra.mxu0 0
      %2057 = vmatprep.subr.bf16.mxu0 0
      %2058 = vmatpush1.bf16.msra.mxu0 0
      %2059 = vmatprep.subr.bf16.mxu0 0
      %2060 = vmatpush1.bf16.msra.mxu0 0
      %2061 = vmatprep.subr.bf16.mxu0 0
      %2062 = vmatpush1.bf16.msra.mxu0 0
      %2063 = vmatprep.subr.bf16.mxu0 0
      %2064 = vmatpush1.bf16.msra.mxu0 0
      %2065 = vmatprep.mubr.bf16.mxu0 0
      %2066 = vmatmul.mubr.bf16.gmra.mrb[0].mxu0 %v2032
      %v2067 = vpop.f32.mrb[0].mxu0
      %v2068 = vadd.f32 %v1450, %v2067
      %v2069 = vpop.f32.mrb[0].mxu0
      %v2070 = vadd.f32 %v1454, %v2069
      %v2071 = vpop.f32.mrb[0].mxu0
      %v2072 = vpop.f32.mrb[0].mxu0
      %2073 = vdwg.mxu0
      %2074 = vmatprep.subr.bf16.mxu0 0
      %2075 = vmatpush1.bf16.msra.mxu0 %v1544
      %2076 = vmatprep.subr.bf16.mxu0 0
      %2077 = vmatpush1.bf16.msra.mxu0 %v1547
      %2078 = vmatprep.subr.bf16.mxu0 0
      %2079 = vmatpush1.bf16.msra.mxu0 %v1550
      %2080 = vmatprep.subr.bf16.mxu0 0
      %2081 = vmatpush1.bf16.msra.mxu0 %v1553
      %2082 = vmatprep.subr.bf16.mxu0 0
      %2083 = vmatpush1.bf16.msra.mxu0 %v1556
      %2084 = vmatprep.subr.bf16.mxu0 0
      %2085 = vmatpush1.bf16.msra.mxu0 %v1559
      %2086 = vmatprep.subr.bf16.mxu0 0
      %2087 = vmatpush1.bf16.msra.mxu0 %v1562
      %2088 = vmatprep.subr.bf16.mxu0 0
      %2089 = vmatpush1.bf16.msra.mxu0 %v1565
      %2090 = vmatprep.subr.bf16.mxu0 0
      %2091 = vmatpush1.bf16.msra.mxu0 0
      %2092 = vmatprep.subr.bf16.mxu0 0
      %2093 = vmatpush1.bf16.msra.mxu0 0
      %2094 = vmatprep.subr.bf16.mxu0 0
      %2095 = vmatpush1.bf16.msra.mxu0 0
      %2096 = vmatprep.subr.bf16.mxu0 0
      %2097 = vmatpush1.bf16.msra.mxu0 0
      %2098 = vmatprep.subr.bf16.mxu0 0
      %2099 = vmatpush1.bf16.msra.mxu0 0
      %2100 = vmatprep.subr.bf16.mxu0 0
      %2101 = vmatpush1.bf16.msra.mxu0 0
      %2102 = vmatprep.subr.bf16.mxu0 0
      %2103 = vmatpush1.bf16.msra.mxu0 0
      %2104 = vmatprep.subr.bf16.mxu0 0
      %2105 = vmatpush1.bf16.msra.mxu0 0
      %2106 = vmatprep.mubr.bf16.mxu0 0
      %2107 = vmatmul.mubr.bf16.gmra.mrb[0].mxu0 %v2032
      %v2108 = vpop.f32.mrb[0].mxu0
      %v2109 = vadd.f32 %v1458, %v2108
      %v2110 = vpop.f32.mrb[0].mxu0
      %v2111 = vpop.f32.mrb[0].mxu0
      %v2112 = vpop.f32.mrb[0].mxu0
      %2113 = vdwg.mxu0
      %v2114 = vadd.f32 %v1924, %v2068
      %v2115 = vxor.u32 %v2114, 2147483648
      %v2116 = vmul.f32 %v2115, 1.442695
      %v2117 = vpow.pop %v2116
      %v2118 = vadd.f32 %v2117, 1.0
      %v2119 = vrcp.pop %v2118
      %v2120 = vmul.f32 1.0, %v2119
      %v2121 = vadd.f32 %v1925, %v2070
      %v2122 = vxor.u32 %v2121, 2147483648
      %v2123 = vmul.f32 %v2122, 1.442695
      %v2124 = vpow.pop %v2123
      %v2125 = vadd.f32 %v2124, 1.0
      %v2126 = vrcp.pop %v2125
      %v2127 = vmul.f32 1.0, %v2126
      %v2128 = vmul.f32 %v2120, %v2109
      %v2129 = vadd.f32 %v1926, %v2128
      %v2130 = vtanh.pop %v2129
      %v2131 = vsub.f32 1.0, %v2127
      %v2132 = vmul.f32 %v2131, %v2130
      %v2133 = vmul.f32 %v2127, %v2031
      %v2134 = vadd.f32 %v2132, %v2133
      %2135 = vst [vmem:[#allocation4] sm:$0xff] %v2030
      %2136 = vst [vmem:[#allocation5] sm:$0xff] %v2134
      %s2137 = scalar_lea.vmem [#allocation2], 32
      %2138 = vst [vmem:[%s2137] sm:$0xff] %v2030
      %s2139 = scalar_lea.vmem [#allocation2], 80
      %2140 = vst [vmem:[%s2139 + $0x8] sm:$0xff] %v2134
      %s2141 = scalar_lea.vmem [#allocation3], 144
      %v2142 = vld [vmem:[%s2141] sm:$0xff]
      %v2143 = vld [vmem:[%s2141 + $0x8] sm:$0xff]
      %v2144 = vld [vmem:[%s2141 + $0x10] sm:$0xff]
      %s2145 = scalar_lea.vmem [#allocation3], 192
      %v2146 = vld [vmem:[%s2145 + $0x18] sm:$0xff]
      %v2147 = vld [vmem:[%s2145 + $0x20] sm:$0xff]
      %v2148 = vld [vmem:[%s2145 + $0x28] sm:$0xff]
      %v2149 = vld [vmem:[#allocation4] sm:$0xff]
      %v2150 = vpack.c.bf16 %v2149, %v2149
      %2151 = vmatprep.subr.bf16.mxu0 %v1295
      %2152 = vmatpush1.bf16.msra.mxu0 %v1294
      %2153 = vmatprep.subr.bf16.mxu0 %v1298
      %2154 = vmatpush1.bf16.msra.mxu0 %v1297
      %2155 = vmatprep.subr.bf16.mxu0 %v1301
      %2156 = vmatpush1.bf16.msra.mxu0 %v1300
      %2157 = vmatprep.subr.bf16.mxu0 %v1304
      %2158 = vmatpush1.bf16.msra.mxu0 %v1303
      %2159 = vmatprep.subr.bf16.mxu0 %v1307
      %2160 = vmatpush1.bf16.msra.mxu0 %v1306
      %2161 = vmatprep.subr.bf16.mxu0 %v1310
      %2162 = vmatpush1.bf16.msra.mxu0 %v1309
      %2163 = vmatprep.subr.bf16.mxu0 %v1313
      %2164 = vmatpush1.bf16.msra.mxu0 %v1312
      %2165 = vmatprep.subr.bf16.mxu0 %v1316
      %2166 = vmatpush1.bf16.msra.mxu0 %v1315
      %2167 = vmatprep.subr.bf16.mxu0 0
      %2168 = vmatpush1.bf16.msra.mxu0 0
      %2169 = vmatprep.subr.bf16.mxu0 0
      %2170 = vmatpush1.bf16.msra.mxu0 0
      %2171 = vmatprep.subr.bf16.mxu0 0
      %2172 = vmatpush1.bf16.msra.mxu0 0
      %2173 = vmatprep.subr.bf16.mxu0 0
      %2174 = vmatpush1.bf16.msra.mxu0 0
      %2175 = vmatprep.subr.bf16.mxu0 0
      %2176 = vmatpush1.bf16.msra.mxu0 0
      %2177 = vmatprep.subr.bf16.mxu0 0
      %2178 = vmatpush1.bf16.msra.mxu0 0
      %2179 = vmatprep.subr.bf16.mxu0 0
      %2180 = vmatpush1.bf16.msra.mxu0 0
      %2181 = vmatprep.subr.bf16.mxu0 0
      %2182 = vmatpush1.bf16.msra.mxu0 0
      %2183 = vmatprep.mubr.bf16.mxu0 0
      %2184 = vmatmul.mubr.bf16.gmra.mrb[0].mxu0 %v2150
      %v2185 = vpop.f32.mrb[0].mxu0
      %v2186 = vadd.f32 %v1202, %v2185
      %v2187 = vpop.f32.mrb[0].mxu0
      %v2188 = vadd.f32 %v1206, %v2187
      %v2189 = vpop.f32.mrb[0].mxu0
      %v2190 = vpop.f32.mrb[0].mxu0
      %2191 = vdwg.mxu0
      %2192 = vmatprep.subr.bf16.mxu0 0
      %2193 = vmatpush1.bf16.msra.mxu0 %v1296
      %2194 = vmatprep.subr.bf16.mxu0 0
      %2195 = vmatpush1.bf16.msra.mxu0 %v1299
      %2196 = vmatprep.subr.bf16.mxu0 0
      %2197 = vmatpush1.bf16.msra.mxu0 %v1302
      %2198 = vmatprep.subr.bf16.mxu0 0
      %2199 = vmatpush1.bf16.msra.mxu0 %v1305
      %2200 = vmatprep.subr.bf16.mxu0 0
      %2201 = vmatpush1.bf16.msra.mxu0 %v1308
      %2202 = vmatprep.subr.bf16.mxu0 0
      %2203 = vmatpush1.bf16.msra.mxu0 %v1311
      %2204 = vmatprep.subr.bf16.mxu0 0
      %2205 = vmatpush1.bf16.msra.mxu0 %v1314
      %2206 = vmatprep.subr.bf16.mxu0 0
      %2207 = vmatpush1.bf16.msra.mxu0 %v1317
      %2208 = vmatprep.subr.bf16.mxu0 0
      %2209 = vmatpush1.bf16.msra.mxu0 0
      %2210 = vmatprep.subr.bf16.mxu0 0
      %2211 = vmatpush1.bf16.msra.mxu0 0
      %2212 = vmatprep.subr.bf16.mxu0 0
      %2213 = vmatpush1.bf16.msra.mxu0 0
      %2214 = vmatprep.subr.bf16.mxu0 0
      %2215 = vmatpush1.bf16.msra.mxu0 0
      %2216 = vmatprep.subr.bf16.mxu0 0
      %2217 = vmatpush1.bf16.msra.mxu0 0
      %2218 = vmatprep.subr.bf16.mxu0 0
      %2219 = vmatpush1.bf16.msra.mxu0 0
      %2220 = vmatprep.subr.bf16.mxu0 0
      %2221 = vmatpush1.bf16.msra.mxu0 0
      %2222 = vmatprep.subr.bf16.mxu0 0
      %2223 = vmatpush1.bf16.msra.mxu0 0
      %2224 = vmatprep.mubr.bf16.mxu0 0
      %2225 = vmatmul.mubr.bf16.gmra.mrb[0].mxu0 %v2150
      %v2226 = vpop.f32.mrb[0].mxu0
      %v2227 = vadd.f32 %v1210, %v2226
      %v2228 = vpop.f32.mrb[0].mxu0
      %v2229 = vpop.f32.mrb[0].mxu0
      %v2230 = vpop.f32.mrb[0].mxu0
      %2231 = vdwg.mxu0
      %v2232 = vadd.f32 %v2142, %v2186
      %v2233 = vxor.u32 %v2232, 2147483648
      %v2234 = vmul.f32 %v2233, 1.442695
      %v2235 = vpow.pop %v2234
      %v2236 = vadd.f32 %v2235, 1.0
      %v2237 = vrcp.pop %v2236
      %v2238 = vmul.f32 1.0, %v2237
      %v2239 = vadd.f32 %v2143, %v2188
      %v2240 = vxor.u32 %v2239, 2147483648
      %v2241 = vmul.f32 %v2240, 1.442695
      %v2242 = vpow.pop %v2241
      %v2243 = vadd.f32 %v2242, 1.0
      %v2244 = vrcp.pop %v2243
      %v2245 = vmul.f32 1.0, %v2244
      %v2246 = vmul.f32 %v2238, %v2227
      %v2247 = vadd.f32 %v2144, %v2246
      %v2248 = vtanh.pop %v2247
      %v2249 = vsub.f32 1.0, %v2245
      %v2250 = vmul.f32 %v2249, %v2248
      %v2251 = vmul.f32 %v2245, %v2149
      %v2252 = vadd.f32 %v2250, %v2251
      %v2253 = vld [vmem:[#allocation5] sm:$0xff]
      %v2254 = vpack.c.bf16 %v2253, %v2253
      %2255 = vmatprep.subr.bf16.mxu0 %v1543
      %2256 = vmatpush1.bf16.msra.mxu0 %v1542
      %2257 = vmatprep.subr.bf16.mxu0 %v1546
      %2258 = vmatpush1.bf16.msra.mxu0 %v1545
      %2259 = vmatprep.subr.bf16.mxu0 %v1549
      %2260 = vmatpush1.bf16.msra.mxu0 %v1548
      %2261 = vmatprep.subr.bf16.mxu0 %v1552
      %2262 = vmatpush1.bf16.msra.mxu0 %v1551
      %2263 = vmatprep.subr.bf16.mxu0 %v1555
      %2264 = vmatpush1.bf16.msra.mxu0 %v1554
      %2265 = vmatprep.subr.bf16.mxu0 %v1558
      %2266 = vmatpush1.bf16.msra.mxu0 %v1557
      %2267 = vmatprep.subr.bf16.mxu0 %v1561
      %2268 = vmatpush1.bf16.msra.mxu0 %v1560
      %2269 = vmatprep.subr.bf16.mxu0 %v1564
      %2270 = vmatpush1.bf16.msra.mxu0 %v1563
      %2271 = vmatprep.subr.bf16.mxu0 0
      %2272 = vmatpush1.bf16.msra.mxu0 0
      %2273 = vmatprep.subr.bf16.mxu0 0
      %2274 = vmatpush1.bf16.msra.mxu0 0
      %2275 = vmatprep.subr.bf16.mxu0 0
      %2276 = vmatpush1.bf16.msra.mxu0 0
      %2277 = vmatprep.subr.bf16.mxu0 0
      %2278 = vmatpush1.bf16.msra.mxu0 0
      %2279 = vmatprep.subr.bf16.mxu0 0
      %2280 = vmatpush1.bf16.msra.mxu0 0
      %2281 = vmatprep.subr.bf16.mxu0 0
      %2282 = vmatpush1.bf16.msra.mxu0 0
      %2283 = vmatprep.subr.bf16.mxu0 0
      %2284 = vmatpush1.bf16.msra.mxu0 0
      %2285 = vmatprep.subr.bf16.mxu0 0
      %2286 = vmatpush1.bf16.msra.mxu0 0
      %2287 = vmatprep.mubr.bf16.mxu0 0
      %2288 = vmatmul.mubr.bf16.gmra.mrb[0].mxu0 %v2254
      %v2289 = vpop.f32.mrb[0].mxu0
      %v2290 = vadd.f32 %v1450, %v2289
      %v2291 = vpop.f32.mrb[0].mxu0
      %v2292 = vadd.f32 %v1454, %v2291
      %v2293 = vpop.f32.mrb[0].mxu0
      %v2294 = vpop.f32.mrb[0].mxu0
      %2295 = vdwg.mxu0
      %2296 = vmatprep.subr.bf16.mxu0 0
      %2297 = vmatpush1.bf16.msra.mxu0 %v1544
      %2298 = vmatprep.subr.bf16.mxu0 0
      %2299 = vmatpush1.bf16.msra.mxu0 %v1547
      %2300 = vmatprep.subr.bf16.mxu0 0
      %2301 = vmatpush1.bf16.msra.mxu0 %v1550
      %2302 = vmatprep.subr.bf16.mxu0 0
      %2303 = vmatpush1.bf16.msra.mxu0 %v1553
      %2304 = vmatprep.subr.bf16.mxu0 0
      %2305 = vmatpush1.bf16.msra.mxu0 %v1556
      %2306 = vmatprep.subr.bf16.mxu0 0
      %2307 = vmatpush1.bf16.msra.mxu0 %v1559
      %2308 = vmatprep.subr.bf16.mxu0 0
      %2309 = vmatpush1.bf16.msra.mxu0 %v1562
      %2310 = vmatprep.subr.bf16.mxu0 0
      %2311 = vmatpush1.bf16.msra.mxu0 %v1565
      %2312 = vmatprep.subr.bf16.mxu0 0
      %2313 = vmatpush1.bf16.msra.mxu0 0
      %2314 = vmatprep.subr.bf16.mxu0 0
      %2315 = vmatpush1.bf16.msra.mxu0 0
      %2316 = vmatprep.subr.bf16.mxu0 0
      %2317 = vmatpush1.bf16.msra.mxu0 0
      %2318 = vmatprep.subr.bf16.mxu0 0
      %2319 = vmatpush1.bf16.msra.mxu0 0
      %2320 = vmatprep.subr.bf16.mxu0 0
      %2321 = vmatpush1.bf16.msra.mxu0 0
      %2322 = vmatprep.subr.bf16.mxu0 0
      %2323 = vmatpush1.bf16.msra.mxu0 0
      %2324 = vmatprep.subr.bf16.mxu0 0
      %2325 = vmatpush1.bf16.msra.mxu0 0
      %2326 = vmatprep.subr.bf16.mxu0 0
      %2327 = vmatpush1.bf16.msra.mxu0 0
      %2328 = vmatprep.mubr.bf16.mxu0 0
      %2329 = vmatmul.mubr.bf16.gmra.mrb[0].mxu0 %v2254
      %v2330 = vpop.f32.mrb[0].mxu0
      %v2331 = vadd.f32 %v1458, %v2330
      %v2332 = vpop.f32.mrb[0].mxu0
      %v2333 = vpop.f32.mrb[0].mxu0
      %v2334 = vpop.f32.mrb[0].mxu0
      %2335 = vdwg.mxu0
      %v2336 = vadd.f32 %v2146, %v2290
      %v2337 = vxor.u32 %v2336, 2147483648
      %v2338 = vmul.f32 %v2337, 1.442695
      %v2339 = vpow.pop %v2338
      %v2340 = vadd.f32 %v2339, 1.0
      %v2341 = vrcp.pop %v2340
      %v2342 = vmul.f32 1.0, %v2341
      %v2343 = vadd.f32 %v2147, %v2292
      %v2344 = vxor.u32 %v2343, 2147483648
      %v2345 = vmul.f32 %v2344, 1.442695
      %v2346 = vpow.pop %v2345
      %v2347 = vadd.f32 %v2346, 1.0
      %v2348 = vrcp.pop %v2347
      %v2349 = vmul.f32 1.0, %v2348
      %v2350 = vmul.f32 %v2342, %v2331
      %v2351 = vadd.f32 %v2148, %v2350
      %v2352 = vtanh.pop %v2351
      %v2353 = vsub.f32 1.0, %v2349
      %v2354 = vmul.f32 %v2353, %v2352
      %v2355 = vmul.f32 %v2349, %v2253
      %v2356 = vadd.f32 %v2354, %v2355
      %2357 = vst [vmem:[#allocation4] sm:$0xff] %v2252
      %2358 = vst [vmem:[#allocation5] sm:$0xff] %v2356
      %s2359 = scalar_lea.vmem [#allocation2], 48
      %2360 = vst [vmem:[%s2359] sm:$0xff] %v2252
      %s2361 = scalar_lea.vmem [#allocation2], 64
      %2362 = vst [vmem:[%s2361 + $0x8] sm:$0xff] %v2356
      %v2363 = vld [vmem:[%s2145] sm:$0xff]
      %v2364 = vld [vmem:[%s2145 + $0x8] sm:$0xff]
      %v2365 = vld [vmem:[%s2145 + $0x10] sm:$0xff]
      %v2366 = vld [vmem:[%s2141 + $0x18] sm:$0xff]
      %v2367 = vld [vmem:[%s2141 + $0x20] sm:$0xff]
      %v2368 = vld [vmem:[%s2141 + $0x28] sm:$0xff]
      %v2369 = vld [vmem:[#allocation4] sm:$0xff]
      %v2370 = vpack.c.bf16 %v2369, %v2369
      %2371 = vmatprep.subr.bf16.mxu0 %v1295
      %2372 = vmatpush1.bf16.msra.mxu0 %v1294
      %2373 = vmatprep.subr.bf16.mxu0 %v1298
      %2374 = vmatpush1.bf16.msra.mxu0 %v1297
      %2375 = vmatprep.subr.bf16.mxu0 %v1301
      %2376 = vmatpush1.bf16.msra.mxu0 %v1300
      %2377 = vmatprep.subr.bf16.mxu0 %v1304
      %2378 = vmatpush1.bf16.msra.mxu0 %v1303
      %2379 = vmatprep.subr.bf16.mxu0 %v1307
      %2380 = vmatpush1.bf16.msra.mxu0 %v1306
      %2381 = vmatprep.subr.bf16.mxu0 %v1310
      %2382 = vmatpush1.bf16.msra.mxu0 %v1309
      %2383 = vmatprep.subr.bf16.mxu0 %v1313
      %2384 = vmatpush1.bf16.msra.mxu0 %v1312
      %2385 = vmatprep.subr.bf16.mxu0 %v1316
      %2386 = vmatpush1.bf16.msra.mxu0 %v1315
      %2387 = vmatprep.subr.bf16.mxu0 0
      %2388 = vmatpush1.bf16.msra.mxu0 0
      %2389 = vmatprep.subr.bf16.mxu0 0
      %2390 = vmatpush1.bf16.msra.mxu0 0
      %2391 = vmatprep.subr.bf16.mxu0 0
      %2392 = vmatpush1.bf16.msra.mxu0 0
      %2393 = vmatprep.subr.bf16.mxu0 0
      %2394 = vmatpush1.bf16.msra.mxu0 0
      %2395 = vmatprep.subr.bf16.mxu0 0
      %2396 = vmatpush1.bf16.msra.mxu0 0
      %2397 = vmatprep.subr.bf16.mxu0 0
      %2398 = vmatpush1.bf16.msra.mxu0 0
      %2399 = vmatprep.subr.bf16.mxu0 0
      %2400 = vmatpush1.bf16.msra.mxu0 0
      %2401 = vmatprep.subr.bf16.mxu0 0
      %2402 = vmatpush1.bf16.msra.mxu0 0
      %2403 = vmatprep.mubr.bf16.mxu0 0
      %2404 = vmatmul.mubr.bf16.gmra.mrb[0].mxu0 %v2370
      %v2405 = vpop.f32.mrb[0].mxu0
      %v2406 = vadd.f32 %v1202, %v2405
      %v2407 = vpop.f32.mrb[0].mxu0
      %v2408 = vadd.f32 %v1206, %v2407
      %v2409 = vpop.f32.mrb[0].mxu0
      %v2410 = vpop.f32.mrb[0].mxu0
      %2411 = vdwg.mxu0
      %2412 = vmatprep.subr.bf16.mxu0 0
      %2413 = vmatpush1.bf16.msra.mxu0 %v1296
      %2414 = vmatprep.subr.bf16.mxu0 0
      %2415 = vmatpush1.bf16.msra.mxu0 %v1299
      %2416 = vmatprep.subr.bf16.mxu0 0
      %2417 = vmatpush1.bf16.msra.mxu0 %v1302
      %2418 = vmatprep.subr.bf16.mxu0 0
      %2419 = vmatpush1.bf16.msra.mxu0 %v1305
      %2420 = vmatprep.subr.bf16.mxu0 0
      %2421 = vmatpush1.bf16.msra.mxu0 %v1308
      %2422 = vmatprep.subr.bf16.mxu0 0
      %2423 = vmatpush1.bf16.msra.mxu0 %v1311
      %2424 = vmatprep.subr.bf16.mxu0 0
      %2425 = vmatpush1.bf16.msra.mxu0 %v1314
      %2426 = vmatprep.subr.bf16.mxu0 0
      %2427 = vmatpush1.bf16.msra.mxu0 %v1317
      %2428 = vmatprep.subr.bf16.mxu0 0
      %2429 = vmatpush1.bf16.msra.mxu0 0
      %2430 = vmatprep.subr.bf16.mxu0 0
      %2431 = vmatpush1.bf16.msra.mxu0 0
      %2432 = vmatprep.subr.bf16.mxu0 0
      %2433 = vmatpush1.bf16.msra.mxu0 0
      %2434 = vmatprep.subr.bf16.mxu0 0
      %2435 = vmatpush1.bf16.msra.mxu0 0
      %2436 = vmatprep.subr.bf16.mxu0 0
      %2437 = vmatpush1.bf16.msra.mxu0 0
      %2438 = vmatprep.subr.bf16.mxu0 0
      %2439 = vmatpush1.bf16.msra.mxu0 0
      %2440 = vmatprep.subr.bf16.mxu0 0
      %2441 = vmatpush1.bf16.msra.mxu0 0
      %2442 = vmatprep.subr.bf16.mxu0 0
      %2443 = vmatpush1.bf16.msra.mxu0 0
      %2444 = vmatprep.mubr.bf16.mxu0 0
      %2445 = vmatmul.mubr.bf16.gmra.mrb[0].mxu0 %v2370
      %v2446 = vpop.f32.mrb[0].mxu0
      %v2447 = vadd.f32 %v1210, %v2446
      %v2448 = vpop.f32.mrb[0].mxu0
      %v2449 = vpop.f32.mrb[0].mxu0
      %v2450 = vpop.f32.mrb[0].mxu0
      %2451 = vdwg.mxu0
      %v2452 = vadd.f32 %v2363, %v2406
      %v2453 = vxor.u32 %v2452, 2147483648
      %v2454 = vmul.f32 %v2453, 1.442695
      %v2455 = vpow.pop %v2454
      %v2456 = vadd.f32 %v2455, 1.0
      %v2457 = vrcp.pop %v2456
      %v2458 = vmul.f32 1.0, %v2457
      %v2459 = vadd.f32 %v2364, %v2408
      %v2460 = vxor.u32 %v2459, 2147483648
      %v2461 = vmul.f32 %v2460, 1.442695
      %v2462 = vpow.pop %v2461
      %v2463 = vadd.f32 %v2462, 1.0
      %v2464 = vrcp.pop %v2463
      %v2465 = vmul.f32 1.0, %v2464
      %v2466 = vmul.f32 %v2458, %v2447
      %v2467 = vadd.f32 %v2365, %v2466
      %v2468 = vtanh.pop %v2467
      %v2469 = vsub.f32 1.0, %v2465
      %v2470 = vmul.f32 %v2469, %v2468
      %v2471 = vmul.f32 %v2465, %v2369
      %v2472 = vadd.f32 %v2470, %v2471
      %v2473 = vld [vmem:[#allocation5] sm:$0xff]
      %v2474 = vpack.c.bf16 %v2473, %v2473
      %2475 = vmatprep.subr.bf16.mxu0 %v1543
      %2476 = vmatpush1.bf16.msra.mxu0 %v1542
      %2477 = vmatprep.subr.bf16.mxu0 %v1546
      %2478 = vmatpush1.bf16.msra.mxu0 %v1545
      %2479 = vmatprep.subr.bf16.mxu0 %v1549
      %2480 = vmatpush1.bf16.msra.mxu0 %v1548
      %2481 = vmatprep.subr.bf16.mxu0 %v1552
      %2482 = vmatpush1.bf16.msra.mxu0 %v1551
      %2483 = vmatprep.subr.bf16.mxu0 %v1555
      %2484 = vmatpush1.bf16.msra.mxu0 %v1554
      %2485 = vmatprep.subr.bf16.mxu0 %v1558
      %2486 = vmatpush1.bf16.msra.mxu0 %v1557
      %2487 = vmatprep.subr.bf16.mxu0 %v1561
      %2488 = vmatpush1.bf16.msra.mxu0 %v1560
      %2489 = vmatprep.subr.bf16.mxu0 %v1564
      %2490 = vmatpush1.bf16.msra.mxu0 %v1563
      %2491 = vmatprep.subr.bf16.mxu0 0
      %2492 = vmatpush1.bf16.msra.mxu0 0
      %2493 = vmatprep.subr.bf16.mxu0 0
      %2494 = vmatpush1.bf16.msra.mxu0 0
      %2495 = vmatprep.subr.bf16.mxu0 0
      %2496 = vmatpush1.bf16.msra.mxu0 0
      %2497 = vmatprep.subr.bf16.mxu0 0
      %2498 = vmatpush1.bf16.msra.mxu0 0
      %2499 = vmatprep.subr.bf16.mxu0 0
      %2500 = vmatpush1.bf16.msra.mxu0 0
      %2501 = vmatprep.subr.bf16.mxu0 0
      %2502 = vmatpush1.bf16.msra.mxu0 0
      %2503 = vmatprep.subr.bf16.mxu0 0
      %2504 = vmatpush1.bf16.msra.mxu0 0
      %2505 = vmatprep.subr.bf16.mxu0 0
      %2506 = vmatpush1.bf16.msra.mxu0 0
      %2507 = vmatprep.mubr.bf16.mxu0 0
      %2508 = vmatmul.mubr.bf16.gmra.mrb[0].mxu0 %v2474
      %v2509 = vpop.f32.mrb[0].mxu0
      %v2510 = vadd.f32 %v1450, %v2509
      %v2511 = vpop.f32.mrb[0].mxu0
      %v2512 = vadd.f32 %v1454, %v2511
      %v2513 = vpop.f32.mrb[0].mxu0
      %v2514 = vpop.f32.mrb[0].mxu0
      %2515 = vdwg.mxu0
      %2516 = vmatprep.subr.bf16.mxu0 0
      %2517 = vmatpush1.bf16.msra.mxu0 %v1544
      %2518 = vmatprep.subr.bf16.mxu0 0
      %2519 = vmatpush1.bf16.msra.mxu0 %v1547
      %2520 = vmatprep.subr.bf16.mxu0 0
      %2521 = vmatpush1.bf16.msra.mxu0 %v1550
      %2522 = vmatprep.subr.bf16.mxu0 0
      %2523 = vmatpush1.bf16.msra.mxu0 %v1553
      %2524 = vmatprep.subr.bf16.mxu0 0
      %2525 = vmatpush1.bf16.msra.mxu0 %v1556
      %2526 = vmatprep.subr.bf16.mxu0 0
      %2527 = vmatpush1.bf16.msra.mxu0 %v1559
      %2528 = vmatprep.subr.bf16.mxu0 0
      %2529 = vmatpush1.bf16.msra.mxu0 %v1562
      %2530 = vmatprep.subr.bf16.mxu0 0
      %2531 = vmatpush1.bf16.msra.mxu0 %v1565
      %2532 = vmatprep.subr.bf16.mxu0 0
      %2533 = vmatpush1.bf16.msra.mxu0 0
      %2534 = vmatprep.subr.bf16.mxu0 0
      %2535 = vmatpush1.bf16.msra.mxu0 0
      %2536 = vmatprep.subr.bf16.mxu0 0
      %2537 = vmatpush1.bf16.msra.mxu0 0
      %2538 = vmatprep.subr.bf16.mxu0 0
      %2539 = vmatpush1.bf16.msra.mxu0 0
      %2540 = vmatprep.subr.bf16.mxu0 0
      %2541 = vmatpush1.bf16.msra.mxu0 0
      %2542 = vmatprep.subr.bf16.mxu0 0
      %2543 = vmatpush1.bf16.msra.mxu0 0
      %2544 = vmatprep.subr.bf16.mxu0 0
      %2545 = vmatpush1.bf16.msra.mxu0 0
      %2546 = vmatprep.subr.bf16.mxu0 0
      %2547 = vmatpush1.bf16.msra.mxu0 0
      %2548 = vmatprep.mubr.bf16.mxu0 0
      %2549 = vmatmul.mubr.bf16.gmra.mrb[0].mxu0 %v2474
      %v2550 = vpop.f32.mrb[0].mxu0
      %v2551 = vadd.f32 %v1458, %v2550
      %v2552 = vpop.f32.mrb[0].mxu0
      %v2553 = vpop.f32.mrb[0].mxu0
      %v2554 = vpop.f32.mrb[0].mxu0
      %2555 = vdwg.mxu0
      %v2556 = vadd.f32 %v2366, %v2510
      %v2557 = vxor.u32 %v2556, 2147483648
      %v2558 = vmul.f32 %v2557, 1.442695
      %v2559 = vpow.pop %v2558
      %v2560 = vadd.f32 %v2559, 1.0
      %v2561 = vrcp.pop %v2560
      %v2562 = vmul.f32 1.0, %v2561
      %v2563 = vadd.f32 %v2367, %v2512
      %v2564 = vxor.u32 %v2563, 2147483648
      %v2565 = vmul.f32 %v2564, 1.442695
      %v2566 = vpow.pop %v2565
      %v2567 = vadd.f32 %v2566, 1.0
      %v2568 = vrcp.pop %v2567
      %v2569 = vmul.f32 1.0, %v2568
      %v2570 = vmul.f32 %v2562, %v2551
      %v2571 = vadd.f32 %v2368, %v2570
      %v2572 = vtanh.pop %v2571
      %v2573 = vsub.f32 1.0, %v2569
      %v2574 = vmul.f32 %v2573, %v2572
      %v2575 = vmul.f32 %v2569, %v2473
      %v2576 = vadd.f32 %v2574, %v2575
      %2577 = vst [vmem:[#allocation4] sm:$0xff] %v2472
      %2578 = vst [vmem:[#allocation5] sm:$0xff] %v2576
      %2579 = vst [vmem:[%s2361] sm:$0xff] %v2472
      %2580 = vst [vmem:[%s2359 + $0x8] sm:$0xff] %v2576
      %v2581 = vld [vmem:[%s1923] sm:$0xff]
      %v2582 = vld [vmem:[%s1923 + $0x8] sm:$0xff]
      %v2583 = vld [vmem:[%s1923 + $0x10] sm:$0xff]
      %v2584 = vld [vmem:[%s1919 + $0x18] sm:$0xff]
      %v2585 = vld [vmem:[%s1919 + $0x20] sm:$0xff]
      %v2586 = vld [vmem:[%s1919 + $0x28] sm:$0xff]
      %v2587 = vld [vmem:[#allocation4] sm:$0xff]
      %v2588 = vpack.c.bf16 %v2587, %v2587
      %2589 = vmatprep.subr.bf16.mxu0 %v1295
      %2590 = vmatpush1.bf16.msra.mxu0 %v1294
      %2591 = vmatprep.subr.bf16.mxu0 %v1298
      %2592 = vmatpush1.bf16.msra.mxu0 %v1297
      %2593 = vmatprep.subr.bf16.mxu0 %v1301
      %2594 = vmatpush1.bf16.msra.mxu0 %v1300
      %2595 = vmatprep.subr.bf16.mxu0 %v1304
      %2596 = vmatpush1.bf16.msra.mxu0 %v1303
      %2597 = vmatprep.subr.bf16.mxu0 %v1307
      %2598 = vmatpush1.bf16.msra.mxu0 %v1306
      %2599 = vmatprep.subr.bf16.mxu0 %v1310
      %2600 = vmatpush1.bf16.msra.mxu0 %v1309
      %2601 = vmatprep.subr.bf16.mxu0 %v1313
      %2602 = vmatpush1.bf16.msra.mxu0 %v1312
      %2603 = vmatprep.subr.bf16.mxu0 %v1316
      %2604 = vmatpush1.bf16.msra.mxu0 %v1315
      %2605 = vmatprep.subr.bf16.mxu0 0
      %2606 = vmatpush1.bf16.msra.mxu0 0
      %2607 = vmatprep.subr.bf16.mxu0 0
      %2608 = vmatpush1.bf16.msra.mxu0 0
      %2609 = vmatprep.subr.bf16.mxu0 0
      %2610 = vmatpush1.bf16.msra.mxu0 0
      %2611 = vmatprep.subr.bf16.mxu0 0
      %2612 = vmatpush1.bf16.msra.mxu0 0
      %2613 = vmatprep.subr.bf16.mxu0 0
      %2614 = vmatpush1.bf16.msra.mxu0 0
      %2615 = vmatprep.subr.bf16.mxu0 0
      %2616 = vmatpush1.bf16.msra.mxu0 0
      %2617 = vmatprep.subr.bf16.mxu0 0
      %2618 = vmatpush1.bf16.msra.mxu0 0
      %2619 = vmatprep.subr.bf16.mxu0 0
      %2620 = vmatpush1.bf16.msra.mxu0 0
      %2621 = vmatprep.mubr.bf16.mxu0 0
      %2622 = vmatmul.mubr.bf16.gmra.mrb[0].mxu0 %v2588
      %v2623 = vpop.f32.mrb[0].mxu0
      %v2624 = vadd.f32 %v1202, %v2623
      %v2625 = vpop.f32.mrb[0].mxu0
      %v2626 = vadd.f32 %v1206, %v2625
      %v2627 = vpop.f32.mrb[0].mxu0
      %v2628 = vpop.f32.mrb[0].mxu0
      %2629 = vdwg.mxu0
      %2630 = vmatprep.subr.bf16.mxu0 0
      %2631 = vmatpush1.bf16.msra.mxu0 %v1296
      %2632 = vmatprep.subr.bf16.mxu0 0
      %2633 = vmatpush1.bf16.msra.mxu0 %v1299
      %2634 = vmatprep.subr.bf16.mxu0 0
      %2635 = vmatpush1.bf16.msra.mxu0 %v1302
      %2636 = vmatprep.subr.bf16.mxu0 0
      %2637 = vmatpush1.bf16.msra.mxu0 %v1305
      %2638 = vmatprep.subr.bf16.mxu0 0
      %2639 = vmatpush1.bf16.msra.mxu0 %v1308
      %2640 = vmatprep.subr.bf16.mxu0 0
      %2641 = vmatpush1.bf16.msra.mxu0 %v1311
      %2642 = vmatprep.subr.bf16.mxu0 0
      %2643 = vmatpush1.bf16.msra.mxu0 %v1314
      %2644 = vmatprep.subr.bf16.mxu0 0
      %2645 = vmatpush1.bf16.msra.mxu0 %v1317
      %2646 = vmatprep.subr.bf16.mxu0 0
      %2647 = vmatpush1.bf16.msra.mxu0 0
      %2648 = vmatprep.subr.bf16.mxu0 0
      %2649 = vmatpush1.bf16.msra.mxu0 0
      %2650 = vmatprep.subr.bf16.mxu0 0
      %2651 = vmatpush1.bf16.msra.mxu0 0
      %2652 = vmatprep.subr.bf16.mxu0 0
      %2653 = vmatpush1.bf16.msra.mxu0 0
      %2654 = vmatprep.subr.bf16.mxu0 0
      %2655 = vmatpush1.bf16.msra.mxu0 0
      %2656 = vmatprep.subr.bf16.mxu0 0
      %2657 = vmatpush1.bf16.msra.mxu0 0
      %2658 = vmatprep.subr.bf16.mxu0 0
      %2659 = vmatpush1.bf16.msra.mxu0 0
      %2660 = vmatprep.subr.bf16.mxu0 0
      %2661 = vmatpush1.bf16.msra.mxu0 0
      %2662 = vmatprep.mubr.bf16.mxu0 0
      %2663 = vmatmul.mubr.bf16.gmra.mrb[0].mxu0 %v2588
      %v2664 = vpop.f32.mrb[0].mxu0
      %v2665 = vadd.f32 %v1210, %v2664
      %v2666 = vpop.f32.mrb[0].mxu0
      %v2667 = vpop.f32.mrb[0].mxu0
      %v2668 = vpop.f32.mrb[0].mxu0
      %2669 = vdwg.mxu0
      %v2670 = vadd.f32 %v2581, %v2624
      %v2671 = vxor.u32 %v2670, 2147483648
      %v2672 = vmul.f32 %v2671, 1.442695
      %v2673 = vpow.pop %v2672
      %v2674 = vadd.f32 %v2673, 1.0
      %v2675 = vrcp.pop %v2674
      %v2676 = vmul.f32 1.0, %v2675
      %v2677 = vadd.f32 %v2582, %v2626
      %v2678 = vxor.u32 %v2677, 2147483648
      %v2679 = vmul.f32 %v2678, 1.442695
      %v2680 = vpow.pop %v2679
      %v2681 = vadd.f32 %v2680, 1.0
      %v2682 = vrcp.pop %v2681
      %v2683 = vmul.f32 1.0, %v2682
      %v2684 = vmul.f32 %v2676, %v2665
      %v2685 = vadd.f32 %v2583, %v2684
      %v2686 = vtanh.pop %v2685
      %v2687 = vsub.f32 1.0, %v2683
      %v2688 = vmul.f32 %v2687, %v2686
      %v2689 = vmul.f32 %v2683, %v2587
      %v2690 = vadd.f32 %v2688, %v2689
      %v2691 = vld [vmem:[#allocation5] sm:$0xff]
      %v2692 = vpack.c.bf16 %v2691, %v2691
      %2693 = vmatprep.subr.bf16.mxu0 %v1543
      %2694 = vmatpush1.bf16.msra.mxu0 %v1542
      %2695 = vmatprep.subr.bf16.mxu0 %v1546
      %2696 = vmatpush1.bf16.msra.mxu0 %v1545
      %2697 = vmatprep.subr.bf16.mxu0 %v1549
      %2698 = vmatpush1.bf16.msra.mxu0 %v1548
      %2699 = vmatprep.subr.bf16.mxu0 %v1552
      %2700 = vmatpush1.bf16.msra.mxu0 %v1551
      %2701 = vmatprep.subr.bf16.mxu0 %v1555
      %2702 = vmatpush1.bf16.msra.mxu0 %v1554
      %2703 = vmatprep.subr.bf16.mxu0 %v1558
      %2704 = vmatpush1.bf16.msra.mxu0 %v1557
      %2705 = vmatprep.subr.bf16.mxu0 %v1561
      %2706 = vmatpush1.bf16.msra.mxu0 %v1560
      %2707 = vmatprep.subr.bf16.mxu0 %v1564
      %2708 = vmatpush1.bf16.msra.mxu0 %v1563
      %2709 = vmatprep.subr.bf16.mxu0 0
      %2710 = vmatpush1.bf16.msra.mxu0 0
      %2711 = vmatprep.subr.bf16.mxu0 0
      %2712 = vmatpush1.bf16.msra.mxu0 0
      %2713 = vmatprep.subr.bf16.mxu0 0
      %2714 = vmatpush1.bf16.msra.mxu0 0
      %2715 = vmatprep.subr.bf16.mxu0 0
      %2716 = vmatpush1.bf16.msra.mxu0 0
      %2717 = vmatprep.subr.bf16.mxu0 0
      %2718 = vmatpush1.bf16.msra.mxu0 0
      %2719 = vmatprep.subr.bf16.mxu0 0
      %2720 = vmatpush1.bf16.msra.mxu0 0
      %2721 = vmatprep.subr.bf16.mxu0 0
      %2722 = vmatpush1.bf16.msra.mxu0 0
      %2723 = vmatprep.subr.bf16.mxu0 0
      %2724 = vmatpush1.bf16.msra.mxu0 0
      %2725 = vmatprep.mubr.bf16.mxu0 0
      %2726 = vmatmul.mubr.bf16.gmra.mrb[0].mxu0 %v2692
      %v2727 = vpop.f32.mrb[0].mxu0
      %v2728 = vadd.f32 %v1450, %v2727
      %v2729 = vpop.f32.mrb[0].mxu0
      %v2730 = vadd.f32 %v1454, %v2729
      %v2731 = vpop.f32.mrb[0].mxu0
      %v2732 = vpop.f32.mrb[0].mxu0
      %2733 = vdwg.mxu0
      %2734 = vmatprep.subr.bf16.mxu0 0
      %2735 = vmatpush1.bf16.msra.mxu0 %v1544
      %2736 = vmatprep.subr.bf16.mxu0 0
      %2737 = vmatpush1.bf16.msra.mxu0 %v1547
      %2738 = vmatprep.subr.bf16.mxu0 0
      %2739 = vmatpush1.bf16.msra.mxu0 %v1550
      %2740 = vmatprep.subr.bf16.mxu0 0
      %2741 = vmatpush1.bf16.msra.mxu0 %v1553
      %2742 = vmatprep.subr.bf16.mxu0 0
      %2743 = vmatpush1.bf16.msra.mxu0 %v1556
      %2744 = vmatprep.subr.bf16.mxu0 0
      %2745 = vmatpush1.bf16.msra.mxu0 %v1559
      %2746 = vmatprep.subr.bf16.mxu0 0
      %2747 = vmatpush1.bf16.msra.mxu0 %v1562
      %2748 = vmatprep.subr.bf16.mxu0 0
      %2749 = vmatpush1.bf16.msra.mxu0 %v1565
      %2750 = vmatprep.subr.bf16.mxu0 0
      %2751 = vmatpush1.bf16.msra.mxu0 0
      %2752 = vmatprep.subr.bf16.mxu0 0
      %2753 = vmatpush1.bf16.msra.mxu0 0
      %2754 = vmatprep.subr.bf16.mxu0 0
      %2755 = vmatpush1.bf16.msra.mxu0 0
      %2756 = vmatprep.subr.bf16.mxu0 0
      %2757 = vmatpush1.bf16.msra.mxu0 0
      %2758 = vmatprep.subr.bf16.mxu0 0
      %2759 = vmatpush1.bf16.msra.mxu0 0
      %2760 = vmatprep.subr.bf16.mxu0 0
      %2761 = vmatpush1.bf16.msra.mxu0 0
      %2762 = vmatprep.subr.bf16.mxu0 0
      %2763 = vmatpush1.bf16.msra.mxu0 0
      %2764 = vmatprep.subr.bf16.mxu0 0
      %2765 = vmatpush1.bf16.msra.mxu0 0
      %2766 = vmatprep.mubr.bf16.mxu0 0
      %2767 = vmatmul.mubr.bf16.gmra.mrb[0].mxu0 %v2692
      %v2768 = vpop.f32.mrb[0].mxu0
      %v2769 = vadd.f32 %v1458, %v2768
      %v2770 = vpop.f32.mrb[0].mxu0
      %v2771 = vpop.f32.mrb[0].mxu0
      %v2772 = vpop.f32.mrb[0].mxu0
      %2773 = vdwg.mxu0
      %v2774 = vadd.f32 %v2584, %v2728
      %v2775 = vxor.u32 %v2774, 2147483648
      %v2776 = vmul.f32 %v2775, 1.442695
      %v2777 = vpow.pop %v2776
      %v2778 = vadd.f32 %v2777, 1.0
      %v2779 = vrcp.pop %v2778
      %v2780 = vmul.f32 1.0, %v2779
      %v2781 = vadd.f32 %v2585, %v2730
      %v2782 = vxor.u32 %v2781, 2147483648
      %v2783 = vmul.f32 %v2782, 1.442695
      %v2784 = vpow.pop %v2783
      %v2785 = vadd.f32 %v2784, 1.0
      %v2786 = vrcp.pop %v2785
      %v2787 = vmul.f32 1.0, %v2786
      %v2788 = vmul.f32 %v2780, %v2769
      %v2789 = vadd.f32 %v2586, %v2788
      %v2790 = vtanh.pop %v2789
      %v2791 = vsub.f32 1.0, %v2787
      %v2792 = vmul.f32 %v2791, %v2790
      %v2793 = vmul.f32 %v2787, %v2691
      %v2794 = vadd.f32 %v2792, %v2793
      %2795 = vst [vmem:[#allocation4] sm:$0xff] %v2690
      %2796 = vst [vmem:[#allocation5] sm:$0xff] %v2794
      %2797 = vst [vmem:[%s2139] sm:$0xff] %v2690
      %2798 = vst [vmem:[%s2137 + $0x8] sm:$0xff] %v2794
      %v2799 = vld [vmem:[%s1701] sm:$0xff]
      %v2800 = vld [vmem:[%s1701 + $0x8] sm:$0xff]
      %v2801 = vld [vmem:[%s1701 + $0x10] sm:$0xff]
      %v2802 = vld [vmem:[%s1697 + $0x18] sm:$0xff]
      %v2803 = vld [vmem:[%s1697 + $0x20] sm:$0xff]
      %v2804 = vld [vmem:[%s1697 + $0x28] sm:$0xff]
      %v2805 = vld [vmem:[#allocation4] sm:$0xff]
      %v2806 = vpack.c.bf16 %v2805, %v2805
      %2807 = vmatprep.subr.bf16.mxu0 %v1295
      %2808 = vmatpush1.bf16.msra.mxu0 %v1294
      %2809 = vmatprep.subr.bf16.mxu0 %v1298
      %2810 = vmatpush1.bf16.msra.mxu0 %v1297
      %2811 = vmatprep.subr.bf16.mxu0 %v1301
      %2812 = vmatpush1.bf16.msra.mxu0 %v1300
      %2813 = vmatprep.subr.bf16.mxu0 %v1304
      %2814 = vmatpush1.bf16.msra.mxu0 %v1303
      %2815 = vmatprep.subr.bf16.mxu0 %v1307
      %2816 = vmatpush1.bf16.msra.mxu0 %v1306
      %2817 = vmatprep.subr.bf16.mxu0 %v1310
      %2818 = vmatpush1.bf16.msra.mxu0 %v1309
      %2819 = vmatprep.subr.bf16.mxu0 %v1313
      %2820 = vmatpush1.bf16.msra.mxu0 %v1312
      %2821 = vmatprep.subr.bf16.mxu0 %v1316
      %2822 = vmatpush1.bf16.msra.mxu0 %v1315
      %2823 = vmatprep.subr.bf16.mxu0 0
      %2824 = vmatpush1.bf16.msra.mxu0 0
      %2825 = vmatprep.subr.bf16.mxu0 0
      %2826 = vmatpush1.bf16.msra.mxu0 0
      %2827 = vmatprep.subr.bf16.mxu0 0
      %2828 = vmatpush1.bf16.msra.mxu0 0
      %2829 = vmatprep.subr.bf16.mxu0 0
      %2830 = vmatpush1.bf16.msra.mxu0 0
      %2831 = vmatprep.subr.bf16.mxu0 0
      %2832 = vmatpush1.bf16.msra.mxu0 0
      %2833 = vmatprep.subr.bf16.mxu0 0
      %2834 = vmatpush1.bf16.msra.mxu0 0
      %2835 = vmatprep.subr.bf16.mxu0 0
      %2836 = vmatpush1.bf16.msra.mxu0 0
      %2837 = vmatprep.subr.bf16.mxu0 0
      %2838 = vmatpush1.bf16.msra.mxu0 0
      %2839 = vmatprep.mubr.bf16.mxu0 0
      %2840 = vmatmul.mubr.bf16.gmra.mrb[0].mxu0 %v2806
      %v2841 = vpop.f32.mrb[0].mxu0
      %v2842 = vadd.f32 %v1202, %v2841
      %v2843 = vpop.f32.mrb[0].mxu0
      %v2844 = vadd.f32 %v1206, %v2843
      %v2845 = vpop.f32.mrb[0].mxu0
      %v2846 = vpop.f32.mrb[0].mxu0
      %2847 = vdwg.mxu0
      %2848 = vmatprep.subr.bf16.mxu0 0
      %2849 = vmatpush1.bf16.msra.mxu0 %v1296
      %2850 = vmatprep.subr.bf16.mxu0 0
      %2851 = vmatpush1.bf16.msra.mxu0 %v1299
      %2852 = vmatprep.subr.bf16.mxu0 0
      %2853 = vmatpush1.bf16.msra.mxu0 %v1302
      %2854 = vmatprep.subr.bf16.mxu0 0
      %2855 = vmatpush1.bf16.msra.mxu0 %v1305
      %2856 = vmatprep.subr.bf16.mxu0 0
      %2857 = vmatpush1.bf16.msra.mxu0 %v1308
      %2858 = vmatprep.subr.bf16.mxu0 0
      %2859 = vmatpush1.bf16.msra.mxu0 %v1311
      %2860 = vmatprep.subr.bf16.mxu0 0
      %2861 = vmatpush1.bf16.msra.mxu0 %v1314
      %2862 = vmatprep.subr.bf16.mxu0 0
      %2863 = vmatpush1.bf16.msra.mxu0 %v1317
      %2864 = vmatprep.subr.bf16.mxu0 0
      %2865 = vmatpush1.bf16.msra.mxu0 0
      %2866 = vmatprep.subr.bf16.mxu0 0
      %2867 = vmatpush1.bf16.msra.mxu0 0
      %2868 = vmatprep.subr.bf16.mxu0 0
      %2869 = vmatpush1.bf16.msra.mxu0 0
      %2870 = vmatprep.subr.bf16.mxu0 0
      %2871 = vmatpush1.bf16.msra.mxu0 0
      %2872 = vmatprep.subr.bf16.mxu0 0
      %2873 = vmatpush1.bf16.msra.mxu0 0
      %2874 = vmatprep.subr.bf16.mxu0 0
      %2875 = vmatpush1.bf16.msra.mxu0 0
      %2876 = vmatprep.subr.bf16.mxu0 0
      %2877 = vmatpush1.bf16.msra.mxu0 0
      %2878 = vmatprep.subr.bf16.mxu0 0
      %2879 = vmatpush1.bf16.msra.mxu0 0
      %2880 = vmatprep.mubr.bf16.mxu0 0
      %2881 = vmatmul.mubr.bf16.gmra.mrb[0].mxu0 %v2806
      %v2882 = vpop.f32.mrb[0].mxu0
      %v2883 = vadd.f32 %v1210, %v2882
      %v2884 = vpop.f32.mrb[0].mxu0
      %v2885 = vpop.f32.mrb[0].mxu0
      %v2886 = vpop.f32.mrb[0].mxu0
      %2887 = vdwg.mxu0
      %v2888 = vadd.f32 %v2799, %v2842
      %v2889 = vxor.u32 %v2888, 2147483648
      %v2890 = vmul.f32 %v2889, 1.442695
      %v2891 = vpow.pop %v2890
      %v2892 = vadd.f32 %v2891, 1.0
      %v2893 = vrcp.pop %v2892
      %v2894 = vmul.f32 1.0, %v2893
      %v2895 = vadd.f32 %v2800, %v2844
      %v2896 = vxor.u32 %v2895, 2147483648
      %v2897 = vmul.f32 %v2896, 1.442695
      %v2898 = vpow.pop %v2897
      %v2899 = vadd.f32 %v2898, 1.0
      %v2900 = vrcp.pop %v2899
      %v2901 = vmul.f32 1.0, %v2900
      %v2902 = vmul.f32 %v2894, %v2883
      %v2903 = vadd.f32 %v2801, %v2902
      %v2904 = vtanh.pop %v2903
      %v2905 = vsub.f32 1.0, %v2901
      %v2906 = vmul.f32 %v2905, %v2904
      %v2907 = vmul.f32 %v2901, %v2805
      %v2908 = vadd.f32 %v2906, %v2907
      %v2909 = vld [vmem:[#allocation5] sm:$0xff]
      %v2910 = vpack.c.bf16 %v2909, %v2909
      %2911 = vmatprep.subr.bf16.mxu0 %v1543
      %2912 = vmatpush1.bf16.msra.mxu0 %v1542
      %2913 = vmatprep.subr.bf16.mxu0 %v1546
      %2914 = vmatpush1.bf16.msra.mxu0 %v1545
      %2915 = vmatprep.subr.bf16.mxu0 %v1549
      %2916 = vmatpush1.bf16.msra.mxu0 %v1548
      %2917 = vmatprep.subr.bf16.mxu0 %v1552
      %2918 = vmatpush1.bf16.msra.mxu0 %v1551
      %2919 = vmatprep.subr.bf16.mxu0 %v1555
      %2920 = vmatpush1.bf16.msra.mxu0 %v1554
      %2921 = vmatprep.subr.bf16.mxu0 %v1558
      %2922 = vmatpush1.bf16.msra.mxu0 %v1557
      %2923 = vmatprep.subr.bf16.mxu0 %v1561
      %2924 = vmatpush1.bf16.msra.mxu0 %v1560
      %2925 = vmatprep.subr.bf16.mxu0 %v1564
      %2926 = vmatpush1.bf16.msra.mxu0 %v1563
      %2927 = vmatprep.subr.bf16.mxu0 0
      %2928 = vmatpush1.bf16.msra.mxu0 0
      %2929 = vmatprep.subr.bf16.mxu0 0
      %2930 = vmatpush1.bf16.msra.mxu0 0
      %2931 = vmatprep.subr.bf16.mxu0 0
      %2932 = vmatpush1.bf16.msra.mxu0 0
      %2933 = vmatprep.subr.bf16.mxu0 0
      %2934 = vmatpush1.bf16.msra.mxu0 0
      %2935 = vmatprep.subr.bf16.mxu0 0
      %2936 = vmatpush1.bf16.msra.mxu0 0
      %2937 = vmatprep.subr.bf16.mxu0 0
      %2938 = vmatpush1.bf16.msra.mxu0 0
      %2939 = vmatprep.subr.bf16.mxu0 0
      %2940 = vmatpush1.bf16.msra.mxu0 0
      %2941 = vmatprep.subr.bf16.mxu0 0
      %2942 = vmatpush1.bf16.msra.mxu0 0
      %2943 = vmatprep.mubr.bf16.mxu0 0
      %2944 = vmatmul.mubr.bf16.gmra.mrb[0].mxu0 %v2910
      %v2945 = vpop.f32.mrb[0].mxu0
      %v2946 = vadd.f32 %v1450, %v2945
      %v2947 = vpop.f32.mrb[0].mxu0
      %v2948 = vadd.f32 %v1454, %v2947
      %v2949 = vpop.f32.mrb[0].mxu0
      %v2950 = vpop.f32.mrb[0].mxu0
      %2951 = vdwg.mxu0
      %2952 = vmatprep.subr.bf16.mxu0 0
      %2953 = vmatpush1.bf16.msra.mxu0 %v1544
      %2954 = vmatprep.subr.bf16.mxu0 0
      %2955 = vmatpush1.bf16.msra.mxu0 %v1547
      %2956 = vmatprep.subr.bf16.mxu0 0
      %2957 = vmatpush1.bf16.msra.mxu0 %v1550
      %2958 = vmatprep.subr.bf16.mxu0 0
      %2959 = vmatpush1.bf16.msra.mxu0 %v1553
      %2960 = vmatprep.subr.bf16.mxu0 0
      %2961 = vmatpush1.bf16.msra.mxu0 %v1556
      %2962 = vmatprep.subr.bf16.mxu0 0
      %2963 = vmatpush1.bf16.msra.mxu0 %v1559
      %2964 = vmatprep.subr.bf16.mxu0 0
      %2965 = vmatpush1.bf16.msra.mxu0 %v1562
      %2966 = vmatprep.subr.bf16.mxu0 0
      %2967 = vmatpush1.bf16.msra.mxu0 %v1565
      %2968 = vmatprep.subr.bf16.mxu0 0
      %2969 = vmatpush1.bf16.msra.mxu0 0
      %2970 = vmatprep.subr.bf16.mxu0 0
      %2971 = vmatpush1.bf16.msra.mxu0 0
      %2972 = vmatprep.subr.bf16.mxu0 0
      %2973 = vmatpush1.bf16.msra.mxu0 0
      %2974 = vmatprep.subr.bf16.mxu0 0
      %2975 = vmatpush1.bf16.msra.mxu0 0
      %2976 = vmatprep.subr.bf16.mxu0 0
      %2977 = vmatpush1.bf16.msra.mxu0 0
      %2978 = vmatprep.subr.bf16.mxu0 0
      %2979 = vmatpush1.bf16.msra.mxu0 0
      %2980 = vmatprep.subr.bf16.mxu0 0
      %2981 = vmatpush1.bf16.msra.mxu0 0
      %2982 = vmatprep.subr.bf16.mxu0 0
      %2983 = vmatpush1.bf16.msra.mxu0 0
      %2984 = vmatprep.mubr.bf16.mxu0 0
      %2985 = vmatmul.mubr.bf16.gmra.mrb[0].mxu0 %v2910
      %v2986 = vpop.f32.mrb[0].mxu0
      %v2987 = vadd.f32 %v1458, %v2986
      %v2988 = vpop.f32.mrb[0].mxu0
      %v2989 = vpop.f32.mrb[0].mxu0
      %v2990 = vpop.f32.mrb[0].mxu0
      %2991 = vdwg.mxu0
      %v2992 = vadd.f32 %v2802, %v2946
      %v2993 = vxor.u32 %v2992, 2147483648
      %v2994 = vmul.f32 %v2993, 1.442695
      %v2995 = vpow.pop %v2994
      %v2996 = vadd.f32 %v2995, 1.0
      %v2997 = vrcp.pop %v2996
      %v2998 = vmul.f32 1.0, %v2997
      %v2999 = vadd.f32 %v2803, %v2948
      %v3000 = vxor.u32 %v2999, 2147483648
      %v3001 = vmul.f32 %v3000, 1.442695
      %v3002 = vpow.pop %v3001
      %v3003 = vadd.f32 %v3002, 1.0
      %v3004 = vrcp.pop %v3003
      %v3005 = vmul.f32 1.0, %v3004
      %v3006 = vmul.f32 %v2998, %v2987
      %v3007 = vadd.f32 %v2804, %v3006
      %v3008 = vtanh.pop %v3007
      %v3009 = vsub.f32 1.0, %v3005
      %v3010 = vmul.f32 %v3009, %v3008
      %v3011 = vmul.f32 %v3005, %v2909
      %v3012 = vadd.f32 %v3010, %v3011
      %3013 = vst [vmem:[#allocation4] sm:$0xff] %v2908
      %3014 = vst [vmem:[#allocation5] sm:$0xff] %v3012
      %3015 = vst [vmem:[%s1917] sm:$0xff] %v2908
      %3016 = vst [vmem:[%s1915 + $0x8] sm:$0xff] %v3012
      %v3017 = vld [vmem:[%s1192] sm:$0xff]
      %v3018 = vld [vmem:[%s1192 + $0x8] sm:$0xff]
      %v3019 = vld [vmem:[%s1192 + $0x10] sm:$0xff]
      %v3020 = vld [vmem:[#allocation3 + $0x18] sm:$0xff]
      %v3021 = vld [vmem:[#allocation3 + $0x20] sm:$0xff]
      %v3022 = vld [vmem:[#allocation3 + $0x28] sm:$0xff]
      %v3023 = vld [vmem:[#allocation4] sm:$0xff]
      %v3024 = vpack.c.bf16 %v3023, %v3023
      %3025 = vmatprep.subr.bf16.mxu0 %v1295
      %3026 = vmatpush1.bf16.msra.mxu0 %v1294
      %3027 = vmatprep.subr.bf16.mxu0 %v1298
      %3028 = vmatpush1.bf16.msra.mxu0 %v1297
      %3029 = vmatprep.subr.bf16.mxu0 %v1301
      %3030 = vmatpush1.bf16.msra.mxu0 %v1300
      %3031 = vmatprep.subr.bf16.mxu0 %v1304
      %3032 = vmatpush1.bf16.msra.mxu0 %v1303
      %3033 = vmatprep.subr.bf16.mxu0 %v1307
      %3034 = vmatpush1.bf16.msra.mxu0 %v1306
      %3035 = vmatprep.subr.bf16.mxu0 %v1310
      %3036 = vmatpush1.bf16.msra.mxu0 %v1309
      %3037 = vmatprep.subr.bf16.mxu0 %v1313
      %3038 = vmatpush1.bf16.msra.mxu0 %v1312
      %3039 = vmatprep.subr.bf16.mxu0 %v1316
      %3040 = vmatpush1.bf16.msra.mxu0 %v1315
      %3041 = vmatprep.subr.bf16.mxu0 0
      %3042 = vmatpush1.bf16.msra.mxu0 0
      %3043 = vmatprep.subr.bf16.mxu0 0
      %3044 = vmatpush1.bf16.msra.mxu0 0
      %3045 = vmatprep.subr.bf16.mxu0 0
      %3046 = vmatpush1.bf16.msra.mxu0 0
      %3047 = vmatprep.subr.bf16.mxu0 0
      %3048 = vmatpush1.bf16.msra.mxu0 0
      %3049 = vmatprep.subr.bf16.mxu0 0
      %3050 = vmatpush1.bf16.msra.mxu0 0
      %3051 = vmatprep.subr.bf16.mxu0 0
      %3052 = vmatpush1.bf16.msra.mxu0 0
      %3053 = vmatprep.subr.bf16.mxu0 0
      %3054 = vmatpush1.bf16.msra.mxu0 0
      %3055 = vmatprep.subr.bf16.mxu0 0
      %3056 = vmatpush1.bf16.msra.mxu0 0
      %3057 = vmatprep.mubr.bf16.mxu0 0
      %3058 = vmatmul.mubr.bf16.gmra.mrb[0].mxu0 %v3024
      %v3059 = vpop.f32.mrb[0].mxu0
      %v3060 = vadd.f32 %v1202, %v3059
      %v3061 = vpop.f32.mrb[0].mxu0
      %v3062 = vadd.f32 %v1206, %v3061
      %v3063 = vpop.f32.mrb[0].mxu0
      %v3064 = vpop.f32.mrb[0].mxu0
      %3065 = vdwg.mxu0
      %3066 = vmatprep.subr.bf16.mxu0 0
      %3067 = vmatpush1.bf16.msra.mxu0 %v1296
      %3068 = vmatprep.subr.bf16.mxu0 0
      %3069 = vmatpush1.bf16.msra.mxu0 %v1299
      %3070 = vmatprep.subr.bf16.mxu0 0
      %3071 = vmatpush1.bf16.msra.mxu0 %v1302
      %3072 = vmatprep.subr.bf16.mxu0 0
      %3073 = vmatpush1.bf16.msra.mxu0 %v1305
      %3074 = vmatprep.subr.bf16.mxu0 0
      %3075 = vmatpush1.bf16.msra.mxu0 %v1308
      %3076 = vmatprep.subr.bf16.mxu0 0
      %3077 = vmatpush1.bf16.msra.mxu0 %v1311
      %3078 = vmatprep.subr.bf16.mxu0 0
      %3079 = vmatpush1.bf16.msra.mxu0 %v1314
      %3080 = vmatprep.subr.bf16.mxu0 0
      %3081 = vmatpush1.bf16.msra.mxu0 %v1317
      %3082 = vmatprep.subr.bf16.mxu0 0
      %3083 = vmatpush1.bf16.msra.mxu0 0
      %3084 = vmatprep.subr.bf16.mxu0 0
      %3085 = vmatpush1.bf16.msra.mxu0 0
      %3086 = vmatprep.subr.bf16.mxu0 0
      %3087 = vmatpush1.bf16.msra.mxu0 0
      %3088 = vmatprep.subr.bf16.mxu0 0
      %3089 = vmatpush1.bf16.msra.mxu0 0
      %3090 = vmatprep.subr.bf16.mxu0 0
      %3091 = vmatpush1.bf16.msra.mxu0 0
      %3092 = vmatprep.subr.bf16.mxu0 0
      %3093 = vmatpush1.bf16.msra.mxu0 0
      %3094 = vmatprep.subr.bf16.mxu0 0
      %3095 = vmatpush1.bf16.msra.mxu0 0
      %3096 = vmatprep.subr.bf16.mxu0 0
      %3097 = vmatpush1.bf16.msra.mxu0 0
      %3098 = vmatprep.mubr.bf16.mxu0 0
      %3099 = vmatmul.mubr.bf16.gmra.mrb[0].mxu0 %v3024
      %v3100 = vpop.f32.mrb[0].mxu0
      %v3101 = vadd.f32 %v1210, %v3100
      %v3102 = vpop.f32.mrb[0].mxu0
      %v3103 = vpop.f32.mrb[0].mxu0
      %v3104 = vpop.f32.mrb[0].mxu0
      %3105 = vdwg.mxu0
      %v3106 = vadd.f32 %v3017, %v3060
      %v3107 = vxor.u32 %v3106, 2147483648
      %v3108 = vmul.f32 %v3107, 1.442695
      %v3109 = vpow.pop %v3108
      %v3110 = vadd.f32 %v3109, 1.0
      %v3111 = vrcp.pop %v3110
      %v3112 = vmul.f32 1.0, %v3111
      %v3113 = vadd.f32 %v3018, %v3062
      %v3114 = vxor.u32 %v3113, 2147483648
      %v3115 = vmul.f32 %v3114, 1.442695
      %v3116 = vpow.pop %v3115
      %v3117 = vadd.f32 %v3116, 1.0
      %v3118 = vrcp.pop %v3117
      %v3119 = vmul.f32 1.0, %v3118
      %v3120 = vmul.f32 %v3112, %v3101
      %v3121 = vadd.f32 %v3019, %v3120
      %v3122 = vtanh.pop %v3121
      %v3123 = vsub.f32 1.0, %v3119
      %v3124 = vmul.f32 %v3123, %v3122
      %v3125 = vmul.f32 %v3119, %v3023
      %v3126 = vadd.f32 %v3124, %v3125
      %v3127 = vld [vmem:[#allocation5] sm:$0xff]
      %v3128 = vpack.c.bf16 %v3127, %v3127
      %3129 = vmatprep.subr.bf16.mxu0 %v1543
      %3130 = vmatpush1.bf16.msra.mxu0 %v1542
      %3131 = vmatprep.subr.bf16.mxu0 %v1546
      %3132 = vmatpush1.bf16.msra.mxu0 %v1545
      %3133 = vmatprep.subr.bf16.mxu0 %v1549
      %3134 = vmatpush1.bf16.msra.mxu0 %v1548
      %3135 = vmatprep.subr.bf16.mxu0 %v1552
      %3136 = vmatpush1.bf16.msra.mxu0 %v1551
      %3137 = vmatprep.subr.bf16.mxu0 %v1555
      %3138 = vmatpush1.bf16.msra.mxu0 %v1554
      %3139 = vmatprep.subr.bf16.mxu0 %v1558
      %3140 = vmatpush1.bf16.msra.mxu0 %v1557
      %3141 = vmatprep.subr.bf16.mxu0 %v1561
      %3142 = vmatpush1.bf16.msra.mxu0 %v1560
      %3143 = vmatprep.subr.bf16.mxu0 %v1564
      %3144 = vmatpush1.bf16.msra.mxu0 %v1563
      %3145 = vmatprep.subr.bf16.mxu0 0
      %3146 = vmatpush1.bf16.msra.mxu0 0
      %3147 = vmatprep.subr.bf16.mxu0 0
      %3148 = vmatpush1.bf16.msra.mxu0 0
      %3149 = vmatprep.subr.bf16.mxu0 0
      %3150 = vmatpush1.bf16.msra.mxu0 0
      %3151 = vmatprep.subr.bf16.mxu0 0
      %3152 = vmatpush1.bf16.msra.mxu0 0
      %3153 = vmatprep.subr.bf16.mxu0 0
      %3154 = vmatpush1.bf16.msra.mxu0 0
      %3155 = vmatprep.subr.bf16.mxu0 0
      %3156 = vmatpush1.bf16.msra.mxu0 0
      %3157 = vmatprep.subr.bf16.mxu0 0
      %3158 = vmatpush1.bf16.msra.mxu0 0
      %3159 = vmatprep.subr.bf16.mxu0 0
      %3160 = vmatpush1.bf16.msra.mxu0 0
      %3161 = vmatprep.mubr.bf16.mxu0 0
      %3162 = vmatmul.mubr.bf16.gmra.mrb[0].mxu0 %v3128
      %v3163 = vpop.f32.mrb[0].mxu0
      %v3164 = vadd.f32 %v1450, %v3163
      %v3165 = vpop.f32.mrb[0].mxu0
      %v3166 = vadd.f32 %v1454, %v3165
      %v3167 = vpop.f32.mrb[0].mxu0
      %v3168 = vpop.f32.mrb[0].mxu0
      %3169 = vdwg.mxu0
      %3170 = vmatprep.subr.bf16.mxu0 0
      %3171 = vmatpush1.bf16.msra.mxu0 %v1544
      %3172 = vmatprep.subr.bf16.mxu0 0
      %3173 = vmatpush1.bf16.msra.mxu0 %v1547
      %3174 = vmatprep.subr.bf16.mxu0 0
      %3175 = vmatpush1.bf16.msra.mxu0 %v1550
      %3176 = vmatprep.subr.bf16.mxu0 0
      %3177 = vmatpush1.bf16.msra.mxu0 %v1553
      %3178 = vmatprep.subr.bf16.mxu0 0
      %3179 = vmatpush1.bf16.msra.mxu0 %v1556
      %3180 = vmatprep.subr.bf16.mxu0 0
      %3181 = vmatpush1.bf16.msra.mxu0 %v1559
      %3182 = vmatprep.subr.bf16.mxu0 0
      %3183 = vmatpush1.bf16.msra.mxu0 %v1562
      %3184 = vmatprep.subr.bf16.mxu0 0
      %3185 = vmatpush1.bf16.msra.mxu0 %v1565
      %3186 = vmatprep.subr.bf16.mxu0 0
      %3187 = vmatpush1.bf16.msra.mxu0 0
      %3188 = vmatprep.subr.bf16.mxu0 0
      %3189 = vmatpush1.bf16.msra.mxu0 0
      %3190 = vmatprep.subr.bf16.mxu0 0
      %3191 = vmatpush1.bf16.msra.mxu0 0
      %3192 = vmatprep.subr.bf16.mxu0 0
      %3193 = vmatpush1.bf16.msra.mxu0 0
      %3194 = vmatprep.subr.bf16.mxu0 0
      %3195 = vmatpush1.bf16.msra.mxu0 0
      %3196 = vmatprep.subr.bf16.mxu0 0
      %3197 = vmatpush1.bf16.msra.mxu0 0
      %3198 = vmatprep.subr.bf16.mxu0 0
      %3199 = vmatpush1.bf16.msra.mxu0 0
      %3200 = vmatprep.subr.bf16.mxu0 0
      %3201 = vmatpush1.bf16.msra.mxu0 0
      %3202 = vmatprep.mubr.bf16.mxu0 0
      %3203 = vmatmul.mubr.bf16.gmra.mrb[0].mxu0 %v3128
      %v3204 = vpop.f32.mrb[0].mxu0
      %v3205 = vadd.f32 %v1458, %v3204
      %v3206 = vpop.f32.mrb[0].mxu0
      %v3207 = vpop.f32.mrb[0].mxu0
      %v3208 = vpop.f32.mrb[0].mxu0
      %3209 = vdwg.mxu0
      %v3210 = vadd.f32 %v3020, %v3164
      %v3211 = vxor.u32 %v3210, 2147483648
      %v3212 = vmul.f32 %v3211, 1.442695
      %v3213 = vpow.pop %v3212
      %v3214 = vadd.f32 %v3213, 1.0
      %v3215 = vrcp.pop %v3214
      %v3216 = vmul.f32 1.0, %v3215
      %v3217 = vadd.f32 %v3021, %v3166
      %v3218 = vxor.u32 %v3217, 2147483648
      %v3219 = vmul.f32 %v3218, 1.442695
      %v3220 = vpow.pop %v3219
      %v3221 = vadd.f32 %v3220, 1.0
      %v3222 = vrcp.pop %v3221
      %v3223 = vmul.f32 1.0, %v3222
      %v3224 = vmul.f32 %v3216, %v3205
      %v3225 = vadd.f32 %v3022, %v3224
      %v3226 = vtanh.pop %v3225
      %v3227 = vsub.f32 1.0, %v3223
      %v3228 = vmul.f32 %v3227, %v3226
      %v3229 = vmul.f32 %v3223, %v3127
      %v3230 = vadd.f32 %v3228, %v3229
      %3231 = vst [vmem:[#allocation4] sm:$0xff] %v3126
      %3232 = vst [vmem:[#allocation5] sm:$0xff] %v3230
      %3233 = vst [vmem:[%s1695] sm:$0xff] %v3126
      %3234 = vst [vmem:[#allocation2 + $0x8] sm:$0xff] %v3230
    $region90: #{bigru_attention_forward.1} parent=1 // loop_footer
      %s208 = sadd.s32 1, %s204
    $region91: #{bigru_attention_forward.1} parent=1 // loop_footer_branch
      %203 = sbr.rel target = $region87
    $region92: #{bigru_attention_forward.1} parent=1 // loop_exit
      _
    %v3235 = vld [vmem:[#allocation2] sm:$0xff]
    %v3236 = vld [vmem:[#allocation2 + $0x8] sm:$0xff]
    %v3237 = vld [vmem:[#allocation2 + $0x10] sm:$0xff]
    %v3238 = vld [vmem:[#allocation2 + $0x18] sm:$0xff]
    %v3239 = vld [vmem:[#allocation2 + $0x20] sm:$0xff]
    %v3240 = vld [vmem:[#allocation2 + $0x28] sm:$0xff]
    %v3241 = vld [vmem:[#allocation2 + $0x30] sm:$0xff]
    %v3242 = vld [vmem:[#allocation2 + $0x38] sm:$0xff]
    %v3243 = vld [vmem:[#allocation2 + $0x40] sm:$0xff]
    %v3244 = vld [vmem:[#allocation2 + $0x48] sm:$0xff]
    %v3245 = vld [vmem:[#allocation2 + $0x50] sm:$0xff]
    %v3246 = vld [vmem:[#allocation2 + $0x58] sm:$0xff]
    %v3247 = vld [vmem:[#allocation2 + $0x60] sm:$0xff]
    %v3248 = vld [vmem:[#allocation2 + $0x68] sm:$0xff]
    %v3249 = vld [vmem:[#allocation2 + $0x70] sm:$0xff]
    %v3250 = vld [vmem:[#allocation2 + $0x78] sm:$0xff]
    %v3251 = vpack.c.bf16 %v3237, %v3235
    %v3252 = vpack.c.bf16 %v3238, %v3236
    %v3253 = vpack.c.bf16 %v3241, %v3239
    %v3254 = vpack.c.bf16 %v3242, %v3240
    %v3255 = vpack.c.bf16 %v3245, %v3243
    %v3256 = vpack.c.bf16 %v3246, %v3244
    %v3257 = vpack.c.bf16 %v3249, %v3247
    %v3258 = vpack.c.bf16 %v3250, %v3248
    %v3259 = vld [vmem:[#allocation16] sm:$0xff]
    %v3260 = vld [vmem:[#allocation16 + $0x8] sm:$0xff]
    %v3261 = vld [vmem:[#allocation16 + $0x10] sm:$0xff]
    %v3262 = vld [vmem:[#allocation16 + $0x18] sm:$0xff]
    %v3263 = vld [vmem:[#allocation16 + $0x20] sm:$0xff]
    %v3264 = vld [vmem:[#allocation16 + $0x28] sm:$0xff]
    %v3265 = vld [vmem:[#allocation16 + $0x30] sm:$0xff]
    %v3266 = vld [vmem:[#allocation16 + $0x38] sm:$0xff]
    %v3267 = vld [vmem:[#allocation16 + $0x40] sm:$0xff]
    %v3268 = vld [vmem:[#allocation16 + $0x48] sm:$0xff]
    %v3269 = vld [vmem:[#allocation16 + $0x50] sm:$0xff]
    %v3270 = vld [vmem:[#allocation16 + $0x58] sm:$0xff]
    %v3271 = vld [vmem:[#allocation16 + $0x60] sm:$0xff]
    %v3272 = vld [vmem:[#allocation16 + $0x68] sm:$0xff]
    %v3273 = vld [vmem:[#allocation16 + $0x70] sm:$0xff]
    %v3274 = vld [vmem:[#allocation16 + $0x78] sm:$0xff]
    %v3275 = vld [vmem:[#allocation16 + $0x80] sm:$0xff]
    %v3276 = vld [vmem:[#allocation16 + $0x88] sm:$0xff]
    %v3277 = vld [vmem:[#allocation16 + $0x90] sm:$0xff]
    %v3278 = vld [vmem:[#allocation16 + $0x98] sm:$0xff]
    %v3279 = vld [vmem:[#allocation16 + $0xa0] sm:$0xff]
    %v3280 = vld [vmem:[#allocation16 + $0xa8] sm:$0xff]
    %v3281 = vld [vmem:[#allocation16 + $0xb0] sm:$0xff]
    %v3282 = vld [vmem:[#allocation16 + $0xb8] sm:$0xff]
    %v3283 = vld [vmem:[#allocation16 + $0xc0] sm:$0xff]
    %v3284 = vld [vmem:[#allocation16 + $0xc8] sm:$0xff]
    %v3285 = vld [vmem:[#allocation16 + $0xd0] sm:$0xff]
    %v3286 = vld [vmem:[#allocation16 + $0xd8] sm:$0xff]
    %v3287 = vld [vmem:[#allocation16 + $0xe0] sm:$0xff]
    %v3288 = vld [vmem:[#allocation16 + $0xe8] sm:$0xff]
    %v3289 = vld [vmem:[#allocation16 + $0xf0] sm:$0xff]
    %v3290 = vld [vmem:[#allocation16 + $0xf8] sm:$0xff]
    %v3291 = vld [vmem:[#allocation17] sm:$0x3]
    %v3293 = vlaneseq
    %v3294 = vshrl.u32 %v3293, 7
    %v3295 = vsub.s32 0, %v3294
    %v3296 = vrot.slane %v3291, %v3295
    %v3297 = vlaneseq
    %v3298 = vshrl.u32 %v3297, 7
    %v3299 = vsub.s32 1, %v3298
    %v3300 = vrot.slane %v3291, %v3299
    %v3335 = vunpack.c.l.b16 %v3259
    %v3336 = vunpack.c.h.b16 %v3259
    %v3337 = vunpack.c.l.b16 %v3260
    %v3338 = vunpack.c.h.b16 %v3260
    %v3339 = vunpack.c.l.b16 %v3261
    %v3340 = vunpack.c.h.b16 %v3261
    %v3341 = vunpack.c.l.b16 %v3262
    %v3342 = vunpack.c.h.b16 %v3262
    %v3343 = vunpack.c.l.b16 %v3263
    %v3344 = vunpack.c.h.b16 %v3263
    %v3345 = vunpack.c.l.b16 %v3264
    %v3346 = vunpack.c.h.b16 %v3264
    %v3347 = vunpack.c.l.b16 %v3265
    %v3348 = vunpack.c.h.b16 %v3265
    %v3349 = vunpack.c.l.b16 %v3266
    %v3350 = vunpack.c.h.b16 %v3266
    %v3351 = vunpack.c.l.b16 %v3267
    %v3352 = vunpack.c.h.b16 %v3267
    %v3353 = vunpack.c.l.b16 %v3268
    %v3354 = vunpack.c.h.b16 %v3268
    %v3355 = vunpack.c.l.b16 %v3269
    %v3356 = vunpack.c.h.b16 %v3269
    %v3357 = vunpack.c.l.b16 %v3270
    %v3358 = vunpack.c.h.b16 %v3270
    %v3359 = vunpack.c.l.b16 %v3271
    %v3360 = vunpack.c.h.b16 %v3271
    %v3361 = vunpack.c.l.b16 %v3272
    %v3362 = vunpack.c.h.b16 %v3272
    %v3363 = vunpack.c.l.b16 %v3273
    %v3364 = vunpack.c.h.b16 %v3273
    %v3365 = vunpack.c.l.b16 %v3274
    %v3366 = vunpack.c.h.b16 %v3274
    %v3367 = vunpack.c.l.b16 %v3275
    %v3368 = vunpack.c.h.b16 %v3275
    %v3369 = vunpack.c.l.b16 %v3276
    %v3370 = vunpack.c.h.b16 %v3276
    %v3371 = vunpack.c.l.b16 %v3277
    %v3372 = vunpack.c.h.b16 %v3277
    %v3373 = vunpack.c.l.b16 %v3278
    %v3374 = vunpack.c.h.b16 %v3278
    %v3375 = vunpack.c.l.b16 %v3279
    %v3376 = vunpack.c.h.b16 %v3279
    %v3377 = vunpack.c.l.b16 %v3280
    %v3378 = vunpack.c.h.b16 %v3280
    %v3379 = vunpack.c.l.b16 %v3281
    %v3380 = vunpack.c.h.b16 %v3281
    %v3381 = vunpack.c.l.b16 %v3282
    %v3382 = vunpack.c.h.b16 %v3282
    %v3383 = vunpack.c.l.b16 %v3283
    %v3384 = vunpack.c.h.b16 %v3283
    %v3385 = vunpack.c.l.b16 %v3284
    %v3386 = vunpack.c.h.b16 %v3284
    %v3387 = vunpack.c.l.b16 %v3285
    %v3388 = vunpack.c.h.b16 %v3285
    %v3389 = vunpack.c.l.b16 %v3286
    %v3390 = vunpack.c.h.b16 %v3286
    %v3391 = vunpack.c.l.b16 %v3287
    %v3392 = vunpack.c.h.b16 %v3287
    %v3393 = vunpack.c.l.b16 %v3288
    %v3394 = vunpack.c.h.b16 %v3288
    %v3395 = vunpack.c.l.b16 %v3289
    %v3396 = vunpack.c.h.b16 %v3289
    %v3397 = vunpack.c.l.b16 %v3290
    %v3398 = vunpack.c.h.b16 %v3290
    %v3399 = vpack.c.b16 %v3337, %v3335
    %v3400 = vpack.c.b16 %v3338, %v3336
    %v3401 = vpack.c.b16 %v3341, %v3339
    %v3402 = vpack.c.b16 %v3342, %v3340
    %v3403 = vpack.c.b16 %v3345, %v3343
    %v3404 = vpack.c.b16 %v3346, %v3344
    %v3405 = vpack.c.b16 %v3349, %v3347
    %v3406 = vpack.c.b16 %v3350, %v3348
    %v3407 = vpack.c.b16 %v3353, %v3351
    %v3408 = vpack.c.b16 %v3354, %v3352
    %v3409 = vpack.c.b16 %v3357, %v3355
    %v3410 = vpack.c.b16 %v3358, %v3356
    %v3411 = vpack.c.b16 %v3361, %v3359
    %v3412 = vpack.c.b16 %v3362, %v3360
    %v3413 = vpack.c.b16 %v3365, %v3363
    %v3414 = vpack.c.b16 %v3366, %v3364
    %v3415 = vpack.c.b16 %v3369, %v3367
    %v3416 = vpack.c.b16 %v3370, %v3368
    %v3417 = vpack.c.b16 %v3373, %v3371
    %v3418 = vpack.c.b16 %v3374, %v3372
    %v3419 = vpack.c.b16 %v3377, %v3375
    %v3420 = vpack.c.b16 %v3378, %v3376
    %v3421 = vpack.c.b16 %v3381, %v3379
    %v3422 = vpack.c.b16 %v3382, %v3380
    %v3423 = vpack.c.b16 %v3385, %v3383
    %v3424 = vpack.c.b16 %v3386, %v3384
    %v3425 = vpack.c.b16 %v3389, %v3387
    %v3426 = vpack.c.b16 %v3390, %v3388
    %v3427 = vpack.c.b16 %v3393, %v3391
    %v3428 = vpack.c.b16 %v3394, %v3392
    %v3429 = vpack.c.b16 %v3397, %v3395
    %v3430 = vpack.c.b16 %v3398, %v3396
    %3463 = vmatprep.subr.bf16.mxu0 %v3400
    %3464 = vmatpush1.bf16.msra.mxu0 %v3399
    %3465 = vmatprep.subr.bf16.mxu0 %v3402
    %3466 = vmatpush1.bf16.msra.mxu0 %v3401
    %3467 = vmatprep.subr.bf16.mxu0 %v3404
    %3468 = vmatpush1.bf16.msra.mxu0 %v3403
    %3469 = vmatprep.subr.bf16.mxu0 %v3406
    %3470 = vmatpush1.bf16.msra.mxu0 %v3405
    %3471 = vmatprep.subr.bf16.mxu0 %v3408
    %3472 = vmatpush1.bf16.msra.mxu0 %v3407
    %3473 = vmatprep.subr.bf16.mxu0 %v3410
    %3474 = vmatpush1.bf16.msra.mxu0 %v3409
    %3475 = vmatprep.subr.bf16.mxu0 %v3412
    %3476 = vmatpush1.bf16.msra.mxu0 %v3411
    %3477 = vmatprep.subr.bf16.mxu0 %v3414
    %3478 = vmatpush1.bf16.msra.mxu0 %v3413
    %3479 = vmatprep.subr.bf16.mxu0 %v3416
    %3480 = vmatpush1.bf16.msra.mxu0 %v3415
    %3481 = vmatprep.subr.bf16.mxu0 %v3418
    %3482 = vmatpush1.bf16.msra.mxu0 %v3417
    %3483 = vmatprep.subr.bf16.mxu0 %v3420
    %3484 = vmatpush1.bf16.msra.mxu0 %v3419
    %3485 = vmatprep.subr.bf16.mxu0 %v3422
    %3486 = vmatpush1.bf16.msra.mxu0 %v3421
    %3487 = vmatprep.subr.bf16.mxu0 %v3424
    %3488 = vmatpush1.bf16.msra.mxu0 %v3423
    %3489 = vmatprep.subr.bf16.mxu0 %v3426
    %3490 = vmatpush1.bf16.msra.mxu0 %v3425
    %3491 = vmatprep.subr.bf16.mxu0 %v3428
    %3492 = vmatpush1.bf16.msra.mxu0 %v3427
    %3493 = vmatprep.subr.bf16.mxu0 %v3430
    %3494 = vmatpush1.bf16.msra.mxu0 %v3429
    %3495 = vmatprep.mubr.bf16.mxu0 %v3252
    %3496 = vmatmul.mubr.bf16.gmra.mrb[0].mxu0 %v3251
    %v3497 = vpop.f32.mrb[0].mxu0
    %v3498 = vadd.f32 %v3296, %v3497
    %v3499 = vpop.f32.mrb[0].mxu0
    %v3500 = vadd.f32 %v3300, %v3499
    %v3501 = vpop.f32.mrb[0].mxu0
    %v3502 = vadd.f32 %v3296, %v3501
    %v3503 = vpop.f32.mrb[0].mxu0
    %v3504 = vadd.f32 %v3300, %v3503
    %3505 = vmatprep.mubr.bf16.mxu0 %v3254
    %3506 = vmatmul.mubr.bf16.gmra.mrb[0].mxu0 %v3253
    %v3507 = vpop.f32.mrb[0].mxu0
    %v3508 = vadd.f32 %v3296, %v3507
    %v3509 = vpop.f32.mrb[0].mxu0
    %v3510 = vadd.f32 %v3300, %v3509
    %v3511 = vpop.f32.mrb[0].mxu0
    %v3512 = vadd.f32 %v3296, %v3511
    %v3513 = vpop.f32.mrb[0].mxu0
    %v3514 = vadd.f32 %v3300, %v3513
    %3515 = vmatprep.mubr.bf16.mxu0 %v3256
    %3516 = vmatmul.mubr.bf16.gmra.mrb[0].mxu0 %v3255
    %v3517 = vpop.f32.mrb[0].mxu0
    %v3518 = vadd.f32 %v3296, %v3517
    %v3519 = vpop.f32.mrb[0].mxu0
    %v3520 = vadd.f32 %v3300, %v3519
    %v3521 = vpop.f32.mrb[0].mxu0
    %v3522 = vadd.f32 %v3296, %v3521
    %v3523 = vpop.f32.mrb[0].mxu0
    %v3524 = vadd.f32 %v3300, %v3523
    %3525 = vmatprep.mubr.bf16.mxu0 %v3258
    %3526 = vmatmul.mubr.bf16.gmra.mrb[0].mxu0 %v3257
    %v3527 = vpop.f32.mrb[0].mxu0
    %v3528 = vadd.f32 %v3296, %v3527
    %v3529 = vpop.f32.mrb[0].mxu0
    %v3530 = vadd.f32 %v3300, %v3529
    %v3531 = vpop.f32.mrb[0].mxu0
    %v3532 = vadd.f32 %v3296, %v3531
    %v3533 = vpop.f32.mrb[0].mxu0
    %v3534 = vadd.f32 %v3300, %v3533
    %3535 = vdwg.mxu0
    %v3536 = vtanh.pop %v3498
    %v3537 = vtanh.pop %v3500
    %v3538 = vtanh.pop %v3502
    %v3539 = vtanh.pop %v3504
    %v3540 = vtanh.pop %v3508
    %v3541 = vtanh.pop %v3510
    %v3542 = vtanh.pop %v3512
    %v3543 = vtanh.pop %v3514
    %v3544 = vtanh.pop %v3518
    %v3545 = vtanh.pop %v3520
    %v3546 = vtanh.pop %v3522
    %v3547 = vtanh.pop %v3524
    %v3548 = vtanh.pop %v3528
    %v3549 = vtanh.pop %v3530
    %v3550 = vtanh.pop %v3532
    %v3551 = vtanh.pop %v3534
    %v3552 = vmul.f32 %v3536, %v3235
    %v3553 = vmul.f32 %v3537, %v3236
    %v3554 = vmul.f32 %v3538, %v3237
    %v3555 = vmul.f32 %v3539, %v3238
    %v3556 = vmul.f32 %v3540, %v3239
    %v3557 = vmul.f32 %v3541, %v3240
    %v3558 = vmul.f32 %v3542, %v3241
    %v3559 = vmul.f32 %v3543, %v3242
    %v3560 = vmul.f32 %v3544, %v3243
    %v3561 = vmul.f32 %v3545, %v3244
    %v3562 = vmul.f32 %v3546, %v3245
    %v3563 = vmul.f32 %v3547, %v3246
    %v3564 = vmul.f32 %v3548, %v3247
    %v3565 = vmul.f32 %v3549, %v3248
    %v3566 = vmul.f32 %v3550, %v3249
    %v3567 = vmul.f32 %v3551, %v3250
    %v3568 = vpack.c.bf16 %v3554, %v3552
    %v3569 = vpack.c.bf16 %v3555, %v3553
    %v3570 = vpack.c.bf16 %v3558, %v3556
    %v3571 = vpack.c.bf16 %v3559, %v3557
    %v3572 = vpack.c.bf16 %v3562, %v3560
    %v3573 = vpack.c.bf16 %v3563, %v3561
    %v3574 = vpack.c.bf16 %v3566, %v3564
    %v3575 = vpack.c.bf16 %v3567, %v3565
    %v3576 = vld [vmem:[#allocation19] sm:$0xf]
    %v3577 = vld [vmem:[#allocation19 + $0x4] sm:$0xf]
    %v3578 = vld [vmem:[#allocation19 + $0x8] sm:$0xf]
    %v3579 = vld [vmem:[#allocation19 + $0xc] sm:$0xf]
    %v3580 = vld [vmem:[#allocation19 + $0x10] sm:$0xf]
    %v3581 = vld [vmem:[#allocation19 + $0x14] sm:$0xf]
    %v3582 = vld [vmem:[#allocation19 + $0x18] sm:$0xf]
    %v3583 = vld [vmem:[#allocation19 + $0x1c] sm:$0xf]
    %v3584 = vld [vmem:[#allocation19 + $0x20] sm:$0xf]
    %v3585 = vld [vmem:[#allocation19 + $0x24] sm:$0xf]
    %v3586 = vld [vmem:[#allocation19 + $0x28] sm:$0xf]
    %v3587 = vld [vmem:[#allocation19 + $0x2c] sm:$0xf]
    %v3588 = vld [vmem:[#allocation19 + $0x30] sm:$0xf]
    %v3589 = vld [vmem:[#allocation19 + $0x34] sm:$0xf]
    %v3590 = vld [vmem:[#allocation19 + $0x38] sm:$0xf]
    %v3591 = vld [vmem:[#allocation19 + $0x3c] sm:$0xf]
    %v3592 = vld [vmem:[#allocation19 + $0x40] sm:$0xf]
    %v3593 = vld [vmem:[#allocation19 + $0x44] sm:$0xf]
    %v3594 = vld [vmem:[#allocation19 + $0x48] sm:$0xf]
    %v3595 = vld [vmem:[#allocation19 + $0x4c] sm:$0xf]
    %v3596 = vld [vmem:[#allocation19 + $0x50] sm:$0xf]
    %v3597 = vld [vmem:[#allocation19 + $0x54] sm:$0xf]
    %v3598 = vld [vmem:[#allocation19 + $0x58] sm:$0xf]
    %v3599 = vld [vmem:[#allocation19 + $0x5c] sm:$0xf]
    %v3600 = vld [vmem:[#allocation19 + $0x60] sm:$0xf]
    %v3601 = vld [vmem:[#allocation19 + $0x64] sm:$0xf]
    %v3602 = vld [vmem:[#allocation19 + $0x68] sm:$0xf]
    %v3603 = vld [vmem:[#allocation19 + $0x6c] sm:$0xf]
    %v3604 = vld [vmem:[#allocation19 + $0x70] sm:$0xf]
    %v3605 = vld [vmem:[#allocation19 + $0x74] sm:$0xf]
    %v3606 = vld [vmem:[#allocation19 + $0x78] sm:$0xf]
    %v3607 = vld [vmem:[#allocation19 + $0x7c] sm:$0xf]
    %v3608 = vld [vmem:[#allocation20] sm:$0x1]
    %v3610 = vlaneseq
    %v3611 = vshrl.u32 %v3610, 7
    %v3612 = vsub.s32 0, %v3611
    %v3613 = vrot.slane %v3608, %v3612
    %v3647 = vunpack.c.l.b16 %v3576
    %v3648 = vunpack.c.l.b16 %v3577
    %v3649 = vunpack.c.l.b16 %v3578
    %v3650 = vunpack.c.l.b16 %v3579
    %v3651 = vunpack.c.l.b16 %v3580
    %v3652 = vunpack.c.l.b16 %v3581
    %v3653 = vunpack.c.l.b16 %v3582
    %v3654 = vunpack.c.l.b16 %v3583
    %v3655 = vunpack.c.l.b16 %v3584
    %v3656 = vunpack.c.l.b16 %v3585
    %v3657 = vunpack.c.l.b16 %v3586
    %v3658 = vunpack.c.l.b16 %v3587
    %v3659 = vunpack.c.l.b16 %v3588
    %v3660 = vunpack.c.l.b16 %v3589
    %v3661 = vunpack.c.l.b16 %v3590
    %v3662 = vunpack.c.l.b16 %v3591
    %v3663 = vunpack.c.l.b16 %v3592
    %v3664 = vunpack.c.l.b16 %v3593
    %v3665 = vunpack.c.l.b16 %v3594
    %v3666 = vunpack.c.l.b16 %v3595
    %v3667 = vunpack.c.l.b16 %v3596
    %v3668 = vunpack.c.l.b16 %v3597
    %v3669 = vunpack.c.l.b16 %v3598
    %v3670 = vunpack.c.l.b16 %v3599
    %v3671 = vunpack.c.l.b16 %v3600
    %v3672 = vunpack.c.l.b16 %v3601
    %v3673 = vunpack.c.l.b16 %v3602
    %v3674 = vunpack.c.l.b16 %v3603
    %v3675 = vunpack.c.l.b16 %v3604
    %v3676 = vunpack.c.l.b16 %v3605
    %v3677 = vunpack.c.l.b16 %v3606
    %v3678 = vunpack.c.l.b16 %v3607
    %v3679 = vpack.c.b16 %v3648, %v3647
    %v3680 = vpack.c.b16 %v3650, %v3649
    %v3681 = vpack.c.b16 %v3652, %v3651
    %v3682 = vpack.c.b16 %v3654, %v3653
    %v3683 = vpack.c.b16 %v3656, %v3655
    %v3684 = vpack.c.b16 %v3658, %v3657
    %v3685 = vpack.c.b16 %v3660, %v3659
    %v3686 = vpack.c.b16 %v3662, %v3661
    %v3687 = vpack.c.b16 %v3664, %v3663
    %v3688 = vpack.c.b16 %v3666, %v3665
    %v3689 = vpack.c.b16 %v3668, %v3667
    %v3690 = vpack.c.b16 %v3670, %v3669
    %v3691 = vpack.c.b16 %v3672, %v3671
    %v3692 = vpack.c.b16 %v3674, %v3673
    %v3693 = vpack.c.b16 %v3676, %v3675
    %v3694 = vpack.c.b16 %v3678, %v3677
    %3711 = vmatprep.subr.bf16.mxu0 0
    %3712 = vmatpush1.bf16.msra.mxu0 %v3679
    %3713 = vmatprep.subr.bf16.mxu0 0
    %3714 = vmatpush1.bf16.msra.mxu0 %v3680
    %3715 = vmatprep.subr.bf16.mxu0 0
    %3716 = vmatpush1.bf16.msra.mxu0 %v3681
    %3717 = vmatprep.subr.bf16.mxu0 0
    %3718 = vmatpush1.bf16.msra.mxu0 %v3682
    %3719 = vmatprep.subr.bf16.mxu0 0
    %3720 = vmatpush1.bf16.msra.mxu0 %v3683
    %3721 = vmatprep.subr.bf16.mxu0 0
    %3722 = vmatpush1.bf16.msra.mxu0 %v3684
    %3723 = vmatprep.subr.bf16.mxu0 0
    %3724 = vmatpush1.bf16.msra.mxu0 %v3685
    %3725 = vmatprep.subr.bf16.mxu0 0
    %3726 = vmatpush1.bf16.msra.mxu0 %v3686
    %3727 = vmatprep.subr.bf16.mxu0 0
    %3728 = vmatpush1.bf16.msra.mxu0 %v3687
    %3729 = vmatprep.subr.bf16.mxu0 0
    %3730 = vmatpush1.bf16.msra.mxu0 %v3688
    %3731 = vmatprep.subr.bf16.mxu0 0
    %3732 = vmatpush1.bf16.msra.mxu0 %v3689
    %3733 = vmatprep.subr.bf16.mxu0 0
    %3734 = vmatpush1.bf16.msra.mxu0 %v3690
    %3735 = vmatprep.subr.bf16.mxu0 0
    %3736 = vmatpush1.bf16.msra.mxu0 %v3691
    %3737 = vmatprep.subr.bf16.mxu0 0
    %3738 = vmatpush1.bf16.msra.mxu0 %v3692
    %3739 = vmatprep.subr.bf16.mxu0 0
    %3740 = vmatpush1.bf16.msra.mxu0 %v3693
    %3741 = vmatprep.subr.bf16.mxu0 0
    %3742 = vmatpush1.bf16.msra.mxu0 %v3694
    %3743 = vmatprep.mubr.bf16.mxu0 %v3569
    %3744 = vmatmul.mubr.bf16.gmra.mrb[0].mxu0 %v3568
    %v3745 = vpop.f32.mrb[0].mxu0
    %v3746 = vadd.f32 %v3613, %v3745
    %v3747 = vpop.f32.mrb[0].mxu0
    %v3748 = vpop.f32.mrb[0].mxu0
    %v3749 = vadd.f32 %v3613, %v3748
    %v3750 = vpop.f32.mrb[0].mxu0
    %3751 = vmatprep.mubr.bf16.mxu0 %v3571
    %3752 = vmatmul.mubr.bf16.gmra.mrb[0].mxu0 %v3570
    %v3753 = vpop.f32.mrb[0].mxu0
    %v3754 = vadd.f32 %v3613, %v3753
    %v3755 = vpop.f32.mrb[0].mxu0
    %v3756 = vpop.f32.mrb[0].mxu0
    %v3757 = vadd.f32 %v3613, %v3756
    %v3758 = vpop.f32.mrb[0].mxu0
    %3759 = vmatprep.mubr.bf16.mxu0 %v3573
    %3760 = vmatmul.mubr.bf16.gmra.mrb[0].mxu0 %v3572
    %v3761 = vpop.f32.mrb[0].mxu0
    %v3762 = vadd.f32 %v3613, %v3761
    %v3763 = vpop.f32.mrb[0].mxu0
    %v3764 = vpop.f32.mrb[0].mxu0
    %v3765 = vadd.f32 %v3613, %v3764
    %v3766 = vpop.f32.mrb[0].mxu0
    %3767 = vmatprep.mubr.bf16.mxu0 %v3575
    %3768 = vmatmul.mubr.bf16.gmra.mrb[0].mxu0 %v3574
    %v3769 = vpop.f32.mrb[0].mxu0
    %v3770 = vadd.f32 %v3613, %v3769
    %v3771 = vpop.f32.mrb[0].mxu0
    %v3772 = vpop.f32.mrb[0].mxu0
    %v3773 = vadd.f32 %v3613, %v3772
    %v3774 = vpop.f32.mrb[0].mxu0
    %3775 = vdwg.mxu0
    %3776 = vst [vmem:[%s11] sm:$0xff] %v3746
    %3777 = vst [vmem:[%s11 + $0x8] sm:$0xff] %v3749
    %3778 = vst [vmem:[%s11 + $0x10] sm:$0xff] %v3754
    %3779 = vst [vmem:[%s11 + $0x18] sm:$0xff] %v3757
    %3780 = vst [vmem:[%s11 + $0x20] sm:$0xff] %v3762
    %3781 = vst [vmem:[%s11 + $0x28] sm:$0xff] %v3765
    %3782 = vst [vmem:[%s11 + $0x30] sm:$0xff] %v3770
    %3783 = vst [vmem:[%s11 + $0x38] sm:$0xff] %v3773
    // Predicated region
    $region93: #{bigru_attention_forward.1} parent=1 // pred_check
      _
    $region94: #{bigru_attention_forward.1} parent=1 // pred_check_branch
      %3785 = sbr.rel (0) target = $region96
    $region95: #{bigru_attention_forward.1} parent=1 // pred_region
      _
    $region96: #{bigru_attention_forward.1} parent=1 // pred_fallthru
      _
    // Predicated region
    $region97: #{bigru_attention_forward.1} parent=1 // pred_check
      _
    $region98: #{bigru_attention_forward.1} parent=1 // pred_check_branch
      %3787 = sbr.rel (0) target = $region100
    $region99: #{bigru_attention_forward.1} parent=1 // pred_region
      _
    $region100: #{bigru_attention_forward.1} parent=1 // pred_fallthru
      _
    %3788 = vsyncpa [#allocation7], 1
    %3789 = vsyncpa [#allocation9], 1
    %3790 = vsyncpa [#allocation12], 1
    %3791 = vsyncpa [#allocation15], 1
    %3792 = vsyncpa [#allocation18], 1
    %3793 = vsyncpa [#allocation21], 1

</llo_original>
